<compile_context>
chip_gen: v7x
topology: tpu7x:2x2x1
jax: 0.10.0
libtpu: 0.0.40
codegen_flags: <defaults>
</compile_context>

<pallas_src>
import jax
import jax.numpy as jnp
import numpy as np
from jax import lax
from jax.experimental import pallas as pl
from jax.experimental.pallas import tpu as pltpu


def make_dkfn_kernel(B, C, K, N, Np, L):
    """Build the DKFN kernel (closes over static B, C, K, N(logical), Np(padded), L)."""
    M = B * C
    n1 = B * N       # element count per channel for var(x,  dims=(0,-1))
    n2 = B * K * N   # element count per channel for var(gc, dims=(0,-1))
    G = 4 * Np       # width of one branch's fused gate block

    def kernel(x_ref, xl_ref, wgc_ref, wx8_ref, wh8_ref, b8_ref, nbr_ref,
               chan_ref, wconv_ref, bconv_ref, c_ref, out_ref):
        # Loop-invariant operands: load / broadcast once, reuse across all L steps.
        wx8 = wx8_ref[...]                                   # (Np, 8Np) bf16
        wh8 = wh8_ref[...]                                   # (2Np,8Np) bf16
        b8b = jnp.broadcast_to(b8_ref[...], (M, 8 * Np))     # (M, 8Np) f32
        nbrb = jnp.broadcast_to(nbr_ref[...], (M, Np))       # (M, Np)  f32
        c = c_ref[0, 0]                                      # scalar (SMEM)

        def step(t, carry):
            H, Cell, rH, rCell = carry
            xb = x_ref[t]                                    # (M, Np) bf16

            # Two MXU matmuls per step: fused 8-gate x-GEMM + block-diag recurrent GEMM.
            hr = jnp.concatenate([H, rH], axis=-1).astype(jnp.bfloat16)   # (M, 2Np)
            z8 = (jnp.dot(xb, wx8, preferred_element_type=jnp.float32)
                  + jnp.dot(hr, wh8, preferred_element_type=jnp.float32)
                  + b8b)                                     # (M, 8Np)

            f = jax.nn.sigmoid(z8[:, 0 * Np:1 * Np])
            i_g = jax.nn.sigmoid(z8[:, 1 * Np:2 * Np])
            o = jax.nn.sigmoid(z8[:, 2 * Np:3 * Np])
            Cn = jnp.tanh(z8[:, 3 * Np:4 * Np])
            rf = jax.nn.sigmoid(z8[:, G + 0 * Np:G + 1 * Np])
            ri = jax.nn.sigmoid(z8[:, G + 1 * Np:G + 2 * Np])
            ro = jax.nn.sigmoid(z8[:, G + 2 * Np:G + 3 * Np])
            rCn = jnp.tanh(z8[:, G + 3 * Np:G + 4 * Np])

            Cell_n = f * (Cell * nbrb) + i_g * Cn
            H_n = o * jnp.tanh(Cell_n)
            rCell_n = rf * rCell + ri * rCn
            rH_n = ro * jnp.tanh(rCell_n)
            return (H_n, Cell_n, rH_n, rCell_n)

        zeros = jnp.zeros((M, Np), jnp.float32)              # initHidden
        H, _, rH, _ = lax.fori_loop(0, L, step,
                                    (zeros, zeros, zeros, zeros),
                                    unroll=min(L, 8))

        # ---- epilogue (runs once): variance, blend, 1x1-conv head ----------
        xl = xl_ref[...]                                     # (M, Np) f32 last step
        gc = jnp.dot(xl.astype(jnp.bfloat16), wgc_ref[...],
                     preferred_element_type=jnp.float32)     # (M, K*Np)

        rs1 = jnp.sum(xl, axis=-1, keepdims=True)            # (M, 1)
        rss1 = jnp.sum(xl * xl, axis=-1, keepdims=True)
        rs2 = jnp.sum(gc, axis=-1, keepdims=True)
        rss2 = jnp.sum(gc * gc, axis=-1, keepdims=True)
        stats = jnp.concatenate([rs1, rss1, rs2, rss2], axis=-1)      # (M, 4)
        # Aggregate rows of the same feature channel (row = b*C + c).
        agg = jnp.dot(chan_ref[...], stats, preferred_element_type=jnp.float32)
        mean1 = agg[:, 0:1] / n1
        var1 = jnp.maximum((agg[:, 1:2] - n1 * mean1 * mean1) / (n1 - 1), 0.0)
        mean2 = agg[:, 2:3] / n2
        var2 = jnp.maximum((agg[:, 3:4] - n2 * mean2 * mean2) / (n2 - 1), 0.0)

        pred = (H * var1 * c + rH * var2) / (var1 + var2 * c)          # (M, Np)

        # Fused 1x1 Conv1d head: one block-diagonal matmul (lane-dense output).
        out_ref[...] = (jnp.dot(wconv_ref[...], pred,
                                preferred_element_type=jnp.float32)
                        + bconv_ref[...])

    return kernel


def dkfn_pallas(x, p, K, pred_len):
    """x: (B, C, N, L) float32. Returns (B, C, N, pred_len)."""
    B, C, N, L = x.shape
    M = B * C
    O = C * pred_len
    Np = ((N + 127) // 128) * 128          # lane-dense padded node count
    f32, bf16 = jnp.float32, jnp.bfloat16

    def padNN(w):                          # (n0, n1) -> (Np, Np), zero-padded
        return jnp.pad(w, ((0, Np - w.shape[0]), (0, Np - w.shape[1])))

    def pad_bias(b):                       # (1, N) -> (1, Np)
        return jnp.pad(b, ((0, 0), (0, Np - b.shape[1])))

    # Time-major (L, M, Np) input: bf16 for the recurrence, f32 last slab for variance.
    x_seq = jnp.transpose(x, (3, 0, 1, 2)).reshape(L, M, N).astype(f32)
    x_seq = jnp.pad(x_seq, ((0, 0), (0, 0), (0, Np - N)))
    x_last = x_seq[L - 1]                                   # (M, Np) f32
    x_seq_bf = x_seq.astype(bf16)

    # Graph-conv weight, per-hop padded blocks (only used once, for var2).
    wgc_cat_f32 = jnp.concatenate([p['wgcT'][k] for k in range(K)], axis=1)   # (N, K*N)
    wgc_pad = jnp.concatenate([padNN(p['wgcT'][k]) for k in range(K)],
                              axis=1).astype(bf16)                            # (Np, K*Np)

    # Per-gate folded x-side weights and recurrent (H / rH) weights.
    gx_blocks, gh_blocks, rx_blocks, rh_blocks = [], [], [], []
    for g in range(4):
        WgT_g = p['WgT'][g]                          # ((K+1)N, N)
        gx_blocks.append(padNN(wgc_cat_f32 @ WgT_g[:K * N]))   # fold gc GEMM into gates
        gh_blocks.append(padNN(WgT_g[K * N:]))
        WrT_g = p['WrT'][g]                          # (2N, N)
        rx_blocks.append(padNN(WrT_g[:N]))
        rh_blocks.append(padNN(WrT_g[N:]))

    Wx8 = jnp.concatenate(gx_blocks + rx_blocks, axis=1).astype(bf16)   # (Np, 8Np)
    Wg_h = jnp.concatenate(gh_blocks, axis=1)                           # (Np, 4Np)
    Wr_h = jnp.concatenate(rh_blocks, axis=1)                           # (Np, 4Np)
    zer = jnp.zeros_like(Wg_h)
    Wh8 = jnp.concatenate([jnp.concatenate([Wg_h, zer], axis=1),
                           jnp.concatenate([zer, Wr_h], axis=1)],
                          axis=0).astype(bf16)                          # (2Np, 8Np)

    b8 = jnp.concatenate([pad_bias(p['bg'][g]) for g in range(4)]
                         + [pad_bias(p['br'][g]) for g in range(4)],
                         axis=1).astype(f32)                            # (1, 8Np)
    nbr = pad_bias(p['nbr']).astype(f32)                                # (1, Np)

    # Same-channel selector: chan[i, j] = 1 iff rows i and j share a feature channel.
    rows = np.arange(M)
    chan = jnp.asarray((rows[:, None] % C == rows[None, :] % C).astype(np.float32))

    # Block-diagonal 1x1-conv weight so the head is a single (B*O, B*C)x(B*C, Np) matmul.
    Wconv_bd = jnp.kron(jnp.eye(B, dtype=f32), p['Wconv'].astype(f32))  # (B*O, B*C)
    bconv_bd = jnp.tile(p['bconv'].astype(f32), (B, 1))                 # (B*O, 1)

    inputs = (x_seq_bf, x_last, wgc_pad, Wx8, Wh8, b8, nbr, chan,
              Wconv_bd, bconv_bd, p['c'].astype(f32))

    # VMEM limit from actual resident bytes (headroom x2), clamped to [32, 100] MiB.
    need = sum(int(a.size) * a.dtype.itemsize for a in inputs[:-1]) + B * O * Np * 4
    vmem_limit = int(min(100 * 2**20, max(32 * 2**20, 2 * need + (8 << 20))))

    vspec = pl.BlockSpec(memory_space=pltpu.MemorySpace.VMEM)
    sspec = pl.BlockSpec(memory_space=pltpu.MemorySpace.SMEM)

    out = pl.pallas_call(
        make_dkfn_kernel(B, C, K, N, Np, L),
        out_shape=jax.ShapeDtypeStruct((B * O, Np), f32),
        in_specs=[vspec] * 10 + [sspec],
        out_specs=vspec,
        compiler_params=pltpu.CompilerParams(vmem_limit_bytes=vmem_limit),
    )(*inputs)

    # matches torch: pred = conv_out(pred).reshape(B, C, N, -1)
    return out[:, :N].reshape(B, O, N).reshape(B, C, N, -1)


def build_params(key, K, N, C, pred_len):
    """Deterministic synthetic parameters matching DKFN.__init__ shapes."""
    keys = jax.random.split(key, 10)
    f32 = jnp.float32

    # synthetic adjacency
    A = (jax.random.uniform(keys[0], (N, N)) > 0.6).astype(f32)
    A = jnp.minimum(A + jnp.eye(N, dtype=f32), 1.0)

    # DKFN.__init__ adjacency preprocessing (reproduced as written, incl. clamp max=1.0)
    tmp = jnp.sum(A, axis=0)
    tmp = jnp.where(tmp == 0, 1e-05, tmp)
    norm_A = jnp.matmul(jnp.diag(tmp), A)
    A_list = []
    A_temp = jnp.eye(N, dtype=f32)
    for _ in range(K):
        A_temp = jnp.matmul(A_temp, norm_A)
        A_temp = jnp.minimum(A_temp, 1.0)
        A_list.append(A_temp)

    stdv_n = 1.0 / np.sqrt(N)
    gc_w = jax.random.uniform(keys[1], (K, N, N), minval=-stdv_n, maxval=stdv_n)
    # FilterLinear effective weight (A_k * W_k); stored pre-transposed for x @ W^T
    wgcT = jnp.stack([(A_list[k] * gc_w[k]).T for k in range(K)], axis=0)

    gin = (K + 1) * N
    s_g = 1.0 / np.sqrt(gin)
    Wg = jax.random.uniform(keys[2], (4, N, gin), minval=-s_g, maxval=s_g)
    bg = jax.random.uniform(keys[3], (4, 1, N), minval=-s_g, maxval=s_g)
    WgT = jnp.transpose(Wg, (0, 2, 1))

    rin = 2 * N
    s_r = 1.0 / np.sqrt(rin)
    Wr = jax.random.uniform(keys[4], (4, N, rin), minval=-s_r, maxval=s_r)
    br = jax.random.uniform(keys[5], (4, 1, N), minval=-s_r, maxval=s_r)
    WrT = jnp.transpose(Wr, (0, 2, 1))

    neighbor_w = jax.random.uniform(keys[6], (N,), minval=-stdv_n, maxval=stdv_n)
    nbr = (A_list[-1] @ neighbor_w).reshape(1, N)   # torch.mv(A_list[-1], Neighbor_weight)

    c_param = jnp.ones((1, 1), f32)                 # self.c = Parameter(Tensor([1]))

    O = C * pred_len
    s_c = 1.0 / np.sqrt(C)
    Wconv = jax.random.uniform(keys[7], (O, C), minval=-s_c, maxval=s_c)
    bconv = jax.random.uniform(keys[8], (O, 1), minval=-s_c, maxval=s_c)

    return dict(wgcT=wgcT.astype(f32), WgT=WgT.astype(f32), bg=bg.astype(f32),
                WrT=WrT.astype(f32), br=br.astype(f32), nbr=nbr.astype(f32),
                c=c_param, Wconv=Wconv.astype(f32), bconv=bconv.astype(f32))


def dkfn_reference(x, p, K, pred_len):
    """Pure-JAX f32 reference mirroring the PyTorch forward."""
    B, C, N, L = x.shape
    f32 = jnp.float32
    H = jnp.zeros((B, C, N), f32)
    Cell = jnp.zeros((B, C, N), f32)
    rH = jnp.zeros((B, C, N), f32)
    rCell = jnp.zeros((B, C, N), f32)
    sig, tanh = jax.nn.sigmoid, jnp.tanh
    nbr = p['nbr'].reshape(N)
    c = p['c'][0, 0]
    pred = None
    for t in range(L):
        xt = x[:, :, :, t]
        gc = jnp.concatenate([xt @ p['wgcT'][k] for k in range(K)], axis=-1)
        comb = jnp.concatenate([gc, H], axis=-1)
        f = sig(comb @ p['WgT'][0] + p['bg'][0])
        i = sig(comb @ p['WgT'][1] + p['bg'][1])
        o = sig(comb @ p['WgT'][2] + p['bg'][2])
        Cn = tanh(comb @ p['WgT'][3] + p['bg'][3])
        NC = Cell * nbr
        Cell = f * NC + i * Cn
        H = o * tanh(Cell)
        rcomb = jnp.concatenate([xt, rH], axis=-1)
        rf = sig(rcomb @ p['WrT'][0] + p['br'][0])
        ri = sig(rcomb @ p['WrT'][1] + p['br'][1])
        ro = sig(rcomb @ p['WrT'][2] + p['br'][2])
        rCn = tanh(rcomb @ p['WrT'][3] + p['br'][3])
        rCell = rf * rCell + ri * rCn
        rH = ro * tanh(rCell)
        var1 = jnp.var(xt, axis=(0, 2), keepdims=True, ddof=1)
        var2 = jnp.var(gc, axis=(0, 2), keepdims=True, ddof=1)
        pred = (H * var1 * c + rH * var2) / (var1 + var2 * c)
    out = jnp.einsum('oc,bcn->bon', p['Wconv'], pred) + p['bconv'].reshape(1, -1, 1)
    return out.reshape(B, C, N, -1)


if __name__ == "__main__":
    # small shapes consistent with the module: input (B, C=num_features, N=num_nodes, L)
    B, C, N, L = 2, 4, 16, 8
    K, pred_len = 3, 2

    key = jax.random.PRNGKey(0)
    kx, kp = jax.random.split(key)
    x = jax.random.normal(kx, (B, C, N, L), dtype=jnp.float32)
    params = build_params(kp, K, N, C, pred_len)

    out = dkfn_pallas(x, params, K, pred_len)
    out = jax.block_until_ready(out)
    assert out.shape == (B, C, N, pred_len)

    ref = jax.block_until_ready(dkfn_reference(x, params, K, pred_len))
    # kernel uses bf16 matmul operands (f32 accumulation); slightly wider atol
    np.testing.assert_allclose(np.asarray(out), np.asarray(ref), rtol=5e-2, atol=2e-2)

    print("KERNEL_OK")
</pallas_src>

<mosaic_0001>
module attributes {stable_mosaic.version = 11 : i64} {
  func.func @kernel(%arg0: memref<8x8x128xbf16, #tpu.memory_space<vmem>>, %arg1: memref<8x128xf32, #tpu.memory_space<vmem>>, %arg2: memref<128x384xbf16, #tpu.memory_space<vmem>>, %arg3: memref<128x1024xbf16, #tpu.memory_space<vmem>>, %arg4: memref<256x1024xbf16, #tpu.memory_space<vmem>>, %arg5: memref<1x1024xf32, #tpu.memory_space<vmem>>, %arg6: memref<1x128xf32, #tpu.memory_space<vmem>>, %arg7: memref<8x8xf32, #tpu.memory_space<vmem>>, %arg8: memref<16x8xf32, #tpu.memory_space<vmem>>, %arg9: memref<16x1xf32, #tpu.memory_space<vmem>>, %arg10: memref<1x1xf32, #tpu.memory_space<smem>>, %arg11: memref<16x128xf32, #tpu.memory_space<vmem>>) attributes {dimension_semantics = [], scalar_prefetch = 0 : i64, scratch_operands = 0 : i64, tpu.core_type = #tpu.core_type<tc>} {
    %c0 = arith.constant 0 : index
    %c0_0 = arith.constant 0 : index
    %0 = vector.load %arg3[%c0, %c0_0] : memref<128x1024xbf16, #tpu.memory_space<vmem>>, vector<128x1024xbf16>
    %c0_1 = arith.constant 0 : index
    %c0_2 = arith.constant 0 : index
    %1 = vector.load %arg4[%c0_1, %c0_2] : memref<256x1024xbf16, #tpu.memory_space<vmem>>, vector<256x1024xbf16>
    %c0_3 = arith.constant 0 : index
    %c0_4 = arith.constant 0 : index
    %2 = vector.load %arg5[%c0_3, %c0_4] : memref<1x1024xf32, #tpu.memory_space<vmem>>, vector<1x1024xf32>
    %3 = vector.shape_cast %2 : vector<1x1024xf32> to vector<1x1024xf32>
    %4 = vector.broadcast %3 : vector<1x1024xf32> to vector<8x1024xf32>
    %c0_5 = arith.constant 0 : index
    %c0_6 = arith.constant 0 : index
    %5 = vector.load %arg6[%c0_5, %c0_6] : memref<1x128xf32, #tpu.memory_space<vmem>>, vector<1x128xf32>
    %6 = vector.shape_cast %5 : vector<1x128xf32> to vector<1x128xf32>
    %7 = vector.broadcast %6 : vector<1x128xf32> to vector<8x128xf32>
    %c0_7 = arith.constant 0 : index
    %c0_8 = arith.constant 0 : index
    %8 = memref.load %arg10[%c0_7, %c0_8] : memref<1x1xf32, #tpu.memory_space<smem>>
    %cst = arith.constant 0.000000e+00 : f32
    %9 = vector.broadcast %cst : f32 to vector<8x128xf32>
    %c0_i32 = arith.constant 0 : i32
    %10 = arith.index_cast %c0_i32 : i32 to index
    %c0_9 = arith.constant 0 : index
    %c0_10 = arith.constant 0 : index
    %11 = vector.load %arg0[%10, %c0_9, %c0_10] : memref<8x8x128xbf16, #tpu.memory_space<vmem>>, vector<1x8x128xbf16>
    %12 = vector.shape_cast %11 : vector<1x8x128xbf16> to vector<8x128xbf16>
    %13 = tpu.concatenate %9, %9 in 1 : vector<8x128xf32>, vector<8x128xf32> -> vector<8x256xf32>
    %14 = arith.truncf %13 : vector<8x256xf32> to vector<8x256xbf16>
    %cst_11 = arith.constant dense<0.000000e+00> : vector<8x1024xf32>
    %15 = tpu.matmul %12, %0, %cst_11 {dimension_numbers = #tpu.dot_dimension_numbers<[1], [0], [0], [1], [0, 0, 1, 1], [], []>} : vector<8x128xbf16>, vector<128x1024xbf16>, vector<8x1024xf32> -> vector<8x1024xf32>
    %cst_12 = arith.constant dense<0.000000e+00> : vector<8x1024xf32>
    %16 = tpu.matmul %14, %1, %cst_12 {dimension_numbers = #tpu.dot_dimension_numbers<[1], [0], [0], [1], [0, 0, 1, 1], [], []>} : vector<8x256xbf16>, vector<256x1024xbf16>, vector<8x1024xf32> -> vector<8x1024xf32>
    %17 = arith.addf %15, %16 : vector<8x1024xf32>
    %18 = arith.addf %17, %4 : vector<8x1024xf32>
    %19 = vector.extract_strided_slice %18 {offsets = [0, 0], sizes = [8, 128], strides = [1, 1]} : vector<8x1024xf32> to vector<8x128xf32>
    %20 = arith.negf %19 : vector<8x128xf32>
    %21 = math.exp %20 : vector<8x128xf32>
    %cst_13 = arith.constant 1.000000e+00 : f32
    %22 = vector.broadcast %cst_13 : f32 to vector<8x128xf32>
    %23 = arith.addf %22, %21 : vector<8x128xf32>
    %24 = arith.divf %22, %23 : vector<8x128xf32>
    %25 = vector.extract_strided_slice %18 {offsets = [0, 128], sizes = [8, 128], strides = [1, 1]} : vector<8x1024xf32> to vector<8x128xf32>
    %26 = arith.negf %25 : vector<8x128xf32>
    %27 = math.exp %26 : vector<8x128xf32>
    %cst_14 = arith.constant 1.000000e+00 : f32
    %28 = vector.broadcast %cst_14 : f32 to vector<8x128xf32>
    %29 = arith.addf %28, %27 : vector<8x128xf32>
    %30 = arith.divf %28, %29 : vector<8x128xf32>
    %31 = vector.extract_strided_slice %18 {offsets = [0, 256], sizes = [8, 128], strides = [1, 1]} : vector<8x1024xf32> to vector<8x128xf32>
    %32 = arith.negf %31 : vector<8x128xf32>
    %33 = math.exp %32 : vector<8x128xf32>
    %cst_15 = arith.constant 1.000000e+00 : f32
    %34 = vector.broadcast %cst_15 : f32 to vector<8x128xf32>
    %35 = arith.addf %34, %33 : vector<8x128xf32>
    %36 = arith.divf %34, %35 : vector<8x128xf32>
    %37 = vector.extract_strided_slice %18 {offsets = [0, 384], sizes = [8, 128], strides = [1, 1]} : vector<8x1024xf32> to vector<8x128xf32>
    %38 = math.tanh %37 : vector<8x128xf32>
    %39 = vector.extract_strided_slice %18 {offsets = [0, 512], sizes = [8, 128], strides = [1, 1]} : vector<8x1024xf32> to vector<8x128xf32>
    %40 = arith.negf %39 : vector<8x128xf32>
    %41 = math.exp %40 : vector<8x128xf32>
    %cst_16 = arith.constant 1.000000e+00 : f32
    %42 = vector.broadcast %cst_16 : f32 to vector<8x128xf32>
    %43 = arith.addf %42, %41 : vector<8x128xf32>
    %44 = arith.divf %42, %43 : vector<8x128xf32>
    %45 = vector.extract_strided_slice %18 {offsets = [0, 640], sizes = [8, 128], strides = [1, 1]} : vector<8x1024xf32> to vector<8x128xf32>
    %46 = arith.negf %45 : vector<8x128xf32>
    %47 = math.exp %46 : vector<8x128xf32>
    %cst_17 = arith.constant 1.000000e+00 : f32
    %48 = vector.broadcast %cst_17 : f32 to vector<8x128xf32>
    %49 = arith.addf %48, %47 : vector<8x128xf32>
    %50 = arith.divf %48, %49 : vector<8x128xf32>
    %51 = vector.extract_strided_slice %18 {offsets = [0, 768], sizes = [8, 128], strides = [1, 1]} : vector<8x1024xf32> to vector<8x128xf32>
    %52 = arith.negf %51 : vector<8x128xf32>
    %53 = math.exp %52 : vector<8x128xf32>
    %cst_18 = arith.constant 1.000000e+00 : f32
    %54 = vector.broadcast %cst_18 : f32 to vector<8x128xf32>
    %55 = arith.addf %54, %53 : vector<8x128xf32>
    %56 = arith.divf %54, %55 : vector<8x128xf32>
    %57 = vector.extract_strided_slice %18 {offsets = [0, 896], sizes = [8, 128], strides = [1, 1]} : vector<8x1024xf32> to vector<8x128xf32>
    %58 = math.tanh %57 : vector<8x128xf32>
    %59 = arith.mulf %9, %7 : vector<8x128xf32>
    %60 = arith.mulf %24, %59 : vector<8x128xf32>
    %61 = arith.mulf %30, %38 : vector<8x128xf32>
    %62 = arith.addf %60, %61 : vector<8x128xf32>
    %63 = math.tanh %62 : vector<8x128xf32>
    %64 = arith.mulf %36, %63 : vector<8x128xf32>
    %65 = arith.mulf %44, %9 : vector<8x128xf32>
    %66 = arith.mulf %50, %58 : vector<8x128xf32>
    %67 = arith.addf %65, %66 : vector<8x128xf32>
    %68 = math.tanh %67 : vector<8x128xf32>
    %69 = arith.mulf %56, %68 : vector<8x128xf32>
    %c1_i32 = arith.constant 1 : i32
    %70 = arith.index_cast %c1_i32 : i32 to index
    %c0_19 = arith.constant 0 : index
    %c0_20 = arith.constant 0 : index
    %71 = vector.load %arg0[%70, %c0_19, %c0_20] : memref<8x8x128xbf16, #tpu.memory_space<vmem>>, vector<1x8x128xbf16>
    %72 = vector.shape_cast %71 : vector<1x8x128xbf16> to vector<8x128xbf16>
    %73 = tpu.concatenate %64, %69 in 1 : vector<8x128xf32>, vector<8x128xf32> -> vector<8x256xf32>
    %74 = arith.truncf %73 : vector<8x256xf32> to vector<8x256xbf16>
    %cst_21 = arith.constant dense<0.000000e+00> : vector<8x1024xf32>
    %75 = tpu.matmul %72, %0, %cst_21 {dimension_numbers = #tpu.dot_dimension_numbers<[1], [0], [0], [1], [0, 0, 1, 1], [], []>} : vector<8x128xbf16>, vector<128x1024xbf16>, vector<8x1024xf32> -> vector<8x1024xf32>
    %cst_22 = arith.constant dense<0.000000e+00> : vector<8x1024xf32>
    %76 = tpu.matmul %74, %1, %cst_22 {dimension_numbers = #tpu.dot_dimension_numbers<[1], [0], [0], [1], [0, 0, 1, 1], [], []>} : vector<8x256xbf16>, vector<256x1024xbf16>, vector<8x1024xf32> -> vector<8x1024xf32>
    %77 = arith.addf %75, %76 : vector<8x1024xf32>
    %78 = arith.addf %77, %4 : vector<8x1024xf32>
    %79 = vector.extract_strided_slice %78 {offsets = [0, 0], sizes = [8, 128], strides = [1, 1]} : vector<8x1024xf32> to vector<8x128xf32>
    %80 = arith.negf %79 : vector<8x128xf32>
    %81 = math.exp %80 : vector<8x128xf32>
    %cst_23 = arith.constant 1.000000e+00 : f32
    %82 = vector.broadcast %cst_23 : f32 to vector<8x128xf32>
    %83 = arith.addf %82, %81 : vector<8x128xf32>
    %84 = arith.divf %82, %83 : vector<8x128xf32>
    %85 = vector.extract_strided_slice %78 {offsets = [0, 128], sizes = [8, 128], strides = [1, 1]} : vector<8x1024xf32> to vector<8x128xf32>
    %86 = arith.negf %85 : vector<8x128xf32>
    %87 = math.exp %86 : vector<8x128xf32>
    %cst_24 = arith.constant 1.000000e+00 : f32
    %88 = vector.broadcast %cst_24 : f32 to vector<8x128xf32>
    %89 = arith.addf %88, %87 : vector<8x128xf32>
    %90 = arith.divf %88, %89 : vector<8x128xf32>
    %91 = vector.extract_strided_slice %78 {offsets = [0, 256], sizes = [8, 128], strides = [1, 1]} : vector<8x1024xf32> to vector<8x128xf32>
    %92 = arith.negf %91 : vector<8x128xf32>
    %93 = math.exp %92 : vector<8x128xf32>
    %cst_25 = arith.constant 1.000000e+00 : f32
    %94 = vector.broadcast %cst_25 : f32 to vector<8x128xf32>
    %95 = arith.addf %94, %93 : vector<8x128xf32>
    %96 = arith.divf %94, %95 : vector<8x128xf32>
    %97 = vector.extract_strided_slice %78 {offsets = [0, 384], sizes = [8, 128], strides = [1, 1]} : vector<8x1024xf32> to vector<8x128xf32>
    %98 = math.tanh %97 : vector<8x128xf32>
    %99 = vector.extract_strided_slice %78 {offsets = [0, 512], sizes = [8, 128], strides = [1, 1]} : vector<8x1024xf32> to vector<8x128xf32>
    %100 = arith.negf %99 : vector<8x128xf32>
    %101 = math.exp %100 : vector<8x128xf32>
    %cst_26 = arith.constant 1.000000e+00 : f32
    %102 = vector.broadcast %cst_26 : f32 to vector<8x128xf32>
    %103 = arith.addf %102, %101 : vector<8x128xf32>
    %104 = arith.divf %102, %103 : vector<8x128xf32>
    %105 = vector.extract_strided_slice %78 {offsets = [0, 640], sizes = [8, 128], strides = [1, 1]} : vector<8x1024xf32> to vector<8x128xf32>
    %106 = arith.negf %105 : vector<8x128xf32>
    %107 = math.exp %106 : vector<8x128xf32>
    %cst_27 = arith.constant 1.000000e+00 : f32
    %108 = vector.broadcast %cst_27 : f32 to vector<8x128xf32>
    %109 = arith.addf %108, %107 : vector<8x128xf32>
    %110 = arith.divf %108, %109 : vector<8x128xf32>
    %111 = vector.extract_strided_slice %78 {offsets = [0, 768], sizes = [8, 128], strides = [1, 1]} : vector<8x1024xf32> to vector<8x128xf32>
    %112 = arith.negf %111 : vector<8x128xf32>
    %113 = math.exp %112 : vector<8x128xf32>
    %cst_28 = arith.constant 1.000000e+00 : f32
    %114 = vector.broadcast %cst_28 : f32 to vector<8x128xf32>
    %115 = arith.addf %114, %113 : vector<8x128xf32>
    %116 = arith.divf %114, %115 : vector<8x128xf32>
    %117 = vector.extract_strided_slice %78 {offsets = [0, 896], sizes = [8, 128], strides = [1, 1]} : vector<8x1024xf32> to vector<8x128xf32>
    %118 = math.tanh %117 : vector<8x128xf32>
    %119 = arith.mulf %62, %7 : vector<8x128xf32>
    %120 = arith.mulf %84, %119 : vector<8x128xf32>
    %121 = arith.mulf %90, %98 : vector<8x128xf32>
    %122 = arith.addf %120, %121 : vector<8x128xf32>
    %123 = math.tanh %122 : vector<8x128xf32>
    %124 = arith.mulf %96, %123 : vector<8x128xf32>
    %125 = arith.mulf %104, %67 : vector<8x128xf32>
    %126 = arith.mulf %110, %118 : vector<8x128xf32>
    %127 = arith.addf %125, %126 : vector<8x128xf32>
    %128 = math.tanh %127 : vector<8x128xf32>
    %129 = arith.mulf %116, %128 : vector<8x128xf32>
    %c2_i32 = arith.constant 2 : i32
    %130 = arith.index_cast %c2_i32 : i32 to index
    %c0_29 = arith.constant 0 : index
    %c0_30 = arith.constant 0 : index
    %131 = vector.load %arg0[%130, %c0_29, %c0_30] : memref<8x8x128xbf16, #tpu.memory_space<vmem>>, vector<1x8x128xbf16>
    %132 = vector.shape_cast %131 : vector<1x8x128xbf16> to vector<8x128xbf16>
    %133 = tpu.concatenate %124, %129 in 1 : vector<8x128xf32>, vector<8x128xf32> -> vector<8x256xf32>
    %134 = arith.truncf %133 : vector<8x256xf32> to vector<8x256xbf16>
    %cst_31 = arith.constant dense<0.000000e+00> : vector<8x1024xf32>
    %135 = tpu.matmul %132, %0, %cst_31 {dimension_numbers = #tpu.dot_dimension_numbers<[1], [0], [0], [1], [0, 0, 1, 1], [], []>} : vector<8x128xbf16>, vector<128x1024xbf16>, vector<8x1024xf32> -> vector<8x1024xf32>
    %cst_32 = arith.constant dense<0.000000e+00> : vector<8x1024xf32>
    %136 = tpu.matmul %134, %1, %cst_32 {dimension_numbers = #tpu.dot_dimension_numbers<[1], [0], [0], [1], [0, 0, 1, 1], [], []>} : vector<8x256xbf16>, vector<256x1024xbf16>, vector<8x1024xf32> -> vector<8x1024xf32>
    %137 = arith.addf %135, %136 : vector<8x1024xf32>
    %138 = arith.addf %137, %4 : vector<8x1024xf32>
    %139 = vector.extract_strided_slice %138 {offsets = [0, 0], sizes = [8, 128], strides = [1, 1]} : vector<8x1024xf32> to vector<8x128xf32>
    %140 = arith.negf %139 : vector<8x128xf32>
    %141 = math.exp %140 : vector<8x128xf32>
    %cst_33 = arith.constant 1.000000e+00 : f32
    %142 = vector.broadcast %cst_33 : f32 to vector<8x128xf32>
    %143 = arith.addf %142, %141 : vector<8x128xf32>
    %144 = arith.divf %142, %143 : vector<8x128xf32>
    %145 = vector.extract_strided_slice %138 {offsets = [0, 128], sizes = [8, 128], strides = [1, 1]} : vector<8x1024xf32> to vector<8x128xf32>
    %146 = arith.negf %145 : vector<8x128xf32>
    %147 = math.exp %146 : vector<8x128xf32>
    %cst_34 = arith.constant 1.000000e+00 : f32
    %148 = vector.broadcast %cst_34 : f32 to vector<8x128xf32>
    %149 = arith.addf %148, %147 : vector<8x128xf32>
    %150 = arith.divf %148, %149 : vector<8x128xf32>
    %151 = vector.extract_strided_slice %138 {offsets = [0, 256], sizes = [8, 128], strides = [1, 1]} : vector<8x1024xf32> to vector<8x128xf32>
    %152 = arith.negf %151 : vector<8x128xf32>
    %153 = math.exp %152 : vector<8x128xf32>
    %cst_35 = arith.constant 1.000000e+00 : f32
    %154 = vector.broadcast %cst_35 : f32 to vector<8x128xf32>
    %155 = arith.addf %154, %153 : vector<8x128xf32>
    %156 = arith.divf %154, %155 : vector<8x128xf32>
    %157 = vector.extract_strided_slice %138 {offsets = [0, 384], sizes = [8, 128], strides = [1, 1]} : vector<8x1024xf32> to vector<8x128xf32>
    %158 = math.tanh %157 : vector<8x128xf32>
    %159 = vector.extract_strided_slice %138 {offsets = [0, 512], sizes = [8, 128], strides = [1, 1]} : vector<8x1024xf32> to vector<8x128xf32>
    %160 = arith.negf %159 : vector<8x128xf32>
    %161 = math.exp %160 : vector<8x128xf32>
    %cst_36 = arith.constant 1.000000e+00 : f32
    %162 = vector.broadcast %cst_36 : f32 to vector<8x128xf32>
    %163 = arith.addf %162, %161 : vector<8x128xf32>
    %164 = arith.divf %162, %163 : vector<8x128xf32>
    %165 = vector.extract_strided_slice %138 {offsets = [0, 640], sizes = [8, 128], strides = [1, 1]} : vector<8x1024xf32> to vector<8x128xf32>
    %166 = arith.negf %165 : vector<8x128xf32>
    %167 = math.exp %166 : vector<8x128xf32>
    %cst_37 = arith.constant 1.000000e+00 : f32
    %168 = vector.broadcast %cst_37 : f32 to vector<8x128xf32>
    %169 = arith.addf %168, %167 : vector<8x128xf32>
    %170 = arith.divf %168, %169 : vector<8x128xf32>
    %171 = vector.extract_strided_slice %138 {offsets = [0, 768], sizes = [8, 128], strides = [1, 1]} : vector<8x1024xf32> to vector<8x128xf32>
    %172 = arith.negf %171 : vector<8x128xf32>
    %173 = math.exp %172 : vector<8x128xf32>
    %cst_38 = arith.constant 1.000000e+00 : f32
    %174 = vector.broadcast %cst_38 : f32 to vector<8x128xf32>
    %175 = arith.addf %174, %173 : vector<8x128xf32>
    %176 = arith.divf %174, %175 : vector<8x128xf32>
    %177 = vector.extract_strided_slice %138 {offsets = [0, 896], sizes = [8, 128], strides = [1, 1]} : vector<8x1024xf32> to vector<8x128xf32>
    %178 = math.tanh %177 : vector<8x128xf32>
    %179 = arith.mulf %122, %7 : vector<8x128xf32>
    %180 = arith.mulf %144, %179 : vector<8x128xf32>
    %181 = arith.mulf %150, %158 : vector<8x128xf32>
    %182 = arith.addf %180, %181 : vector<8x128xf32>
    %183 = math.tanh %182 : vector<8x128xf32>
    %184 = arith.mulf %156, %183 : vector<8x128xf32>
    %185 = arith.mulf %164, %127 : vector<8x128xf32>
    %186 = arith.mulf %170, %178 : vector<8x128xf32>
    %187 = arith.addf %185, %186 : vector<8x128xf32>
    %188 = math.tanh %187 : vector<8x128xf32>
    %189 = arith.mulf %176, %188 : vector<8x128xf32>
    %c3_i32 = arith.constant 3 : i32
    %190 = arith.index_cast %c3_i32 : i32 to index
    %c0_39 = arith.constant 0 : index
    %c0_40 = arith.constant 0 : index
    %191 = vector.load %arg0[%190, %c0_39, %c0_40] : memref<8x8x128xbf16, #tpu.memory_space<vmem>>, vector<1x8x128xbf16>
    %192 = vector.shape_cast %191 : vector<1x8x128xbf16> to vector<8x128xbf16>
    %193 = tpu.concatenate %184, %189 in 1 : vector<8x128xf32>, vector<8x128xf32> -> vector<8x256xf32>
    %194 = arith.truncf %193 : vector<8x256xf32> to vector<8x256xbf16>
    %cst_41 = arith.constant dense<0.000000e+00> : vector<8x1024xf32>
    %195 = tpu.matmul %192, %0, %cst_41 {dimension_numbers = #tpu.dot_dimension_numbers<[1], [0], [0], [1], [0, 0, 1, 1], [], []>} : vector<8x128xbf16>, vector<128x1024xbf16>, vector<8x1024xf32> -> vector<8x1024xf32>
    %cst_42 = arith.constant dense<0.000000e+00> : vector<8x1024xf32>
    %196 = tpu.matmul %194, %1, %cst_42 {dimension_numbers = #tpu.dot_dimension_numbers<[1], [0], [0], [1], [0, 0, 1, 1], [], []>} : vector<8x256xbf16>, vector<256x1024xbf16>, vector<8x1024xf32> -> vector<8x1024xf32>
    %197 = arith.addf %195, %196 : vector<8x1024xf32>
    %198 = arith.addf %197, %4 : vector<8x1024xf32>
    %199 = vector.extract_strided_slice %198 {offsets = [0, 0], sizes = [8, 128], strides = [1, 1]} : vector<8x1024xf32> to vector<8x128xf32>
    %200 = arith.negf %199 : vector<8x128xf32>
    %201 = math.exp %200 : vector<8x128xf32>
    %cst_43 = arith.constant 1.000000e+00 : f32
    %202 = vector.broadcast %cst_43 : f32 to vector<8x128xf32>
    %203 = arith.addf %202, %201 : vector<8x128xf32>
    %204 = arith.divf %202, %203 : vector<8x128xf32>
    %205 = vector.extract_strided_slice %198 {offsets = [0, 128], sizes = [8, 128], strides = [1, 1]} : vector<8x1024xf32> to vector<8x128xf32>
    %206 = arith.negf %205 : vector<8x128xf32>
    %207 = math.exp %206 : vector<8x128xf32>
    %cst_44 = arith.constant 1.000000e+00 : f32
    %208 = vector.broadcast %cst_44 : f32 to vector<8x128xf32>
    %209 = arith.addf %208, %207 : vector<8x128xf32>
    %210 = arith.divf %208, %209 : vector<8x128xf32>
    %211 = vector.extract_strided_slice %198 {offsets = [0, 256], sizes = [8, 128], strides = [1, 1]} : vector<8x1024xf32> to vector<8x128xf32>
    %212 = arith.negf %211 : vector<8x128xf32>
    %213 = math.exp %212 : vector<8x128xf32>
    %cst_45 = arith.constant 1.000000e+00 : f32
    %214 = vector.broadcast %cst_45 : f32 to vector<8x128xf32>
    %215 = arith.addf %214, %213 : vector<8x128xf32>
    %216 = arith.divf %214, %215 : vector<8x128xf32>
    %217 = vector.extract_strided_slice %198 {offsets = [0, 384], sizes = [8, 128], strides = [1, 1]} : vector<8x1024xf32> to vector<8x128xf32>
    %218 = math.tanh %217 : vector<8x128xf32>
    %219 = vector.extract_strided_slice %198 {offsets = [0, 512], sizes = [8, 128], strides = [1, 1]} : vector<8x1024xf32> to vector<8x128xf32>
    %220 = arith.negf %219 : vector<8x128xf32>
    %221 = math.exp %220 : vector<8x128xf32>
    %cst_46 = arith.constant 1.000000e+00 : f32
    %222 = vector.broadcast %cst_46 : f32 to vector<8x128xf32>
    %223 = arith.addf %222, %221 : vector<8x128xf32>
    %224 = arith.divf %222, %223 : vector<8x128xf32>
    %225 = vector.extract_strided_slice %198 {offsets = [0, 640], sizes = [8, 128], strides = [1, 1]} : vector<8x1024xf32> to vector<8x128xf32>
    %226 = arith.negf %225 : vector<8x128xf32>
    %227 = math.exp %226 : vector<8x128xf32>
    %cst_47 = arith.constant 1.000000e+00 : f32
    %228 = vector.broadcast %cst_47 : f32 to vector<8x128xf32>
    %229 = arith.addf %228, %227 : vector<8x128xf32>
    %230 = arith.divf %228, %229 : vector<8x128xf32>
    %231 = vector.extract_strided_slice %198 {offsets = [0, 768], sizes = [8, 128], strides = [1, 1]} : vector<8x1024xf32> to vector<8x128xf32>
    %232 = arith.negf %231 : vector<8x128xf32>
    %233 = math.exp %232 : vector<8x128xf32>
    %cst_48 = arith.constant 1.000000e+00 : f32
    %234 = vector.broadcast %cst_48 : f32 to vector<8x128xf32>
    %235 = arith.addf %234, %233 : vector<8x128xf32>
    %236 = arith.divf %234, %235 : vector<8x128xf32>
    %237 = vector.extract_strided_slice %198 {offsets = [0, 896], sizes = [8, 128], strides = [1, 1]} : vector<8x1024xf32> to vector<8x128xf32>
    %238 = math.tanh %237 : vector<8x128xf32>
    %239 = arith.mulf %182, %7 : vector<8x128xf32>
    %240 = arith.mulf %204, %239 : vector<8x128xf32>
    %241 = arith.mulf %210, %218 : vector<8x128xf32>
    %242 = arith.addf %240, %241 : vector<8x128xf32>
    %243 = math.tanh %242 : vector<8x128xf32>
    %244 = arith.mulf %216, %243 : vector<8x128xf32>
    %245 = arith.mulf %224, %187 : vector<8x128xf32>
    %246 = arith.mulf %230, %238 : vector<8x128xf32>
    %247 = arith.addf %245, %246 : vector<8x128xf32>
    %248 = math.tanh %247 : vector<8x128xf32>
    %249 = arith.mulf %236, %248 : vector<8x128xf32>
    %c4_i32 = arith.constant 4 : i32
    %250 = arith.index_cast %c4_i32 : i32 to index
    %c0_49 = arith.constant 0 : index
    %c0_50 = arith.constant 0 : index
    %251 = vector.load %arg0[%250, %c0_49, %c0_50] : memref<8x8x128xbf16, #tpu.memory_space<vmem>>, vector<1x8x128xbf16>
    %252 = vector.shape_cast %251 : vector<1x8x128xbf16> to vector<8x128xbf16>
    %253 = tpu.concatenate %244, %249 in 1 : vector<8x128xf32>, vector<8x128xf32> -> vector<8x256xf32>
    %254 = arith.truncf %253 : vector<8x256xf32> to vector<8x256xbf16>
    %cst_51 = arith.constant dense<0.000000e+00> : vector<8x1024xf32>
    %255 = tpu.matmul %252, %0, %cst_51 {dimension_numbers = #tpu.dot_dimension_numbers<[1], [0], [0], [1], [0, 0, 1, 1], [], []>} : vector<8x128xbf16>, vector<128x1024xbf16>, vector<8x1024xf32> -> vector<8x1024xf32>
    %cst_52 = arith.constant dense<0.000000e+00> : vector<8x1024xf32>
    %256 = tpu.matmul %254, %1, %cst_52 {dimension_numbers = #tpu.dot_dimension_numbers<[1], [0], [0], [1], [0, 0, 1, 1], [], []>} : vector<8x256xbf16>, vector<256x1024xbf16>, vector<8x1024xf32> -> vector<8x1024xf32>
    %257 = arith.addf %255, %256 : vector<8x1024xf32>
    %258 = arith.addf %257, %4 : vector<8x1024xf32>
    %259 = vector.extract_strided_slice %258 {offsets = [0, 0], sizes = [8, 128], strides = [1, 1]} : vector<8x1024xf32> to vector<8x128xf32>
    %260 = arith.negf %259 : vector<8x128xf32>
    %261 = math.exp %260 : vector<8x128xf32>
    %cst_53 = arith.constant 1.000000e+00 : f32
    %262 = vector.broadcast %cst_53 : f32 to vector<8x128xf32>
    %263 = arith.addf %262, %261 : vector<8x128xf32>
    %264 = arith.divf %262, %263 : vector<8x128xf32>
    %265 = vector.extract_strided_slice %258 {offsets = [0, 128], sizes = [8, 128], strides = [1, 1]} : vector<8x1024xf32> to vector<8x128xf32>
    %266 = arith.negf %265 : vector<8x128xf32>
    %267 = math.exp %266 : vector<8x128xf32>
    %cst_54 = arith.constant 1.000000e+00 : f32
    %268 = vector.broadcast %cst_54 : f32 to vector<8x128xf32>
    %269 = arith.addf %268, %267 : vector<8x128xf32>
    %270 = arith.divf %268, %269 : vector<8x128xf32>
    %271 = vector.extract_strided_slice %258 {offsets = [0, 256], sizes = [8, 128], strides = [1, 1]} : vector<8x1024xf32> to vector<8x128xf32>
    %272 = arith.negf %271 : vector<8x128xf32>
    %273 = math.exp %272 : vector<8x128xf32>
    %cst_55 = arith.constant 1.000000e+00 : f32
    %274 = vector.broadcast %cst_55 : f32 to vector<8x128xf32>
    %275 = arith.addf %274, %273 : vector<8x128xf32>
    %276 = arith.divf %274, %275 : vector<8x128xf32>
    %277 = vector.extract_strided_slice %258 {offsets = [0, 384], sizes = [8, 128], strides = [1, 1]} : vector<8x1024xf32> to vector<8x128xf32>
    %278 = math.tanh %277 : vector<8x128xf32>
    %279 = vector.extract_strided_slice %258 {offsets = [0, 512], sizes = [8, 128], strides = [1, 1]} : vector<8x1024xf32> to vector<8x128xf32>
    %280 = arith.negf %279 : vector<8x128xf32>
    %281 = math.exp %280 : vector<8x128xf32>
    %cst_56 = arith.constant 1.000000e+00 : f32
    %282 = vector.broadcast %cst_56 : f32 to vector<8x128xf32>
    %283 = arith.addf %282, %281 : vector<8x128xf32>
    %284 = arith.divf %282, %283 : vector<8x128xf32>
    %285 = vector.extract_strided_slice %258 {offsets = [0, 640], sizes = [8, 128], strides = [1, 1]} : vector<8x1024xf32> to vector<8x128xf32>
    %286 = arith.negf %285 : vector<8x128xf32>
    %287 = math.exp %286 : vector<8x128xf32>
    %cst_57 = arith.constant 1.000000e+00 : f32
    %288 = vector.broadcast %cst_57 : f32 to vector<8x128xf32>
    %289 = arith.addf %288, %287 : vector<8x128xf32>
    %290 = arith.divf %288, %289 : vector<8x128xf32>
    %291 = vector.extract_strided_slice %258 {offsets = [0, 768], sizes = [8, 128], strides = [1, 1]} : vector<8x1024xf32> to vector<8x128xf32>
    %292 = arith.negf %291 : vector<8x128xf32>
    %293 = math.exp %292 : vector<8x128xf32>
    %cst_58 = arith.constant 1.000000e+00 : f32
    %294 = vector.broadcast %cst_58 : f32 to vector<8x128xf32>
    %295 = arith.addf %294, %293 : vector<8x128xf32>
    %296 = arith.divf %294, %295 : vector<8x128xf32>
    %297 = vector.extract_strided_slice %258 {offsets = [0, 896], sizes = [8, 128], strides = [1, 1]} : vector<8x1024xf32> to vector<8x128xf32>
    %298 = math.tanh %297 : vector<8x128xf32>
    %299 = arith.mulf %242, %7 : vector<8x128xf32>
    %300 = arith.mulf %264, %299 : vector<8x128xf32>
    %301 = arith.mulf %270, %278 : vector<8x128xf32>
    %302 = arith.addf %300, %301 : vector<8x128xf32>
    %303 = math.tanh %302 : vector<8x128xf32>
    %304 = arith.mulf %276, %303 : vector<8x128xf32>
    %305 = arith.mulf %284, %247 : vector<8x128xf32>
    %306 = arith.mulf %290, %298 : vector<8x128xf32>
    %307 = arith.addf %305, %306 : vector<8x128xf32>
    %308 = math.tanh %307 : vector<8x128xf32>
    %309 = arith.mulf %296, %308 : vector<8x128xf32>
    %c5_i32 = arith.constant 5 : i32
    %310 = arith.index_cast %c5_i32 : i32 to index
    %c0_59 = arith.constant 0 : index
    %c0_60 = arith.constant 0 : index
    %311 = vector.load %arg0[%310, %c0_59, %c0_60] : memref<8x8x128xbf16, #tpu.memory_space<vmem>>, vector<1x8x128xbf16>
    %312 = vector.shape_cast %311 : vector<1x8x128xbf16> to vector<8x128xbf16>
    %313 = tpu.concatenate %304, %309 in 1 : vector<8x128xf32>, vector<8x128xf32> -> vector<8x256xf32>
    %314 = arith.truncf %313 : vector<8x256xf32> to vector<8x256xbf16>
    %cst_61 = arith.constant dense<0.000000e+00> : vector<8x1024xf32>
    %315 = tpu.matmul %312, %0, %cst_61 {dimension_numbers = #tpu.dot_dimension_numbers<[1], [0], [0], [1], [0, 0, 1, 1], [], []>} : vector<8x128xbf16>, vector<128x1024xbf16>, vector<8x1024xf32> -> vector<8x1024xf32>
    %cst_62 = arith.constant dense<0.000000e+00> : vector<8x1024xf32>
    %316 = tpu.matmul %314, %1, %cst_62 {dimension_numbers = #tpu.dot_dimension_numbers<[1], [0], [0], [1], [0, 0, 1, 1], [], []>} : vector<8x256xbf16>, vector<256x1024xbf16>, vector<8x1024xf32> -> vector<8x1024xf32>
    %317 = arith.addf %315, %316 : vector<8x1024xf32>
    %318 = arith.addf %317, %4 : vector<8x1024xf32>
    %319 = vector.extract_strided_slice %318 {offsets = [0, 0], sizes = [8, 128], strides = [1, 1]} : vector<8x1024xf32> to vector<8x128xf32>
    %320 = arith.negf %319 : vector<8x128xf32>
    %321 = math.exp %320 : vector<8x128xf32>
    %cst_63 = arith.constant 1.000000e+00 : f32
    %322 = vector.broadcast %cst_63 : f32 to vector<8x128xf32>
    %323 = arith.addf %322, %321 : vector<8x128xf32>
    %324 = arith.divf %322, %323 : vector<8x128xf32>
    %325 = vector.extract_strided_slice %318 {offsets = [0, 128], sizes = [8, 128], strides = [1, 1]} : vector<8x1024xf32> to vector<8x128xf32>
    %326 = arith.negf %325 : vector<8x128xf32>
    %327 = math.exp %326 : vector<8x128xf32>
    %cst_64 = arith.constant 1.000000e+00 : f32
    %328 = vector.broadcast %cst_64 : f32 to vector<8x128xf32>
    %329 = arith.addf %328, %327 : vector<8x128xf32>
    %330 = arith.divf %328, %329 : vector<8x128xf32>
    %331 = vector.extract_strided_slice %318 {offsets = [0, 256], sizes = [8, 128], strides = [1, 1]} : vector<8x1024xf32> to vector<8x128xf32>
    %332 = arith.negf %331 : vector<8x128xf32>
    %333 = math.exp %332 : vector<8x128xf32>
    %cst_65 = arith.constant 1.000000e+00 : f32
    %334 = vector.broadcast %cst_65 : f32 to vector<8x128xf32>
    %335 = arith.addf %334, %333 : vector<8x128xf32>
    %336 = arith.divf %334, %335 : vector<8x128xf32>
    %337 = vector.extract_strided_slice %318 {offsets = [0, 384], sizes = [8, 128], strides = [1, 1]} : vector<8x1024xf32> to vector<8x128xf32>
    %338 = math.tanh %337 : vector<8x128xf32>
    %339 = vector.extract_strided_slice %318 {offsets = [0, 512], sizes = [8, 128], strides = [1, 1]} : vector<8x1024xf32> to vector<8x128xf32>
    %340 = arith.negf %339 : vector<8x128xf32>
    %341 = math.exp %340 : vector<8x128xf32>
    %cst_66 = arith.constant 1.000000e+00 : f32
    %342 = vector.broadcast %cst_66 : f32 to vector<8x128xf32>
    %343 = arith.addf %342, %341 : vector<8x128xf32>
    %344 = arith.divf %342, %343 : vector<8x128xf32>
    %345 = vector.extract_strided_slice %318 {offsets = [0, 640], sizes = [8, 128], strides = [1, 1]} : vector<8x1024xf32> to vector<8x128xf32>
    %346 = arith.negf %345 : vector<8x128xf32>
    %347 = math.exp %346 : vector<8x128xf32>
    %cst_67 = arith.constant 1.000000e+00 : f32
    %348 = vector.broadcast %cst_67 : f32 to vector<8x128xf32>
    %349 = arith.addf %348, %347 : vector<8x128xf32>
    %350 = arith.divf %348, %349 : vector<8x128xf32>
    %351 = vector.extract_strided_slice %318 {offsets = [0, 768], sizes = [8, 128], strides = [1, 1]} : vector<8x1024xf32> to vector<8x128xf32>
    %352 = arith.negf %351 : vector<8x128xf32>
    %353 = math.exp %352 : vector<8x128xf32>
    %cst_68 = arith.constant 1.000000e+00 : f32
    %354 = vector.broadcast %cst_68 : f32 to vector<8x128xf32>
    %355 = arith.addf %354, %353 : vector<8x128xf32>
    %356 = arith.divf %354, %355 : vector<8x128xf32>
    %357 = vector.extract_strided_slice %318 {offsets = [0, 896], sizes = [8, 128], strides = [1, 1]} : vector<8x1024xf32> to vector<8x128xf32>
    %358 = math.tanh %357 : vector<8x128xf32>
    %359 = arith.mulf %302, %7 : vector<8x128xf32>
    %360 = arith.mulf %324, %359 : vector<8x128xf32>
    %361 = arith.mulf %330, %338 : vector<8x128xf32>
    %362 = arith.addf %360, %361 : vector<8x128xf32>
    %363 = math.tanh %362 : vector<8x128xf32>
    %364 = arith.mulf %336, %363 : vector<8x128xf32>
    %365 = arith.mulf %344, %307 : vector<8x128xf32>
    %366 = arith.mulf %350, %358 : vector<8x128xf32>
    %367 = arith.addf %365, %366 : vector<8x128xf32>
    %368 = math.tanh %367 : vector<8x128xf32>
    %369 = arith.mulf %356, %368 : vector<8x128xf32>
    %c6_i32 = arith.constant 6 : i32
    %370 = arith.index_cast %c6_i32 : i32 to index
    %c0_69 = arith.constant 0 : index
    %c0_70 = arith.constant 0 : index
    %371 = vector.load %arg0[%370, %c0_69, %c0_70] : memref<8x8x128xbf16, #tpu.memory_space<vmem>>, vector<1x8x128xbf16>
    %372 = vector.shape_cast %371 : vector<1x8x128xbf16> to vector<8x128xbf16>
    %373 = tpu.concatenate %364, %369 in 1 : vector<8x128xf32>, vector<8x128xf32> -> vector<8x256xf32>
    %374 = arith.truncf %373 : vector<8x256xf32> to vector<8x256xbf16>
    %cst_71 = arith.constant dense<0.000000e+00> : vector<8x1024xf32>
    %375 = tpu.matmul %372, %0, %cst_71 {dimension_numbers = #tpu.dot_dimension_numbers<[1], [0], [0], [1], [0, 0, 1, 1], [], []>} : vector<8x128xbf16>, vector<128x1024xbf16>, vector<8x1024xf32> -> vector<8x1024xf32>
    %cst_72 = arith.constant dense<0.000000e+00> : vector<8x1024xf32>
    %376 = tpu.matmul %374, %1, %cst_72 {dimension_numbers = #tpu.dot_dimension_numbers<[1], [0], [0], [1], [0, 0, 1, 1], [], []>} : vector<8x256xbf16>, vector<256x1024xbf16>, vector<8x1024xf32> -> vector<8x1024xf32>
    %377 = arith.addf %375, %376 : vector<8x1024xf32>
    %378 = arith.addf %377, %4 : vector<8x1024xf32>
    %379 = vector.extract_strided_slice %378 {offsets = [0, 0], sizes = [8, 128], strides = [1, 1]} : vector<8x1024xf32> to vector<8x128xf32>
    %380 = arith.negf %379 : vector<8x128xf32>
    %381 = math.exp %380 : vector<8x128xf32>
    %cst_73 = arith.constant 1.000000e+00 : f32
    %382 = vector.broadcast %cst_73 : f32 to vector<8x128xf32>
    %383 = arith.addf %382, %381 : vector<8x128xf32>
    %384 = arith.divf %382, %383 : vector<8x128xf32>
    %385 = vector.extract_strided_slice %378 {offsets = [0, 128], sizes = [8, 128], strides = [1, 1]} : vector<8x1024xf32> to vector<8x128xf32>
    %386 = arith.negf %385 : vector<8x128xf32>
    %387 = math.exp %386 : vector<8x128xf32>
    %cst_74 = arith.constant 1.000000e+00 : f32
    %388 = vector.broadcast %cst_74 : f32 to vector<8x128xf32>
    %389 = arith.addf %388, %387 : vector<8x128xf32>
    %390 = arith.divf %388, %389 : vector<8x128xf32>
    %391 = vector.extract_strided_slice %378 {offsets = [0, 256], sizes = [8, 128], strides = [1, 1]} : vector<8x1024xf32> to vector<8x128xf32>
    %392 = arith.negf %391 : vector<8x128xf32>
    %393 = math.exp %392 : vector<8x128xf32>
    %cst_75 = arith.constant 1.000000e+00 : f32
    %394 = vector.broadcast %cst_75 : f32 to vector<8x128xf32>
    %395 = arith.addf %394, %393 : vector<8x128xf32>
    %396 = arith.divf %394, %395 : vector<8x128xf32>
    %397 = vector.extract_strided_slice %378 {offsets = [0, 384], sizes = [8, 128], strides = [1, 1]} : vector<8x1024xf32> to vector<8x128xf32>
    %398 = math.tanh %397 : vector<8x128xf32>
    %399 = vector.extract_strided_slice %378 {offsets = [0, 512], sizes = [8, 128], strides = [1, 1]} : vector<8x1024xf32> to vector<8x128xf32>
    %400 = arith.negf %399 : vector<8x128xf32>
    %401 = math.exp %400 : vector<8x128xf32>
    %cst_76 = arith.constant 1.000000e+00 : f32
    %402 = vector.broadcast %cst_76 : f32 to vector<8x128xf32>
    %403 = arith.addf %402, %401 : vector<8x128xf32>
    %404 = arith.divf %402, %403 : vector<8x128xf32>
    %405 = vector.extract_strided_slice %378 {offsets = [0, 640], sizes = [8, 128], strides = [1, 1]} : vector<8x1024xf32> to vector<8x128xf32>
    %406 = arith.negf %405 : vector<8x128xf32>
    %407 = math.exp %406 : vector<8x128xf32>
    %cst_77 = arith.constant 1.000000e+00 : f32
    %408 = vector.broadcast %cst_77 : f32 to vector<8x128xf32>
    %409 = arith.addf %408, %407 : vector<8x128xf32>
    %410 = arith.divf %408, %409 : vector<8x128xf32>
    %411 = vector.extract_strided_slice %378 {offsets = [0, 768], sizes = [8, 128], strides = [1, 1]} : vector<8x1024xf32> to vector<8x128xf32>
    %412 = arith.negf %411 : vector<8x128xf32>
    %413 = math.exp %412 : vector<8x128xf32>
    %cst_78 = arith.constant 1.000000e+00 : f32
    %414 = vector.broadcast %cst_78 : f32 to vector<8x128xf32>
    %415 = arith.addf %414, %413 : vector<8x128xf32>
    %416 = arith.divf %414, %415 : vector<8x128xf32>
    %417 = vector.extract_strided_slice %378 {offsets = [0, 896], sizes = [8, 128], strides = [1, 1]} : vector<8x1024xf32> to vector<8x128xf32>
    %418 = math.tanh %417 : vector<8x128xf32>
    %419 = arith.mulf %362, %7 : vector<8x128xf32>
    %420 = arith.mulf %384, %419 : vector<8x128xf32>
    %421 = arith.mulf %390, %398 : vector<8x128xf32>
    %422 = arith.addf %420, %421 : vector<8x128xf32>
    %423 = math.tanh %422 : vector<8x128xf32>
    %424 = arith.mulf %396, %423 : vector<8x128xf32>
    %425 = arith.mulf %404, %367 : vector<8x128xf32>
    %426 = arith.mulf %410, %418 : vector<8x128xf32>
    %427 = arith.addf %425, %426 : vector<8x128xf32>
    %428 = math.tanh %427 : vector<8x128xf32>
    %429 = arith.mulf %416, %428 : vector<8x128xf32>
    %c7_i32 = arith.constant 7 : i32
    %430 = arith.index_cast %c7_i32 : i32 to index
    %c0_79 = arith.constant 0 : index
    %c0_80 = arith.constant 0 : index
    %431 = vector.load %arg0[%430, %c0_79, %c0_80] : memref<8x8x128xbf16, #tpu.memory_space<vmem>>, vector<1x8x128xbf16>
    %432 = vector.shape_cast %431 : vector<1x8x128xbf16> to vector<8x128xbf16>
    %433 = tpu.concatenate %424, %429 in 1 : vector<8x128xf32>, vector<8x128xf32> -> vector<8x256xf32>
    %434 = arith.truncf %433 : vector<8x256xf32> to vector<8x256xbf16>
    %cst_81 = arith.constant dense<0.000000e+00> : vector<8x1024xf32>
    %435 = tpu.matmul %432, %0, %cst_81 {dimension_numbers = #tpu.dot_dimension_numbers<[1], [0], [0], [1], [0, 0, 1, 1], [], []>} : vector<8x128xbf16>, vector<128x1024xbf16>, vector<8x1024xf32> -> vector<8x1024xf32>
    %cst_82 = arith.constant dense<0.000000e+00> : vector<8x1024xf32>
    %436 = tpu.matmul %434, %1, %cst_82 {dimension_numbers = #tpu.dot_dimension_numbers<[1], [0], [0], [1], [0, 0, 1, 1], [], []>} : vector<8x256xbf16>, vector<256x1024xbf16>, vector<8x1024xf32> -> vector<8x1024xf32>
    %437 = arith.addf %435, %436 : vector<8x1024xf32>
    %438 = arith.addf %437, %4 : vector<8x1024xf32>
    %439 = vector.extract_strided_slice %438 {offsets = [0, 0], sizes = [8, 128], strides = [1, 1]} : vector<8x1024xf32> to vector<8x128xf32>
    %440 = arith.negf %439 : vector<8x128xf32>
    %441 = math.exp %440 : vector<8x128xf32>
    %cst_83 = arith.constant 1.000000e+00 : f32
    %442 = vector.broadcast %cst_83 : f32 to vector<8x128xf32>
    %443 = arith.addf %442, %441 : vector<8x128xf32>
    %444 = arith.divf %442, %443 : vector<8x128xf32>
    %445 = vector.extract_strided_slice %438 {offsets = [0, 128], sizes = [8, 128], strides = [1, 1]} : vector<8x1024xf32> to vector<8x128xf32>
    %446 = arith.negf %445 : vector<8x128xf32>
    %447 = math.exp %446 : vector<8x128xf32>
    %cst_84 = arith.constant 1.000000e+00 : f32
    %448 = vector.broadcast %cst_84 : f32 to vector<8x128xf32>
    %449 = arith.addf %448, %447 : vector<8x128xf32>
    %450 = arith.divf %448, %449 : vector<8x128xf32>
    %451 = vector.extract_strided_slice %438 {offsets = [0, 256], sizes = [8, 128], strides = [1, 1]} : vector<8x1024xf32> to vector<8x128xf32>
    %452 = arith.negf %451 : vector<8x128xf32>
    %453 = math.exp %452 : vector<8x128xf32>
    %cst_85 = arith.constant 1.000000e+00 : f32
    %454 = vector.broadcast %cst_85 : f32 to vector<8x128xf32>
    %455 = arith.addf %454, %453 : vector<8x128xf32>
    %456 = arith.divf %454, %455 : vector<8x128xf32>
    %457 = vector.extract_strided_slice %438 {offsets = [0, 384], sizes = [8, 128], strides = [1, 1]} : vector<8x1024xf32> to vector<8x128xf32>
    %458 = math.tanh %457 : vector<8x128xf32>
    %459 = vector.extract_strided_slice %438 {offsets = [0, 512], sizes = [8, 128], strides = [1, 1]} : vector<8x1024xf32> to vector<8x128xf32>
    %460 = arith.negf %459 : vector<8x128xf32>
    %461 = math.exp %460 : vector<8x128xf32>
    %cst_86 = arith.constant 1.000000e+00 : f32
    %462 = vector.broadcast %cst_86 : f32 to vector<8x128xf32>
    %463 = arith.addf %462, %461 : vector<8x128xf32>
    %464 = arith.divf %462, %463 : vector<8x128xf32>
    %465 = vector.extract_strided_slice %438 {offsets = [0, 640], sizes = [8, 128], strides = [1, 1]} : vector<8x1024xf32> to vector<8x128xf32>
    %466 = arith.negf %465 : vector<8x128xf32>
    %467 = math.exp %466 : vector<8x128xf32>
    %cst_87 = arith.constant 1.000000e+00 : f32
    %468 = vector.broadcast %cst_87 : f32 to vector<8x128xf32>
    %469 = arith.addf %468, %467 : vector<8x128xf32>
    %470 = arith.divf %468, %469 : vector<8x128xf32>
    %471 = vector.extract_strided_slice %438 {offsets = [0, 768], sizes = [8, 128], strides = [1, 1]} : vector<8x1024xf32> to vector<8x128xf32>
    %472 = arith.negf %471 : vector<8x128xf32>
    %473 = math.exp %472 : vector<8x128xf32>
    %cst_88 = arith.constant 1.000000e+00 : f32
    %474 = vector.broadcast %cst_88 : f32 to vector<8x128xf32>
    %475 = arith.addf %474, %473 : vector<8x128xf32>
    %476 = arith.divf %474, %475 : vector<8x128xf32>
    %477 = vector.extract_strided_slice %438 {offsets = [0, 896], sizes = [8, 128], strides = [1, 1]} : vector<8x1024xf32> to vector<8x128xf32>
    %478 = math.tanh %477 : vector<8x128xf32>
    %479 = arith.mulf %422, %7 : vector<8x128xf32>
    %480 = arith.mulf %444, %479 : vector<8x128xf32>
    %481 = arith.mulf %450, %458 : vector<8x128xf32>
    %482 = arith.addf %480, %481 : vector<8x128xf32>
    %483 = math.tanh %482 : vector<8x128xf32>
    %484 = arith.mulf %456, %483 : vector<8x128xf32>
    %485 = arith.mulf %464, %427 : vector<8x128xf32>
    %486 = arith.mulf %470, %478 : vector<8x128xf32>
    %487 = arith.addf %485, %486 : vector<8x128xf32>
    %488 = math.tanh %487 : vector<8x128xf32>
    %489 = arith.mulf %476, %488 : vector<8x128xf32>
    %c8_i32 = arith.constant 8 : i32
    %c0_89 = arith.constant 0 : index
    %c0_90 = arith.constant 0 : index
    %490 = vector.load %arg1[%c0_89, %c0_90] : memref<8x128xf32, #tpu.memory_space<vmem>>, vector<8x128xf32>
    %491 = arith.truncf %490 : vector<8x128xf32> to vector<8x128xbf16>
    %c0_91 = arith.constant 0 : index
    %c0_92 = arith.constant 0 : index
    %492 = vector.load %arg2[%c0_91, %c0_92] : memref<128x384xbf16, #tpu.memory_space<vmem>>, vector<128x384xbf16>
    %cst_93 = arith.constant dense<0.000000e+00> : vector<8x384xf32>
    %493 = tpu.matmul %491, %492, %cst_93 {dimension_numbers = #tpu.dot_dimension_numbers<[1], [0], [0], [1], [0, 0, 1, 1], [], []>} : vector<8x128xbf16>, vector<128x384xbf16>, vector<8x384xf32> -> vector<8x384xf32>
    %cst_94 = arith.constant dense<0.000000e+00> : vector<8xf32>
    %494 = vector.multi_reduction <add>, %490, %cst_94 [1] : vector<8x128xf32> to vector<8xf32>
    %495 = vector.shape_cast %494 : vector<8xf32> to vector<8x1xf32>
    %496 = arith.mulf %490, %490 : vector<8x128xf32>
    %cst_95 = arith.constant dense<0.000000e+00> : vector<8xf32>
    %497 = vector.multi_reduction <add>, %496, %cst_95 [1] : vector<8x128xf32> to vector<8xf32>
    %498 = vector.shape_cast %497 : vector<8xf32> to vector<8x1xf32>
    %cst_96 = arith.constant dense<0.000000e+00> : vector<8xf32>
    %499 = vector.multi_reduction <add>, %493, %cst_96 [1] : vector<8x384xf32> to vector<8xf32>
    %500 = vector.shape_cast %499 : vector<8xf32> to vector<8x1xf32>
    %501 = arith.mulf %493, %493 : vector<8x384xf32>
    %cst_97 = arith.constant dense<0.000000e+00> : vector<8xf32>
    %502 = vector.multi_reduction <add>, %501, %cst_97 [1] : vector<8x384xf32> to vector<8xf32>
    %503 = vector.shape_cast %502 : vector<8xf32> to vector<8x1xf32>
    %504 = tpu.concatenate %495, %498, %500, %503 in 1 : vector<8x1xf32>, vector<8x1xf32>, vector<8x1xf32>, vector<8x1xf32> -> vector<8x4xf32>
    %c0_98 = arith.constant 0 : index
    %c0_99 = arith.constant 0 : index
    %505 = vector.load %arg7[%c0_98, %c0_99] : memref<8x8xf32, #tpu.memory_space<vmem>>, vector<8x8xf32>
    %cst_100 = arith.constant dense<0.000000e+00> : vector<8x4xf32>
    %506 = tpu.matmul %505, %504, %cst_100 {dimension_numbers = #tpu.dot_dimension_numbers<[1], [0], [0], [1], [0, 0, 1, 1], [], []>} : vector<8x8xf32>, vector<8x4xf32>, vector<8x4xf32> -> vector<8x4xf32>
    %507 = vector.extract_strided_slice %506 {offsets = [0, 0], sizes = [8, 1], strides = [1, 1]} : vector<8x4xf32> to vector<8x1xf32>
    %cst_101 = arith.constant 3.200000e+01 : f32
    %508 = vector.broadcast %cst_101 : f32 to vector<8x1xf32>
    %509 = arith.divf %507, %508 : vector<8x1xf32>
    %510 = vector.extract_strided_slice %506 {offsets = [0, 1], sizes = [8, 1], strides = [1, 1]} : vector<8x4xf32> to vector<8x1xf32>
    %cst_102 = arith.constant 3.200000e+01 : f32
    %511 = vector.broadcast %cst_102 : f32 to vector<8x1xf32>
    %512 = arith.mulf %511, %509 : vector<8x1xf32>
    %513 = arith.mulf %512, %509 : vector<8x1xf32>
    %514 = arith.subf %510, %513 : vector<8x1xf32>
    %cst_103 = arith.constant 3.100000e+01 : f32
    %515 = vector.broadcast %cst_103 : f32 to vector<8x1xf32>
    %516 = arith.divf %514, %515 : vector<8x1xf32>
    %cst_104 = arith.constant 0.000000e+00 : f32
    %517 = vector.broadcast %cst_104 : f32 to vector<8x1xf32>
    %518 = arith.maximumf %516, %517 : vector<8x1xf32>
    %519 = vector.extract_strided_slice %506 {offsets = [0, 2], sizes = [8, 1], strides = [1, 1]} : vector<8x4xf32> to vector<8x1xf32>
    %cst_105 = arith.constant 9.600000e+01 : f32
    %520 = vector.broadcast %cst_105 : f32 to vector<8x1xf32>
    %521 = arith.divf %519, %520 : vector<8x1xf32>
    %522 = vector.extract_strided_slice %506 {offsets = [0, 3], sizes = [8, 1], strides = [1, 1]} : vector<8x4xf32> to vector<8x1xf32>
    %cst_106 = arith.constant 9.600000e+01 : f32
    %523 = vector.broadcast %cst_106 : f32 to vector<8x1xf32>
    %524 = arith.mulf %523, %521 : vector<8x1xf32>
    %525 = arith.mulf %524, %521 : vector<8x1xf32>
    %526 = arith.subf %522, %525 : vector<8x1xf32>
    %cst_107 = arith.constant 9.500000e+01 : f32
    %527 = vector.broadcast %cst_107 : f32 to vector<8x1xf32>
    %528 = arith.divf %526, %527 : vector<8x1xf32>
    %cst_108 = arith.constant 0.000000e+00 : f32
    %529 = vector.broadcast %cst_108 : f32 to vector<8x1xf32>
    %530 = arith.maximumf %528, %529 : vector<8x1xf32>
    %531 = vector.broadcast %518 : vector<8x1xf32> to vector<8x128xf32>
    %532 = arith.mulf %484, %531 : vector<8x128xf32>
    %533 = vector.broadcast %8 : f32 to vector<8x128xf32>
    %534 = arith.mulf %532, %533 : vector<8x128xf32>
    %535 = vector.broadcast %530 : vector<8x1xf32> to vector<8x128xf32>
    %536 = arith.mulf %489, %535 : vector<8x128xf32>
    %537 = arith.addf %534, %536 : vector<8x128xf32>
    %538 = vector.broadcast %8 : f32 to vector<8x1xf32>
    %539 = arith.mulf %530, %538 : vector<8x1xf32>
    %540 = arith.addf %518, %539 : vector<8x1xf32>
    %541 = vector.broadcast %540 : vector<8x1xf32> to vector<8x128xf32>
    %542 = arith.divf %537, %541 : vector<8x128xf32>
    %c0_109 = arith.constant 0 : index
    %c0_110 = arith.constant 0 : index
    %543 = vector.load %arg8[%c0_109, %c0_110] : memref<16x8xf32, #tpu.memory_space<vmem>>, vector<16x8xf32>
    %cst_111 = arith.constant dense<0.000000e+00> : vector<16x128xf32>
    %544 = tpu.matmul %543, %542, %cst_111 {dimension_numbers = #tpu.dot_dimension_numbers<[1], [0], [0], [1], [0, 0, 1, 1], [], []>} : vector<16x8xf32>, vector<8x128xf32>, vector<16x128xf32> -> vector<16x128xf32>
    %c0_112 = arith.constant 0 : index
    %c0_113 = arith.constant 0 : index
    %545 = vector.load %arg9[%c0_112, %c0_113] : memref<16x1xf32, #tpu.memory_space<vmem>>, vector<16x1xf32>
    %546 = vector.broadcast %545 : vector<16x1xf32> to vector<16x128xf32>
    %547 = arith.addf %544, %546 : vector<16x128xf32>
    %c0_114 = arith.constant 0 : index
    %c0_115 = arith.constant 0 : index
    %548 = vector.load %arg11[%c0_114, %c0_115] : memref<16x128xf32, #tpu.memory_space<vmem>>, vector<16x128xf32>
    tpu.vector_store %arg11[%c0_114, %c0_115], %547 {strides = array<i32>} : memref<16x128xf32, #tpu.memory_space<vmem>>, vector<16x128xf32>,
    return
  }
}

</mosaic_0001>

<llo_original>
// kernel: tpu_custom_call.1
$region0: #{tpu_custom_call.1}
  #allocation0 [shape = 'u32[]', space=smem, size = 0x4, offset = 0x4, fixed_abs, tag = 'smem constant byte address 0x4 - core index']
  #allocation1 [shape = 'u32[144,128]{1,0:T(1,128)}', space=vmem, size = 0x12000, scoped, tag = 'internal scratch']
  #allocation2 [shape = 'f32[1,1]{1,0:T(1,128)S(6)}', space=smem, size = 0x200, scoped, tag = 'scoped memory for tpu_custom_call.1']
  %s0 = inlined_call_operand.vmem [shape: bf16[8,8,128], index: 0, kind: input, shape index: {}]
  %s1 = inlined_call_operand.vmem [shape: f32[8,128], index: 1, kind: input, shape index: {}]
  %s2 = inlined_call_operand.hbm [shape: bf16[128,384], index: 2, kind: input, shape index: {}]
  %s3 = inlined_call_operand.hbm [shape: bf16[128,1024], index: 3, kind: input, shape index: {}]
  %s4 = inlined_call_operand.hbm [shape: bf16[256,1024], index: 4, kind: input, shape index: {}]
  %s5 = inlined_call_operand.vmem [shape: f32[1,1024], index: 5, kind: input, shape index: {}]
  %s6 = inlined_call_operand.vmem [shape: f32[1,128], index: 6, kind: input, shape index: {}]
  %s7 = inlined_call_operand.vmem [shape: f32[8,8], index: 7, kind: input, shape index: {}]
  %s8 = inlined_call_operand.vmem [shape: f32[16,8], index: 8, kind: input, shape index: {}]
  %s9 = inlined_call_operand.vmem [shape: f32[16,1], index: 9, kind: input, shape index: {}]
  %s10 = inlined_call_operand.<no memory space> [shape: f32[1,1], index: 10, kind: input, shape index: {}]
  %s11 = inlined_call_operand.hbm [shape: f32[16,128], index: 11, kind: output, shape index: {}]
  %s12 = sld [smem:[#allocation0]]
  $region66: #{tpu_custom_call.1} parent=0
    _
  %s14 = ssub.s32 1, %s12
  %s15 = scalar_select 0, %s14, %s12
  %16 = sst [smem:[#allocation2]] %s10
  $region1: #{tpu_custom_call.1} parent=0
    #allocation3 [shape = 'u8[98304]{0}', space=vmem, size = 0x18000, scoped, tag = 'input window, operand 2, single buffered']
    #allocation4 [shape = 's32[1]{0}', space=sflag, size = 0x4, scoped, tag = 'scoped memory for tpu_custom_call.1']
    #allocation5 [shape = 's32[1]{0}', space=sflag, size = 0x4, scoped, tag = 'scoped memory for tpu_custom_call.1']
    #allocation6 [shape = 'u8[262144]{0}', space=vmem, size = 0x40000, scoped, tag = 'input window, operand 3, single buffered']
    #allocation7 [shape = 's32[1]{0}', space=sflag, size = 0x4, scoped, tag = 'scoped memory for tpu_custom_call.1']
    #allocation8 [shape = 'u8[524288]{0}', space=vmem, size = 0x80000, scoped, tag = 'input window, operand 4, single buffered']
    #allocation9 [shape = 'u8[8192]{0}', space=vmem, size = 0x2000, scoped, tag = 'output window, operand 0, single buffered']
    %17 = vsyncpa [#allocation4], 0
    %18 = vsyncpa [#allocation7], 0
    %19 = vsyncpa [#allocation5], 0
    // Predicated region
    $region2: #{tpu_custom_call.1} parent=1 // pred_check
      _
    $region3: #{tpu_custom_call.1} parent=1 // pred_check_branch
      %21 = sbr.rel (0) target = $region5
    $region4: #{tpu_custom_call.1} parent=1 // pred_region
      _
    $region5: #{tpu_custom_call.1} parent=1 // pred_fallthru
      _
    // Predicated region
    $region6: #{tpu_custom_call.1} parent=1 // pred_check
      _
    $region7: #{tpu_custom_call.1} parent=1 // pred_check_branch
      %23 = sbr.rel (0) target = $region9
    $region8: #{tpu_custom_call.1} parent=1 // pred_region
      _
    $region9: #{tpu_custom_call.1} parent=1 // pred_fallthru
      _
    // Predicated region
    $region10: #{tpu_custom_call.1} parent=1 // pred_check
      _
    $region11: #{tpu_custom_call.1} parent=1 // pred_check_branch
      %25 = sbr.rel (0) target = $region13
    $region12: #{tpu_custom_call.1} parent=1 // pred_region
      %s27 = ssub.s32 3072, 3072
      %28 = vsyncadd [#allocation4], %s27
      %s29 = sshll.u32 [#allocation3], 4
      %s30 = int_to_ptr.vmem [resolvable:$true] %s29
      %35 = dma.hbm_to_vmem [thread:$0]  %s2, 3072, %s30, [#allocation4], 192, 192, 12
    $region13: #{tpu_custom_call.1} parent=1 // pred_fallthru
      _
    // Predicated region
    $region14: #{tpu_custom_call.1} parent=1 // pred_check
      _
    $region15: #{tpu_custom_call.1} parent=1 // pred_check_branch
      %37 = sbr.rel (0) target = $region17
    $region16: #{tpu_custom_call.1} parent=1 // pred_region
      %s39 = ssub.s32 8192, 8192
      %40 = vsyncadd [#allocation7], %s39
      %s41 = sshll.u32 [#allocation6], 4
      %s42 = int_to_ptr.vmem [resolvable:$true] %s41
      %47 = dma.hbm_to_vmem [thread:$0]  %s3, 8192, %s42, [#allocation7], 512, 512, 32
    $region17: #{tpu_custom_call.1} parent=1 // pred_fallthru
      _
    // Predicated region
    $region18: #{tpu_custom_call.1} parent=1 // pred_check
      _
    $region19: #{tpu_custom_call.1} parent=1 // pred_check_branch
      %49 = sbr.rel (0) target = $region21
    $region20: #{tpu_custom_call.1} parent=1 // pred_region
      %s51 = ssub.s32 16384, 16384
      %52 = vsyncadd [#allocation7], %s51
      %s53 = sshll.u32 [#allocation8], 4
      %s54 = int_to_ptr.vmem [resolvable:$true] %s53
      %59 = dma.hbm_to_vmem [thread:$0]  %s4, 16384, %s54, [#allocation7], 512, 512, 32
    $region21: #{tpu_custom_call.1} parent=1 // pred_fallthru
      _
    // Predicated region
    $region22: #{tpu_custom_call.1} parent=1 // pred_check
      _
    $region23: #{tpu_custom_call.1} parent=1 // pred_check_branch
      %61 = sbr.rel (0) target = $region25
    $region24: #{tpu_custom_call.1} parent=1 // pred_region
      _
    $region25: #{tpu_custom_call.1} parent=1 // pred_fallthru
      _
    // Predicated region
    $region26: #{tpu_custom_call.1} parent=1 // pred_check
      _
    $region27: #{tpu_custom_call.1} parent=1 // pred_check_branch
      %63 = sbr.rel (0) target = $region29
    $region28: #{tpu_custom_call.1} parent=1 // pred_region
      _
    $region29: #{tpu_custom_call.1} parent=1 // pred_fallthru
      _
    // Predicated region
    $region30: #{tpu_custom_call.1} parent=1 // pred_check
      _
    $region31: #{tpu_custom_call.1} parent=1 // pred_check_branch
      %65 = sbr.rel (0) target = $region33
    $region32: #{tpu_custom_call.1} parent=1 // pred_region
      _
    $region33: #{tpu_custom_call.1} parent=1 // pred_fallthru
      _
    // Predicated region
    $region34: #{tpu_custom_call.1} parent=1 // pred_check
      _
    $region35: #{tpu_custom_call.1} parent=1 // pred_check_branch
      %67 = sbr.rel (0) target = $region37
    $region36: #{tpu_custom_call.1} parent=1 // pred_region
      _
    $region37: #{tpu_custom_call.1} parent=1 // pred_fallthru
      _
    // Predicated region
    $region38: #{tpu_custom_call.1} parent=1 // pred_check
      _
    $region39: #{tpu_custom_call.1} parent=1 // pred_check_branch
      %69 = sbr.rel (0) target = $region41
    $region40: #{tpu_custom_call.1} parent=1 // pred_region
      _
    $region41: #{tpu_custom_call.1} parent=1 // pred_fallthru
      _
    // Predicated region
    $region42: #{tpu_custom_call.1} parent=1 // pred_check
      _
    $region43: #{tpu_custom_call.1} parent=1 // pred_check_branch
      %71 = sbr.rel (0) target = $region45
    $region44: #{tpu_custom_call.1} parent=1 // pred_region
      _
    $region45: #{tpu_custom_call.1} parent=1 // pred_fallthru
      _
    // Predicated region
    $region46: #{tpu_custom_call.1} parent=1 // pred_check
      _
    $region47: #{tpu_custom_call.1} parent=1 // pred_check_branch
      %73 = sbr.rel (0) target = $region49
    $region48: #{tpu_custom_call.1} parent=1 // pred_region
      %74 = dma.done [#allocation4], 3072
    $region49: #{tpu_custom_call.1} parent=1 // pred_fallthru
      _
    // Predicated region
    $region50: #{tpu_custom_call.1} parent=1 // pred_check
      _
    $region51: #{tpu_custom_call.1} parent=1 // pred_check_branch
      %76 = sbr.rel (0) target = $region53
    $region52: #{tpu_custom_call.1} parent=1 // pred_region
      %77 = dma.done [#allocation7], 8192
    $region53: #{tpu_custom_call.1} parent=1 // pred_fallthru
      _
    // Predicated region
    $region54: #{tpu_custom_call.1} parent=1 // pred_check
      _
    $region55: #{tpu_custom_call.1} parent=1 // pred_check_branch
      %79 = sbr.rel (0) target = $region57
    $region56: #{tpu_custom_call.1} parent=1 // pred_region
      %80 = dma.done [#allocation7], 16384
    $region57: #{tpu_custom_call.1} parent=1 // pred_fallthru
      _
    %v82 = vld [vmem:[#allocation6] sm:$0xff]
    %v83 = vld [vmem:[#allocation6 + $0x8] sm:$0xff]
    %v84 = vld [vmem:[#allocation6 + $0x10] sm:$0xff]
    %v85 = vld [vmem:[#allocation6 + $0x18] sm:$0xff]
    %v86 = vld [vmem:[#allocation6 + $0x20] sm:$0xff]
    %v87 = vld [vmem:[#allocation6 + $0x28] sm:$0xff]
    %v88 = vld [vmem:[#allocation6 + $0x30] sm:$0xff]
    %v89 = vld [vmem:[#allocation6 + $0x38] sm:$0xff]
    %v90 = vld [vmem:[#allocation6 + $0x40] sm:$0xff]
    %v91 = vld [vmem:[#allocation6 + $0x48] sm:$0xff]
    %v92 = vld [vmem:[#allocation6 + $0x50] sm:$0xff]
    %v93 = vld [vmem:[#allocation6 + $0x58] sm:$0xff]
    %v94 = vld [vmem:[#allocation6 + $0x60] sm:$0xff]
    %v95 = vld [vmem:[#allocation6 + $0x68] sm:$0xff]
    %v96 = vld [vmem:[#allocation6 + $0x70] sm:$0xff]
    %v97 = vld [vmem:[#allocation6 + $0x78] sm:$0xff]
    %v98 = vld [vmem:[#allocation6 + $0x80] sm:$0xff]
    %v99 = vld [vmem:[#allocation6 + $0x88] sm:$0xff]
    %v100 = vld [vmem:[#allocation6 + $0x90] sm:$0xff]
    %v101 = vld [vmem:[#allocation6 + $0x98] sm:$0xff]
    %v102 = vld [vmem:[#allocation6 + $0xa0] sm:$0xff]
    %v103 = vld [vmem:[#allocation6 + $0xa8] sm:$0xff]
    %v104 = vld [vmem:[#allocation6 + $0xb0] sm:$0xff]
    %v105 = vld [vmem:[#allocation6 + $0xb8] sm:$0xff]
    %v106 = vld [vmem:[#allocation6 + $0xc0] sm:$0xff]
    %v107 = vld [vmem:[#allocation6 + $0xc8] sm:$0xff]
    %v108 = vld [vmem:[#allocation6 + $0xd0] sm:$0xff]
    %v109 = vld [vmem:[#allocation6 + $0xd8] sm:$0xff]
    %v110 = vld [vmem:[#allocation6 + $0xe0] sm:$0xff]
    %v111 = vld [vmem:[#allocation6 + $0xe8] sm:$0xff]
    %v112 = vld [vmem:[#allocation6 + $0xf0] sm:$0xff]
    %v113 = vld [vmem:[#allocation6 + $0xf8] sm:$0xff]
    %v114 = vld [vmem:[#allocation6 + $0x100] sm:$0xff]
    %v115 = vld [vmem:[#allocation6 + $0x108] sm:$0xff]
    %v116 = vld [vmem:[#allocation6 + $0x110] sm:$0xff]
    %v117 = vld [vmem:[#allocation6 + $0x118] sm:$0xff]
    %v118 = vld [vmem:[#allocation6 + $0x120] sm:$0xff]
    %v119 = vld [vmem:[#allocation6 + $0x128] sm:$0xff]
    %v120 = vld [vmem:[#allocation6 + $0x130] sm:$0xff]
    %v121 = vld [vmem:[#allocation6 + $0x138] sm:$0xff]
    %v122 = vld [vmem:[#allocation6 + $0x140] sm:$0xff]
    %v123 = vld [vmem:[#allocation6 + $0x148] sm:$0xff]
    %v124 = vld [vmem:[#allocation6 + $0x150] sm:$0xff]
    %v125 = vld [vmem:[#allocation6 + $0x158] sm:$0xff]
    %v126 = vld [vmem:[#allocation6 + $0x160] sm:$0xff]
    %v127 = vld [vmem:[#allocation6 + $0x168] sm:$0xff]
    %v128 = vld [vmem:[#allocation6 + $0x170] sm:$0xff]
    %v129 = vld [vmem:[#allocation6 + $0x178] sm:$0xff]
    %v130 = vld [vmem:[#allocation6 + $0x180] sm:$0xff]
    %v131 = vld [vmem:[#allocation6 + $0x188] sm:$0xff]
    %v132 = vld [vmem:[#allocation6 + $0x190] sm:$0xff]
    %v133 = vld [vmem:[#allocation6 + $0x198] sm:$0xff]
    %v134 = vld [vmem:[#allocation6 + $0x1a0] sm:$0xff]
    %v135 = vld [vmem:[#allocation6 + $0x1a8] sm:$0xff]
    %v136 = vld [vmem:[#allocation6 + $0x1b0] sm:$0xff]
    %v137 = vld [vmem:[#allocation6 + $0x1b8] sm:$0xff]
    %v138 = vld [vmem:[#allocation6 + $0x1c0] sm:$0xff]
    %v139 = vld [vmem:[#allocation6 + $0x1c8] sm:$0xff]
    %v140 = vld [vmem:[#allocation6 + $0x1d0] sm:$0xff]
    %v141 = vld [vmem:[#allocation6 + $0x1d8] sm:$0xff]
    %v142 = vld [vmem:[#allocation6 + $0x1e0] sm:$0xff]
    %v143 = vld [vmem:[#allocation6 + $0x1e8] sm:$0xff]
    %v144 = vld [vmem:[#allocation6 + $0x1f0] sm:$0xff]
    %v145 = vld [vmem:[#allocation6 + $0x1f8] sm:$0xff]
    %v146 = vld [vmem:[#allocation8] sm:$0xff]
    %v147 = vld [vmem:[#allocation8 + $0x8] sm:$0xff]
    %v148 = vld [vmem:[#allocation8 + $0x10] sm:$0xff]
    %v149 = vld [vmem:[#allocation8 + $0x18] sm:$0xff]
    %v150 = vld [vmem:[#allocation8 + $0x20] sm:$0xff]
    %v151 = vld [vmem:[#allocation8 + $0x28] sm:$0xff]
    %v152 = vld [vmem:[#allocation8 + $0x30] sm:$0xff]
    %v153 = vld [vmem:[#allocation8 + $0x38] sm:$0xff]
    %v154 = vld [vmem:[#allocation8 + $0x40] sm:$0xff]
    %v155 = vld [vmem:[#allocation8 + $0x48] sm:$0xff]
    %v156 = vld [vmem:[#allocation8 + $0x50] sm:$0xff]
    %v157 = vld [vmem:[#allocation8 + $0x58] sm:$0xff]
    %v158 = vld [vmem:[#allocation8 + $0x60] sm:$0xff]
    %v159 = vld [vmem:[#allocation8 + $0x68] sm:$0xff]
    %v160 = vld [vmem:[#allocation8 + $0x70] sm:$0xff]
    %v161 = vld [vmem:[#allocation8 + $0x78] sm:$0xff]
    %v162 = vld [vmem:[#allocation8 + $0x80] sm:$0xff]
    %v163 = vld [vmem:[#allocation8 + $0x88] sm:$0xff]
    %v164 = vld [vmem:[#allocation8 + $0x90] sm:$0xff]
    %v165 = vld [vmem:[#allocation8 + $0x98] sm:$0xff]
    %v166 = vld [vmem:[#allocation8 + $0xa0] sm:$0xff]
    %v167 = vld [vmem:[#allocation8 + $0xa8] sm:$0xff]
    %v168 = vld [vmem:[#allocation8 + $0xb0] sm:$0xff]
    %v169 = vld [vmem:[#allocation8 + $0xb8] sm:$0xff]
    %v170 = vld [vmem:[#allocation8 + $0xc0] sm:$0xff]
    %v171 = vld [vmem:[#allocation8 + $0xc8] sm:$0xff]
    %v172 = vld [vmem:[#allocation8 + $0xd0] sm:$0xff]
    %v173 = vld [vmem:[#allocation8 + $0xd8] sm:$0xff]
    %v174 = vld [vmem:[#allocation8 + $0xe0] sm:$0xff]
    %v175 = vld [vmem:[#allocation8 + $0xe8] sm:$0xff]
    %v176 = vld [vmem:[#allocation8 + $0xf0] sm:$0xff]
    %v177 = vld [vmem:[#allocation8 + $0xf8] sm:$0xff]
    %v178 = vld [vmem:[#allocation8 + $0x100] sm:$0xff]
    %v179 = vld [vmem:[#allocation8 + $0x108] sm:$0xff]
    %v180 = vld [vmem:[#allocation8 + $0x110] sm:$0xff]
    %v181 = vld [vmem:[#allocation8 + $0x118] sm:$0xff]
    %v182 = vld [vmem:[#allocation8 + $0x120] sm:$0xff]
    %v183 = vld [vmem:[#allocation8 + $0x128] sm:$0xff]
    %v184 = vld [vmem:[#allocation8 + $0x130] sm:$0xff]
    %v185 = vld [vmem:[#allocation8 + $0x138] sm:$0xff]
    %v186 = vld [vmem:[#allocation8 + $0x140] sm:$0xff]
    %v187 = vld [vmem:[#allocation8 + $0x148] sm:$0xff]
    %v188 = vld [vmem:[#allocation8 + $0x150] sm:$0xff]
    %v189 = vld [vmem:[#allocation8 + $0x158] sm:$0xff]
    %v190 = vld [vmem:[#allocation8 + $0x160] sm:$0xff]
    %v191 = vld [vmem:[#allocation8 + $0x168] sm:$0xff]
    %v192 = vld [vmem:[#allocation8 + $0x170] sm:$0xff]
    %v193 = vld [vmem:[#allocation8 + $0x178] sm:$0xff]
    %v194 = vld [vmem:[#allocation8 + $0x180] sm:$0xff]
    %v195 = vld [vmem:[#allocation8 + $0x188] sm:$0xff]
    %v196 = vld [vmem:[#allocation8 + $0x190] sm:$0xff]
    %v197 = vld [vmem:[#allocation8 + $0x198] sm:$0xff]
    %v198 = vld [vmem:[#allocation8 + $0x1a0] sm:$0xff]
    %v199 = vld [vmem:[#allocation8 + $0x1a8] sm:$0xff]
    %v200 = vld [vmem:[#allocation8 + $0x1b0] sm:$0xff]
    %v201 = vld [vmem:[#allocation8 + $0x1b8] sm:$0xff]
    %v202 = vld [vmem:[#allocation8 + $0x1c0] sm:$0xff]
    %v203 = vld [vmem:[#allocation8 + $0x1c8] sm:$0xff]
    %v204 = vld [vmem:[#allocation8 + $0x1d0] sm:$0xff]
    %v205 = vld [vmem:[#allocation8 + $0x1d8] sm:$0xff]
    %v206 = vld [vmem:[#allocation8 + $0x1e0] sm:$0xff]
    %v207 = vld [vmem:[#allocation8 + $0x1e8] sm:$0xff]
    %v208 = vld [vmem:[#allocation8 + $0x1f0] sm:$0xff]
    %v209 = vld [vmem:[#allocation8 + $0x1f8] sm:$0xff]
    %v210 = vld [vmem:[#allocation8 + $0x200] sm:$0xff]
    %v211 = vld [vmem:[#allocation8 + $0x208] sm:$0xff]
    %v212 = vld [vmem:[#allocation8 + $0x210] sm:$0xff]
    %v213 = vld [vmem:[#allocation8 + $0x218] sm:$0xff]
    %v214 = vld [vmem:[#allocation8 + $0x220] sm:$0xff]
    %v215 = vld [vmem:[#allocation8 + $0x228] sm:$0xff]
    %v216 = vld [vmem:[#allocation8 + $0x230] sm:$0xff]
    %v217 = vld [vmem:[#allocation8 + $0x238] sm:$0xff]
    %v218 = vld [vmem:[#allocation8 + $0x240] sm:$0xff]
    %v219 = vld [vmem:[#allocation8 + $0x248] sm:$0xff]
    %v220 = vld [vmem:[#allocation8 + $0x250] sm:$0xff]
    %v221 = vld [vmem:[#allocation8 + $0x258] sm:$0xff]
    %v222 = vld [vmem:[#allocation8 + $0x260] sm:$0xff]
    %v223 = vld [vmem:[#allocation8 + $0x268] sm:$0xff]
    %v224 = vld [vmem:[#allocation8 + $0x270] sm:$0xff]
    %v225 = vld [vmem:[#allocation8 + $0x278] sm:$0xff]
    %v226 = vld [vmem:[#allocation8 + $0x280] sm:$0xff]
    %v227 = vld [vmem:[#allocation8 + $0x288] sm:$0xff]
    %v228 = vld [vmem:[#allocation8 + $0x290] sm:$0xff]
    %v229 = vld [vmem:[#allocation8 + $0x298] sm:$0xff]
    %v230 = vld [vmem:[#allocation8 + $0x2a0] sm:$0xff]
    %v231 = vld [vmem:[#allocation8 + $0x2a8] sm:$0xff]
    %v232 = vld [vmem:[#allocation8 + $0x2b0] sm:$0xff]
    %v233 = vld [vmem:[#allocation8 + $0x2b8] sm:$0xff]
    %v234 = vld [vmem:[#allocation8 + $0x2c0] sm:$0xff]
    %v235 = vld [vmem:[#allocation8 + $0x2c8] sm:$0xff]
    %v236 = vld [vmem:[#allocation8 + $0x2d0] sm:$0xff]
    %v237 = vld [vmem:[#allocation8 + $0x2d8] sm:$0xff]
    %v238 = vld [vmem:[#allocation8 + $0x2e0] sm:$0xff]
    %v239 = vld [vmem:[#allocation8 + $0x2e8] sm:$0xff]
    %v240 = vld [vmem:[#allocation8 + $0x2f0] sm:$0xff]
    %v241 = vld [vmem:[#allocation8 + $0x2f8] sm:$0xff]
    %v242 = vld [vmem:[#allocation8 + $0x300] sm:$0xff]
    %v243 = vld [vmem:[#allocation8 + $0x308] sm:$0xff]
    %v244 = vld [vmem:[#allocation8 + $0x310] sm:$0xff]
    %v245 = vld [vmem:[#allocation8 + $0x318] sm:$0xff]
    %v246 = vld [vmem:[#allocation8 + $0x320] sm:$0xff]
    %v247 = vld [vmem:[#allocation8 + $0x328] sm:$0xff]
    %v248 = vld [vmem:[#allocation8 + $0x330] sm:$0xff]
    %v249 = vld [vmem:[#allocation8 + $0x338] sm:$0xff]
    %v250 = vld [vmem:[#allocation8 + $0x340] sm:$0xff]
    %v251 = vld [vmem:[#allocation8 + $0x348] sm:$0xff]
    %v252 = vld [vmem:[#allocation8 + $0x350] sm:$0xff]
    %v253 = vld [vmem:[#allocation8 + $0x358] sm:$0xff]
    %v254 = vld [vmem:[#allocation8 + $0x360] sm:$0xff]
    %v255 = vld [vmem:[#allocation8 + $0x368] sm:$0xff]
    %v256 = vld [vmem:[#allocation8 + $0x370] sm:$0xff]
    %v257 = vld [vmem:[#allocation8 + $0x378] sm:$0xff]
    %v258 = vld [vmem:[#allocation8 + $0x380] sm:$0xff]
    %v259 = vld [vmem:[#allocation8 + $0x388] sm:$0xff]
    %v260 = vld [vmem:[#allocation8 + $0x390] sm:$0xff]
    %v261 = vld [vmem:[#allocation8 + $0x398] sm:$0xff]
    %v262 = vld [vmem:[#allocation8 + $0x3a0] sm:$0xff]
    %v263 = vld [vmem:[#allocation8 + $0x3a8] sm:$0xff]
    %v264 = vld [vmem:[#allocation8 + $0x3b0] sm:$0xff]
    %v265 = vld [vmem:[#allocation8 + $0x3b8] sm:$0xff]
    %v266 = vld [vmem:[#allocation8 + $0x3c0] sm:$0xff]
    %v267 = vld [vmem:[#allocation8 + $0x3c8] sm:$0xff]
    %v268 = vld [vmem:[#allocation8 + $0x3d0] sm:$0xff]
    %v269 = vld [vmem:[#allocation8 + $0x3d8] sm:$0xff]
    %v270 = vld [vmem:[#allocation8 + $0x3e0] sm:$0xff]
    %v271 = vld [vmem:[#allocation8 + $0x3e8] sm:$0xff]
    %v272 = vld [vmem:[#allocation8 + $0x3f0] sm:$0xff]
    %v273 = vld [vmem:[#allocation8 + $0x3f8] sm:$0xff]
    %v274 = vld [vmem:[%s5] sm:$0xff]
    %v276 = vlaneseq
    %v277 = vshrl.u32 %v276, 7
    %v278 = vsub.s32 0, %v277
    %v279 = vrot.slane %v274, %v278
    %v280 = vlaneseq
    %v281 = vshrl.u32 %v280, 7
    %v282 = vsub.s32 1, %v281
    %v283 = vrot.slane %v274, %v282
    %v284 = vlaneseq
    %v285 = vshrl.u32 %v284, 7
    %v286 = vsub.s32 2, %v285
    %v287 = vrot.slane %v274, %v286
    %v288 = vlaneseq
    %v289 = vshrl.u32 %v288, 7
    %v290 = vsub.s32 3, %v289
    %v291 = vrot.slane %v274, %v290
    %v292 = vlaneseq
    %v293 = vshrl.u32 %v292, 7
    %v294 = vsub.s32 4, %v293
    %v295 = vrot.slane %v274, %v294
    %v296 = vlaneseq
    %v297 = vshrl.u32 %v296, 7
    %v298 = vsub.s32 5, %v297
    %v299 = vrot.slane %v274, %v298
    %v300 = vlaneseq
    %v301 = vshrl.u32 %v300, 7
    %v302 = vsub.s32 6, %v301
    %v303 = vrot.slane %v274, %v302
    %v304 = vlaneseq
    %v305 = vshrl.u32 %v304, 7
    %v306 = vsub.s32 7, %v305
    %v307 = vrot.slane %v274, %v306
    %v316 = vld [vmem:[%s6] sm:$0x1]
    %v318 = vlaneseq
    %v319 = vshrl.u32 %v318, 7
    %v320 = vsub.s32 0, %v319
    %v321 = vrot.slane %v316, %v320
    %s323 = sld [smem:[#allocation2]]
    %v324 = vld [vmem:[%s0] sm:$0xf]
    %v325 = vpack.c.bf16 0.0, 0.0
    %v454 = vunpack.c.l.b16 %v146
    %v455 = vunpack.c.h.b16 %v146
    %v456 = vunpack.c.l.b16 %v147
    %v457 = vunpack.c.h.b16 %v147
    %v458 = vunpack.c.l.b16 %v148
    %v459 = vunpack.c.h.b16 %v148
    %v460 = vunpack.c.l.b16 %v149
    %v461 = vunpack.c.h.b16 %v149
    %v462 = vunpack.c.l.b16 %v150
    %v463 = vunpack.c.h.b16 %v150
    %v464 = vunpack.c.l.b16 %v151
    %v465 = vunpack.c.h.b16 %v151
    %v466 = vunpack.c.l.b16 %v152
    %v467 = vunpack.c.h.b16 %v152
    %v468 = vunpack.c.l.b16 %v153
    %v469 = vunpack.c.h.b16 %v153
    %v470 = vunpack.c.l.b16 %v154
    %v471 = vunpack.c.h.b16 %v154
    %v472 = vunpack.c.l.b16 %v155
    %v473 = vunpack.c.h.b16 %v155
    %v474 = vunpack.c.l.b16 %v156
    %v475 = vunpack.c.h.b16 %v156
    %v476 = vunpack.c.l.b16 %v157
    %v477 = vunpack.c.h.b16 %v157
    %v478 = vunpack.c.l.b16 %v158
    %v479 = vunpack.c.h.b16 %v158
    %v480 = vunpack.c.l.b16 %v159
    %v481 = vunpack.c.h.b16 %v159
    %v482 = vunpack.c.l.b16 %v160
    %v483 = vunpack.c.h.b16 %v160
    %v484 = vunpack.c.l.b16 %v161
    %v485 = vunpack.c.h.b16 %v161
    %v486 = vunpack.c.l.b16 %v162
    %v487 = vunpack.c.h.b16 %v162
    %v488 = vunpack.c.l.b16 %v163
    %v489 = vunpack.c.h.b16 %v163
    %v490 = vunpack.c.l.b16 %v164
    %v491 = vunpack.c.h.b16 %v164
    %v492 = vunpack.c.l.b16 %v165
    %v493 = vunpack.c.h.b16 %v165
    %v494 = vunpack.c.l.b16 %v166
    %v495 = vunpack.c.h.b16 %v166
    %v496 = vunpack.c.l.b16 %v167
    %v497 = vunpack.c.h.b16 %v167
    %v498 = vunpack.c.l.b16 %v168
    %v499 = vunpack.c.h.b16 %v168
    %v500 = vunpack.c.l.b16 %v169
    %v501 = vunpack.c.h.b16 %v169
    %v502 = vunpack.c.l.b16 %v170
    %v503 = vunpack.c.h.b16 %v170
    %v504 = vunpack.c.l.b16 %v171
    %v505 = vunpack.c.h.b16 %v171
    %v506 = vunpack.c.l.b16 %v172
    %v507 = vunpack.c.h.b16 %v172
    %v508 = vunpack.c.l.b16 %v173
    %v509 = vunpack.c.h.b16 %v173
    %v510 = vunpack.c.l.b16 %v174
    %v511 = vunpack.c.h.b16 %v174
    %v512 = vunpack.c.l.b16 %v175
    %v513 = vunpack.c.h.b16 %v175
    %v514 = vunpack.c.l.b16 %v176
    %v515 = vunpack.c.h.b16 %v176
    %v516 = vunpack.c.l.b16 %v177
    %v517 = vunpack.c.h.b16 %v177
    %v518 = vunpack.c.l.b16 %v178
    %v519 = vunpack.c.h.b16 %v178
    %v520 = vunpack.c.l.b16 %v179
    %v521 = vunpack.c.h.b16 %v179
    %v522 = vunpack.c.l.b16 %v180
    %v523 = vunpack.c.h.b16 %v180
    %v524 = vunpack.c.l.b16 %v181
    %v525 = vunpack.c.h.b16 %v181
    %v526 = vunpack.c.l.b16 %v182
    %v527 = vunpack.c.h.b16 %v182
    %v528 = vunpack.c.l.b16 %v183
    %v529 = vunpack.c.h.b16 %v183
    %v530 = vunpack.c.l.b16 %v184
    %v531 = vunpack.c.h.b16 %v184
    %v532 = vunpack.c.l.b16 %v185
    %v533 = vunpack.c.h.b16 %v185
    %v534 = vunpack.c.l.b16 %v186
    %v535 = vunpack.c.h.b16 %v186
    %v536 = vunpack.c.l.b16 %v187
    %v537 = vunpack.c.h.b16 %v187
    %v538 = vunpack.c.l.b16 %v188
    %v539 = vunpack.c.h.b16 %v188
    %v540 = vunpack.c.l.b16 %v189
    %v541 = vunpack.c.h.b16 %v189
    %v542 = vunpack.c.l.b16 %v190
    %v543 = vunpack.c.h.b16 %v190
    %v544 = vunpack.c.l.b16 %v191
    %v545 = vunpack.c.h.b16 %v191
    %v546 = vunpack.c.l.b16 %v192
    %v547 = vunpack.c.h.b16 %v192
    %v548 = vunpack.c.l.b16 %v193
    %v549 = vunpack.c.h.b16 %v193
    %v550 = vunpack.c.l.b16 %v194
    %v551 = vunpack.c.h.b16 %v194
    %v552 = vunpack.c.l.b16 %v195
    %v553 = vunpack.c.h.b16 %v195
    %v554 = vunpack.c.l.b16 %v196
    %v555 = vunpack.c.h.b16 %v196
    %v556 = vunpack.c.l.b16 %v197
    %v557 = vunpack.c.h.b16 %v197
    %v558 = vunpack.c.l.b16 %v198
    %v559 = vunpack.c.h.b16 %v198
    %v560 = vunpack.c.l.b16 %v199
    %v561 = vunpack.c.h.b16 %v199
    %v562 = vunpack.c.l.b16 %v200
    %v563 = vunpack.c.h.b16 %v200
    %v564 = vunpack.c.l.b16 %v201
    %v565 = vunpack.c.h.b16 %v201
    %v566 = vunpack.c.l.b16 %v202
    %v567 = vunpack.c.h.b16 %v202
    %v568 = vunpack.c.l.b16 %v203
    %v569 = vunpack.c.h.b16 %v203
    %v570 = vunpack.c.l.b16 %v204
    %v571 = vunpack.c.h.b16 %v204
    %v572 = vunpack.c.l.b16 %v205
    %v573 = vunpack.c.h.b16 %v205
    %v574 = vunpack.c.l.b16 %v206
    %v575 = vunpack.c.h.b16 %v206
    %v576 = vunpack.c.l.b16 %v207
    %v577 = vunpack.c.h.b16 %v207
    %v578 = vunpack.c.l.b16 %v208
    %v579 = vunpack.c.h.b16 %v208
    %v580 = vunpack.c.l.b16 %v209
    %v581 = vunpack.c.h.b16 %v209
    %v582 = vunpack.c.l.b16 %v210
    %v583 = vunpack.c.h.b16 %v210
    %v584 = vunpack.c.l.b16 %v211
    %v585 = vunpack.c.h.b16 %v211
    %v586 = vunpack.c.l.b16 %v212
    %v587 = vunpack.c.h.b16 %v212
    %v588 = vunpack.c.l.b16 %v213
    %v589 = vunpack.c.h.b16 %v213
    %v590 = vunpack.c.l.b16 %v214
    %v591 = vunpack.c.h.b16 %v214
    %v592 = vunpack.c.l.b16 %v215
    %v593 = vunpack.c.h.b16 %v215
    %v594 = vunpack.c.l.b16 %v216
    %v595 = vunpack.c.h.b16 %v216
    %v596 = vunpack.c.l.b16 %v217
    %v597 = vunpack.c.h.b16 %v217
    %v598 = vunpack.c.l.b16 %v218
    %v599 = vunpack.c.h.b16 %v218
    %v600 = vunpack.c.l.b16 %v219
    %v601 = vunpack.c.h.b16 %v219
    %v602 = vunpack.c.l.b16 %v220
    %v603 = vunpack.c.h.b16 %v220
    %v604 = vunpack.c.l.b16 %v221
    %v605 = vunpack.c.h.b16 %v221
    %v606 = vunpack.c.l.b16 %v222
    %v607 = vunpack.c.h.b16 %v222
    %v608 = vunpack.c.l.b16 %v223
    %v609 = vunpack.c.h.b16 %v223
    %v610 = vunpack.c.l.b16 %v224
    %v611 = vunpack.c.h.b16 %v224
    %v612 = vunpack.c.l.b16 %v225
    %v613 = vunpack.c.h.b16 %v225
    %v614 = vunpack.c.l.b16 %v226
    %v615 = vunpack.c.h.b16 %v226
    %v616 = vunpack.c.l.b16 %v227
    %v617 = vunpack.c.h.b16 %v227
    %v618 = vunpack.c.l.b16 %v228
    %v619 = vunpack.c.h.b16 %v228
    %v620 = vunpack.c.l.b16 %v229
    %v621 = vunpack.c.h.b16 %v229
    %v622 = vunpack.c.l.b16 %v230
    %v623 = vunpack.c.h.b16 %v230
    %v624 = vunpack.c.l.b16 %v231
    %v625 = vunpack.c.h.b16 %v231
    %v626 = vunpack.c.l.b16 %v232
    %v627 = vunpack.c.h.b16 %v232
    %v628 = vunpack.c.l.b16 %v233
    %v629 = vunpack.c.h.b16 %v233
    %v630 = vunpack.c.l.b16 %v234
    %v631 = vunpack.c.h.b16 %v234
    %v632 = vunpack.c.l.b16 %v235
    %v633 = vunpack.c.h.b16 %v235
    %v634 = vunpack.c.l.b16 %v236
    %v635 = vunpack.c.h.b16 %v236
    %v636 = vunpack.c.l.b16 %v237
    %v637 = vunpack.c.h.b16 %v237
    %v638 = vunpack.c.l.b16 %v238
    %v639 = vunpack.c.h.b16 %v238
    %v640 = vunpack.c.l.b16 %v239
    %v641 = vunpack.c.h.b16 %v239
    %v642 = vunpack.c.l.b16 %v240
    %v643 = vunpack.c.h.b16 %v240
    %v644 = vunpack.c.l.b16 %v241
    %v645 = vunpack.c.h.b16 %v241
    %v646 = vunpack.c.l.b16 %v242
    %v647 = vunpack.c.h.b16 %v242
    %v648 = vunpack.c.l.b16 %v243
    %v649 = vunpack.c.h.b16 %v243
    %v650 = vunpack.c.l.b16 %v244
    %v651 = vunpack.c.h.b16 %v244
    %v652 = vunpack.c.l.b16 %v245
    %v653 = vunpack.c.h.b16 %v245
    %v654 = vunpack.c.l.b16 %v246
    %v655 = vunpack.c.h.b16 %v246
    %v656 = vunpack.c.l.b16 %v247
    %v657 = vunpack.c.h.b16 %v247
    %v658 = vunpack.c.l.b16 %v248
    %v659 = vunpack.c.h.b16 %v248
    %v660 = vunpack.c.l.b16 %v249
    %v661 = vunpack.c.h.b16 %v249
    %v662 = vunpack.c.l.b16 %v250
    %v663 = vunpack.c.h.b16 %v250
    %v664 = vunpack.c.l.b16 %v251
    %v665 = vunpack.c.h.b16 %v251
    %v666 = vunpack.c.l.b16 %v252
    %v667 = vunpack.c.h.b16 %v252
    %v668 = vunpack.c.l.b16 %v253
    %v669 = vunpack.c.h.b16 %v253
    %v670 = vunpack.c.l.b16 %v254
    %v671 = vunpack.c.h.b16 %v254
    %v672 = vunpack.c.l.b16 %v255
    %v673 = vunpack.c.h.b16 %v255
    %v674 = vunpack.c.l.b16 %v256
    %v675 = vunpack.c.h.b16 %v256
    %v676 = vunpack.c.l.b16 %v257
    %v677 = vunpack.c.h.b16 %v257
    %v678 = vunpack.c.l.b16 %v258
    %v679 = vunpack.c.h.b16 %v258
    %v680 = vunpack.c.l.b16 %v259
    %v681 = vunpack.c.h.b16 %v259
    %v682 = vunpack.c.l.b16 %v260
    %v683 = vunpack.c.h.b16 %v260
    %v684 = vunpack.c.l.b16 %v261
    %v685 = vunpack.c.h.b16 %v261
    %v686 = vunpack.c.l.b16 %v262
    %v687 = vunpack.c.h.b16 %v262
    %v688 = vunpack.c.l.b16 %v263
    %v689 = vunpack.c.h.b16 %v263
    %v690 = vunpack.c.l.b16 %v264
    %v691 = vunpack.c.h.b16 %v264
    %v692 = vunpack.c.l.b16 %v265
    %v693 = vunpack.c.h.b16 %v265
    %v694 = vunpack.c.l.b16 %v266
    %v695 = vunpack.c.h.b16 %v266
    %v696 = vunpack.c.l.b16 %v267
    %v697 = vunpack.c.h.b16 %v267
    %v698 = vunpack.c.l.b16 %v268
    %v699 = vunpack.c.h.b16 %v268
    %v700 = vunpack.c.l.b16 %v269
    %v701 = vunpack.c.h.b16 %v269
    %v702 = vunpack.c.l.b16 %v270
    %v703 = vunpack.c.h.b16 %v270
    %v704 = vunpack.c.l.b16 %v271
    %v705 = vunpack.c.h.b16 %v271
    %v706 = vunpack.c.l.b16 %v272
    %v707 = vunpack.c.h.b16 %v272
    %v708 = vunpack.c.l.b16 %v273
    %v709 = vunpack.c.h.b16 %v273
    %v710 = vpack.c.b16 %v462, %v454
    %v711 = vpack.c.b16 %v463, %v455
    %v712 = vpack.c.b16 %v464, %v456
    %v713 = vpack.c.b16 %v465, %v457
    %v714 = vpack.c.b16 %v466, %v458
    %v715 = vpack.c.b16 %v467, %v459
    %v716 = vpack.c.b16 %v468, %v460
    %v717 = vpack.c.b16 %v469, %v461
    %v718 = vpack.c.b16 %v478, %v470
    %v719 = vpack.c.b16 %v479, %v471
    %v720 = vpack.c.b16 %v480, %v472
    %v721 = vpack.c.b16 %v481, %v473
    %v722 = vpack.c.b16 %v482, %v474
    %v723 = vpack.c.b16 %v483, %v475
    %v724 = vpack.c.b16 %v484, %v476
    %v725 = vpack.c.b16 %v485, %v477
    %v726 = vpack.c.b16 %v494, %v486
    %v727 = vpack.c.b16 %v495, %v487
    %v728 = vpack.c.b16 %v496, %v488
    %v729 = vpack.c.b16 %v497, %v489
    %v730 = vpack.c.b16 %v498, %v490
    %v731 = vpack.c.b16 %v499, %v491
    %v732 = vpack.c.b16 %v500, %v492
    %v733 = vpack.c.b16 %v501, %v493
    %v734 = vpack.c.b16 %v510, %v502
    %v735 = vpack.c.b16 %v511, %v503
    %v736 = vpack.c.b16 %v512, %v504
    %v737 = vpack.c.b16 %v513, %v505
    %v738 = vpack.c.b16 %v514, %v506
    %v739 = vpack.c.b16 %v515, %v507
    %v740 = vpack.c.b16 %v516, %v508
    %v741 = vpack.c.b16 %v517, %v509
    %v742 = vpack.c.b16 %v526, %v518
    %v743 = vpack.c.b16 %v527, %v519
    %v744 = vpack.c.b16 %v528, %v520
    %v745 = vpack.c.b16 %v529, %v521
    %v746 = vpack.c.b16 %v530, %v522
    %v747 = vpack.c.b16 %v531, %v523
    %v748 = vpack.c.b16 %v532, %v524
    %v749 = vpack.c.b16 %v533, %v525
    %v750 = vpack.c.b16 %v542, %v534
    %v751 = vpack.c.b16 %v543, %v535
    %v752 = vpack.c.b16 %v544, %v536
    %v753 = vpack.c.b16 %v545, %v537
    %v754 = vpack.c.b16 %v546, %v538
    %v755 = vpack.c.b16 %v547, %v539
    %v756 = vpack.c.b16 %v548, %v540
    %v757 = vpack.c.b16 %v549, %v541
    %v758 = vpack.c.b16 %v558, %v550
    %v759 = vpack.c.b16 %v559, %v551
    %v760 = vpack.c.b16 %v560, %v552
    %v761 = vpack.c.b16 %v561, %v553
    %v762 = vpack.c.b16 %v562, %v554
    %v763 = vpack.c.b16 %v563, %v555
    %v764 = vpack.c.b16 %v564, %v556
    %v765 = vpack.c.b16 %v565, %v557
    %v766 = vpack.c.b16 %v574, %v566
    %v767 = vpack.c.b16 %v575, %v567
    %v768 = vpack.c.b16 %v576, %v568
    %v769 = vpack.c.b16 %v577, %v569
    %v770 = vpack.c.b16 %v578, %v570
    %v771 = vpack.c.b16 %v579, %v571
    %v772 = vpack.c.b16 %v580, %v572
    %v773 = vpack.c.b16 %v581, %v573
    %v774 = vpack.c.b16 %v590, %v582
    %v775 = vpack.c.b16 %v591, %v583
    %v776 = vpack.c.b16 %v592, %v584
    %v777 = vpack.c.b16 %v593, %v585
    %v778 = vpack.c.b16 %v594, %v586
    %v779 = vpack.c.b16 %v595, %v587
    %v780 = vpack.c.b16 %v596, %v588
    %v781 = vpack.c.b16 %v597, %v589
    %v782 = vpack.c.b16 %v606, %v598
    %v783 = vpack.c.b16 %v607, %v599
    %v784 = vpack.c.b16 %v608, %v600
    %v785 = vpack.c.b16 %v609, %v601
    %v786 = vpack.c.b16 %v610, %v602
    %v787 = vpack.c.b16 %v611, %v603
    %v788 = vpack.c.b16 %v612, %v604
    %v789 = vpack.c.b16 %v613, %v605
    %v790 = vpack.c.b16 %v622, %v614
    %v791 = vpack.c.b16 %v623, %v615
    %v792 = vpack.c.b16 %v624, %v616
    %v793 = vpack.c.b16 %v625, %v617
    %v794 = vpack.c.b16 %v626, %v618
    %v795 = vpack.c.b16 %v627, %v619
    %v796 = vpack.c.b16 %v628, %v620
    %v797 = vpack.c.b16 %v629, %v621
    %v798 = vpack.c.b16 %v638, %v630
    %v799 = vpack.c.b16 %v639, %v631
    %v800 = vpack.c.b16 %v640, %v632
    %v801 = vpack.c.b16 %v641, %v633
    %v802 = vpack.c.b16 %v642, %v634
    %v803 = vpack.c.b16 %v643, %v635
    %v804 = vpack.c.b16 %v644, %v636
    %v805 = vpack.c.b16 %v645, %v637
    %v806 = vpack.c.b16 %v654, %v646
    %v807 = vpack.c.b16 %v655, %v647
    %v808 = vpack.c.b16 %v656, %v648
    %v809 = vpack.c.b16 %v657, %v649
    %v810 = vpack.c.b16 %v658, %v650
    %v811 = vpack.c.b16 %v659, %v651
    %v812 = vpack.c.b16 %v660, %v652
    %v813 = vpack.c.b16 %v661, %v653
    %v814 = vpack.c.b16 %v670, %v662
    %v815 = vpack.c.b16 %v671, %v663
    %v816 = vpack.c.b16 %v672, %v664
    %v817 = vpack.c.b16 %v673, %v665
    %v818 = vpack.c.b16 %v674, %v666
    %v819 = vpack.c.b16 %v675, %v667
    %v820 = vpack.c.b16 %v676, %v668
    %v821 = vpack.c.b16 %v677, %v669
    %v822 = vpack.c.b16 %v686, %v678
    %v823 = vpack.c.b16 %v687, %v679
    %v824 = vpack.c.b16 %v688, %v680
    %v825 = vpack.c.b16 %v689, %v681
    %v826 = vpack.c.b16 %v690, %v682
    %v827 = vpack.c.b16 %v691, %v683
    %v828 = vpack.c.b16 %v692, %v684
    %v829 = vpack.c.b16 %v693, %v685
    %v830 = vpack.c.b16 %v702, %v694
    %v831 = vpack.c.b16 %v703, %v695
    %v832 = vpack.c.b16 %v704, %v696
    %v833 = vpack.c.b16 %v705, %v697
    %v834 = vpack.c.b16 %v706, %v698
    %v835 = vpack.c.b16 %v707, %v699
    %v836 = vpack.c.b16 %v708, %v700
    %v837 = vpack.c.b16 %v709, %v701
    %966 = vmatprep.subr.bf16.mxu0 %v711
    %967 = vmatpush1.bf16.msra.mxu0 %v710
    %968 = vmatprep.subr.bf16.mxu0 %v719
    %969 = vmatpush1.bf16.msra.mxu0 %v718
    %970 = vmatprep.subr.bf16.mxu0 %v727
    %971 = vmatpush1.bf16.msra.mxu0 %v726
    %972 = vmatprep.subr.bf16.mxu0 %v735
    %973 = vmatpush1.bf16.msra.mxu0 %v734
    %974 = vmatprep.subr.bf16.mxu0 %v743
    %975 = vmatpush1.bf16.msra.mxu0 %v742
    %976 = vmatprep.subr.bf16.mxu0 %v751
    %977 = vmatpush1.bf16.msra.mxu0 %v750
    %978 = vmatprep.subr.bf16.mxu0 %v759
    %979 = vmatpush1.bf16.msra.mxu0 %v758
    %980 = vmatprep.subr.bf16.mxu0 %v767
    %981 = vmatpush1.bf16.msra.mxu0 %v766
    %982 = vmatprep.subr.bf16.mxu0 %v775
    %983 = vmatpush1.bf16.msra.mxu0 %v774
    %984 = vmatprep.subr.bf16.mxu0 %v783
    %985 = vmatpush1.bf16.msra.mxu0 %v782
    %986 = vmatprep.subr.bf16.mxu0 %v791
    %987 = vmatpush1.bf16.msra.mxu0 %v790
    %988 = vmatprep.subr.bf16.mxu0 %v799
    %989 = vmatpush1.bf16.msra.mxu0 %v798
    %990 = vmatprep.subr.bf16.mxu0 %v807
    %991 = vmatpush1.bf16.msra.mxu0 %v806
    %992 = vmatprep.subr.bf16.mxu0 %v815
    %993 = vmatpush1.bf16.msra.mxu0 %v814
    %994 = vmatprep.subr.bf16.mxu0 %v823
    %995 = vmatpush1.bf16.msra.mxu0 %v822
    %996 = vmatprep.subr.bf16.mxu0 %v831
    %997 = vmatpush1.bf16.msra.mxu0 %v830
    %998 = vmatprep.mubr.bf16.mxu0 %v325
    %999 = vmatmul.mubr.bf16.gmra.mrb[0].mxu0 %v325
    %v1000 = vpop.f32.mrb[0].mxu0
    %v1001 = vadd.f32 0.0, %v1000
    %v1002 = vpop.f32.mrb[0].mxu0
    %v1003 = vadd.f32 0.0, %v1002
    %v1004 = vpop.f32.mrb[0].mxu0
    %v1005 = vpop.f32.mrb[0].mxu0
    %1006 = vdwg.mxu0
    %1007 = vmatprep.subr.bf16.mxu0 %v713
    %1008 = vmatpush1.bf16.msra.mxu0 %v712
    %1009 = vmatprep.subr.bf16.mxu0 %v721
    %1010 = vmatpush1.bf16.msra.mxu0 %v720
    %1011 = vmatprep.subr.bf16.mxu0 %v729
    %1012 = vmatpush1.bf16.msra.mxu0 %v728
    %1013 = vmatprep.subr.bf16.mxu0 %v737
    %1014 = vmatpush1.bf16.msra.mxu0 %v736
    %1015 = vmatprep.subr.bf16.mxu0 %v745
    %1016 = vmatpush1.bf16.msra.mxu0 %v744
    %1017 = vmatprep.subr.bf16.mxu0 %v753
    %1018 = vmatpush1.bf16.msra.mxu0 %v752
    %1019 = vmatprep.subr.bf16.mxu0 %v761
    %1020 = vmatpush1.bf16.msra.mxu0 %v760
    %1021 = vmatprep.subr.bf16.mxu0 %v769
    %1022 = vmatpush1.bf16.msra.mxu0 %v768
    %1023 = vmatprep.subr.bf16.mxu0 %v777
    %1024 = vmatpush1.bf16.msra.mxu0 %v776
    %1025 = vmatprep.subr.bf16.mxu0 %v785
    %1026 = vmatpush1.bf16.msra.mxu0 %v784
    %1027 = vmatprep.subr.bf16.mxu0 %v793
    %1028 = vmatpush1.bf16.msra.mxu0 %v792
    %1029 = vmatprep.subr.bf16.mxu0 %v801
    %1030 = vmatpush1.bf16.msra.mxu0 %v800
    %1031 = vmatprep.subr.bf16.mxu0 %v809
    %1032 = vmatpush1.bf16.msra.mxu0 %v808
    %1033 = vmatprep.subr.bf16.mxu0 %v817
    %1034 = vmatpush1.bf16.msra.mxu0 %v816
    %1035 = vmatprep.subr.bf16.mxu0 %v825
    %1036 = vmatpush1.bf16.msra.mxu0 %v824
    %1037 = vmatprep.subr.bf16.mxu0 %v833
    %1038 = vmatpush1.bf16.msra.mxu0 %v832
    %1039 = vmatprep.mubr.bf16.mxu0 %v325
    %1040 = vmatmul.mubr.bf16.gmra.mrb[0].mxu0 %v325
    %v1041 = vpop.f32.mrb[0].mxu0
    %v1042 = vadd.f32 0.0, %v1041
    %v1043 = vpop.f32.mrb[0].mxu0
    %v1044 = vadd.f32 0.0, %v1043
    %v1045 = vpop.f32.mrb[0].mxu0
    %v1046 = vpop.f32.mrb[0].mxu0
    %1047 = vdwg.mxu0
    %1048 = vmatprep.subr.bf16.mxu0 %v715
    %1049 = vmatpush1.bf16.msra.mxu0 %v714
    %1050 = vmatprep.subr.bf16.mxu0 %v723
    %1051 = vmatpush1.bf16.msra.mxu0 %v722
    %1052 = vmatprep.subr.bf16.mxu0 %v731
    %1053 = vmatpush1.bf16.msra.mxu0 %v730
    %1054 = vmatprep.subr.bf16.mxu0 %v739
    %1055 = vmatpush1.bf16.msra.mxu0 %v738
    %1056 = vmatprep.subr.bf16.mxu0 %v747
    %1057 = vmatpush1.bf16.msra.mxu0 %v746
    %1058 = vmatprep.subr.bf16.mxu0 %v755
    %1059 = vmatpush1.bf16.msra.mxu0 %v754
    %1060 = vmatprep.subr.bf16.mxu0 %v763
    %1061 = vmatpush1.bf16.msra.mxu0 %v762
    %1062 = vmatprep.subr.bf16.mxu0 %v771
    %1063 = vmatpush1.bf16.msra.mxu0 %v770
    %1064 = vmatprep.subr.bf16.mxu0 %v779
    %1065 = vmatpush1.bf16.msra.mxu0 %v778
    %1066 = vmatprep.subr.bf16.mxu0 %v787
    %1067 = vmatpush1.bf16.msra.mxu0 %v786
    %1068 = vmatprep.subr.bf16.mxu0 %v795
    %1069 = vmatpush1.bf16.msra.mxu0 %v794
    %1070 = vmatprep.subr.bf16.mxu0 %v803
    %1071 = vmatpush1.bf16.msra.mxu0 %v802
    %1072 = vmatprep.subr.bf16.mxu0 %v811
    %1073 = vmatpush1.bf16.msra.mxu0 %v810
    %1074 = vmatprep.subr.bf16.mxu0 %v819
    %1075 = vmatpush1.bf16.msra.mxu0 %v818
    %1076 = vmatprep.subr.bf16.mxu0 %v827
    %1077 = vmatpush1.bf16.msra.mxu0 %v826
    %1078 = vmatprep.subr.bf16.mxu0 %v835
    %1079 = vmatpush1.bf16.msra.mxu0 %v834
    %1080 = vmatprep.mubr.bf16.mxu0 %v325
    %1081 = vmatmul.mubr.bf16.gmra.mrb[0].mxu0 %v325
    %v1082 = vpop.f32.mrb[0].mxu0
    %v1083 = vadd.f32 0.0, %v1082
    %v1084 = vpop.f32.mrb[0].mxu0
    %v1085 = vadd.f32 0.0, %v1084
    %v1086 = vpop.f32.mrb[0].mxu0
    %v1087 = vpop.f32.mrb[0].mxu0
    %1088 = vdwg.mxu0
    %1089 = vmatprep.subr.bf16.mxu0 %v717
    %1090 = vmatpush1.bf16.msra.mxu0 %v716
    %1091 = vmatprep.subr.bf16.mxu0 %v725
    %1092 = vmatpush1.bf16.msra.mxu0 %v724
    %1093 = vmatprep.subr.bf16.mxu0 %v733
    %1094 = vmatpush1.bf16.msra.mxu0 %v732
    %1095 = vmatprep.subr.bf16.mxu0 %v741
    %1096 = vmatpush1.bf16.msra.mxu0 %v740
    %1097 = vmatprep.subr.bf16.mxu0 %v749
    %1098 = vmatpush1.bf16.msra.mxu0 %v748
    %1099 = vmatprep.subr.bf16.mxu0 %v757
    %1100 = vmatpush1.bf16.msra.mxu0 %v756
    %1101 = vmatprep.subr.bf16.mxu0 %v765
    %1102 = vmatpush1.bf16.msra.mxu0 %v764
    %1103 = vmatprep.subr.bf16.mxu0 %v773
    %1104 = vmatpush1.bf16.msra.mxu0 %v772
    %1105 = vmatprep.subr.bf16.mxu0 %v781
    %1106 = vmatpush1.bf16.msra.mxu0 %v780
    %1107 = vmatprep.subr.bf16.mxu0 %v789
    %1108 = vmatpush1.bf16.msra.mxu0 %v788
    %1109 = vmatprep.subr.bf16.mxu0 %v797
    %1110 = vmatpush1.bf16.msra.mxu0 %v796
    %1111 = vmatprep.subr.bf16.mxu0 %v805
    %1112 = vmatpush1.bf16.msra.mxu0 %v804
    %1113 = vmatprep.subr.bf16.mxu0 %v813
    %1114 = vmatpush1.bf16.msra.mxu0 %v812
    %1115 = vmatprep.subr.bf16.mxu0 %v821
    %1116 = vmatpush1.bf16.msra.mxu0 %v820
    %1117 = vmatprep.subr.bf16.mxu0 %v829
    %1118 = vmatpush1.bf16.msra.mxu0 %v828
    %1119 = vmatprep.subr.bf16.mxu0 %v837
    %1120 = vmatpush1.bf16.msra.mxu0 %v836
    %1121 = vmatprep.mubr.bf16.mxu0 %v325
    %1122 = vmatmul.mubr.bf16.gmra.mrb[0].mxu0 %v325
    %v1123 = vpop.f32.mrb[0].mxu0
    %v1124 = vadd.f32 0.0, %v1123
    %v1125 = vpop.f32.mrb[0].mxu0
    %v1126 = vadd.f32 0.0, %v1125
    %v1127 = vpop.f32.mrb[0].mxu0
    %v1128 = vpop.f32.mrb[0].mxu0
    %1129 = vdwg.mxu0
    %v1194 = vunpack.c.l.b16 %v82
    %v1195 = vunpack.c.h.b16 %v82
    %v1196 = vunpack.c.l.b16 %v83
    %v1197 = vunpack.c.h.b16 %v83
    %v1198 = vunpack.c.l.b16 %v84
    %v1199 = vunpack.c.h.b16 %v84
    %v1200 = vunpack.c.l.b16 %v85
    %v1201 = vunpack.c.h.b16 %v85
    %v1202 = vunpack.c.l.b16 %v86
    %v1203 = vunpack.c.h.b16 %v86
    %v1204 = vunpack.c.l.b16 %v87
    %v1205 = vunpack.c.h.b16 %v87
    %v1206 = vunpack.c.l.b16 %v88
    %v1207 = vunpack.c.h.b16 %v88
    %v1208 = vunpack.c.l.b16 %v89
    %v1209 = vunpack.c.h.b16 %v89
    %v1210 = vunpack.c.l.b16 %v90
    %v1211 = vunpack.c.h.b16 %v90
    %v1212 = vunpack.c.l.b16 %v91
    %v1213 = vunpack.c.h.b16 %v91
    %v1214 = vunpack.c.l.b16 %v92
    %v1215 = vunpack.c.h.b16 %v92
    %v1216 = vunpack.c.l.b16 %v93
    %v1217 = vunpack.c.h.b16 %v93
    %v1218 = vunpack.c.l.b16 %v94
    %v1219 = vunpack.c.h.b16 %v94
    %v1220 = vunpack.c.l.b16 %v95
    %v1221 = vunpack.c.h.b16 %v95
    %v1222 = vunpack.c.l.b16 %v96
    %v1223 = vunpack.c.h.b16 %v96
    %v1224 = vunpack.c.l.b16 %v97
    %v1225 = vunpack.c.h.b16 %v97
    %v1226 = vunpack.c.l.b16 %v98
    %v1227 = vunpack.c.h.b16 %v98
    %v1228 = vunpack.c.l.b16 %v99
    %v1229 = vunpack.c.h.b16 %v99
    %v1230 = vunpack.c.l.b16 %v100
    %v1231 = vunpack.c.h.b16 %v100
    %v1232 = vunpack.c.l.b16 %v101
    %v1233 = vunpack.c.h.b16 %v101
    %v1234 = vunpack.c.l.b16 %v102
    %v1235 = vunpack.c.h.b16 %v102
    %v1236 = vunpack.c.l.b16 %v103
    %v1237 = vunpack.c.h.b16 %v103
    %v1238 = vunpack.c.l.b16 %v104
    %v1239 = vunpack.c.h.b16 %v104
    %v1240 = vunpack.c.l.b16 %v105
    %v1241 = vunpack.c.h.b16 %v105
    %v1242 = vunpack.c.l.b16 %v106
    %v1243 = vunpack.c.h.b16 %v106
    %v1244 = vunpack.c.l.b16 %v107
    %v1245 = vunpack.c.h.b16 %v107
    %v1246 = vunpack.c.l.b16 %v108
    %v1247 = vunpack.c.h.b16 %v108
    %v1248 = vunpack.c.l.b16 %v109
    %v1249 = vunpack.c.h.b16 %v109
    %v1250 = vunpack.c.l.b16 %v110
    %v1251 = vunpack.c.h.b16 %v110
    %v1252 = vunpack.c.l.b16 %v111
    %v1253 = vunpack.c.h.b16 %v111
    %v1254 = vunpack.c.l.b16 %v112
    %v1255 = vunpack.c.h.b16 %v112
    %v1256 = vunpack.c.l.b16 %v113
    %v1257 = vunpack.c.h.b16 %v113
    %v1258 = vunpack.c.l.b16 %v114
    %v1259 = vunpack.c.h.b16 %v114
    %v1260 = vunpack.c.l.b16 %v115
    %v1261 = vunpack.c.h.b16 %v115
    %v1262 = vunpack.c.l.b16 %v116
    %v1263 = vunpack.c.h.b16 %v116
    %v1264 = vunpack.c.l.b16 %v117
    %v1265 = vunpack.c.h.b16 %v117
    %v1266 = vunpack.c.l.b16 %v118
    %v1267 = vunpack.c.h.b16 %v118
    %v1268 = vunpack.c.l.b16 %v119
    %v1269 = vunpack.c.h.b16 %v119
    %v1270 = vunpack.c.l.b16 %v120
    %v1271 = vunpack.c.h.b16 %v120
    %v1272 = vunpack.c.l.b16 %v121
    %v1273 = vunpack.c.h.b16 %v121
    %v1274 = vunpack.c.l.b16 %v122
    %v1275 = vunpack.c.h.b16 %v122
    %v1276 = vunpack.c.l.b16 %v123
    %v1277 = vunpack.c.h.b16 %v123
    %v1278 = vunpack.c.l.b16 %v124
    %v1279 = vunpack.c.h.b16 %v124
    %v1280 = vunpack.c.l.b16 %v125
    %v1281 = vunpack.c.h.b16 %v125
    %v1282 = vunpack.c.l.b16 %v126
    %v1283 = vunpack.c.h.b16 %v126
    %v1284 = vunpack.c.l.b16 %v127
    %v1285 = vunpack.c.h.b16 %v127
    %v1286 = vunpack.c.l.b16 %v128
    %v1287 = vunpack.c.h.b16 %v128
    %v1288 = vunpack.c.l.b16 %v129
    %v1289 = vunpack.c.h.b16 %v129
    %v1290 = vunpack.c.l.b16 %v130
    %v1291 = vunpack.c.h.b16 %v130
    %v1292 = vunpack.c.l.b16 %v131
    %v1293 = vunpack.c.h.b16 %v131
    %v1294 = vunpack.c.l.b16 %v132
    %v1295 = vunpack.c.h.b16 %v132
    %v1296 = vunpack.c.l.b16 %v133
    %v1297 = vunpack.c.h.b16 %v133
    %v1298 = vunpack.c.l.b16 %v134
    %v1299 = vunpack.c.h.b16 %v134
    %v1300 = vunpack.c.l.b16 %v135
    %v1301 = vunpack.c.h.b16 %v135
    %v1302 = vunpack.c.l.b16 %v136
    %v1303 = vunpack.c.h.b16 %v136
    %v1304 = vunpack.c.l.b16 %v137
    %v1305 = vunpack.c.h.b16 %v137
    %v1306 = vunpack.c.l.b16 %v138
    %v1307 = vunpack.c.h.b16 %v138
    %v1308 = vunpack.c.l.b16 %v139
    %v1309 = vunpack.c.h.b16 %v139
    %v1310 = vunpack.c.l.b16 %v140
    %v1311 = vunpack.c.h.b16 %v140
    %v1312 = vunpack.c.l.b16 %v141
    %v1313 = vunpack.c.h.b16 %v141
    %v1314 = vunpack.c.l.b16 %v142
    %v1315 = vunpack.c.h.b16 %v142
    %v1316 = vunpack.c.l.b16 %v143
    %v1317 = vunpack.c.h.b16 %v143
    %v1318 = vunpack.c.l.b16 %v144
    %v1319 = vunpack.c.h.b16 %v144
    %v1320 = vunpack.c.l.b16 %v145
    %v1321 = vunpack.c.h.b16 %v145
    %v1322 = vpack.c.b16 %v1202, %v1194
    %v1323 = vpack.c.b16 %v1203, %v1195
    %v1324 = vpack.c.b16 %v1204, %v1196
    %v1325 = vpack.c.b16 %v1205, %v1197
    %v1326 = vpack.c.b16 %v1206, %v1198
    %v1327 = vpack.c.b16 %v1207, %v1199
    %v1328 = vpack.c.b16 %v1208, %v1200
    %v1329 = vpack.c.b16 %v1209, %v1201
    %v1330 = vpack.c.b16 %v1218, %v1210
    %v1331 = vpack.c.b16 %v1219, %v1211
    %v1332 = vpack.c.b16 %v1220, %v1212
    %v1333 = vpack.c.b16 %v1221, %v1213
    %v1334 = vpack.c.b16 %v1222, %v1214
    %v1335 = vpack.c.b16 %v1223, %v1215
    %v1336 = vpack.c.b16 %v1224, %v1216
    %v1337 = vpack.c.b16 %v1225, %v1217
    %v1338 = vpack.c.b16 %v1234, %v1226
    %v1339 = vpack.c.b16 %v1235, %v1227
    %v1340 = vpack.c.b16 %v1236, %v1228
    %v1341 = vpack.c.b16 %v1237, %v1229
    %v1342 = vpack.c.b16 %v1238, %v1230
    %v1343 = vpack.c.b16 %v1239, %v1231
    %v1344 = vpack.c.b16 %v1240, %v1232
    %v1345 = vpack.c.b16 %v1241, %v1233
    %v1346 = vpack.c.b16 %v1250, %v1242
    %v1347 = vpack.c.b16 %v1251, %v1243
    %v1348 = vpack.c.b16 %v1252, %v1244
    %v1349 = vpack.c.b16 %v1253, %v1245
    %v1350 = vpack.c.b16 %v1254, %v1246
    %v1351 = vpack.c.b16 %v1255, %v1247
    %v1352 = vpack.c.b16 %v1256, %v1248
    %v1353 = vpack.c.b16 %v1257, %v1249
    %v1354 = vpack.c.b16 %v1266, %v1258
    %v1355 = vpack.c.b16 %v1267, %v1259
    %v1356 = vpack.c.b16 %v1268, %v1260
    %v1357 = vpack.c.b16 %v1269, %v1261
    %v1358 = vpack.c.b16 %v1270, %v1262
    %v1359 = vpack.c.b16 %v1271, %v1263
    %v1360 = vpack.c.b16 %v1272, %v1264
    %v1361 = vpack.c.b16 %v1273, %v1265
    %v1362 = vpack.c.b16 %v1282, %v1274
    %v1363 = vpack.c.b16 %v1283, %v1275
    %v1364 = vpack.c.b16 %v1284, %v1276
    %v1365 = vpack.c.b16 %v1285, %v1277
    %v1366 = vpack.c.b16 %v1286, %v1278
    %v1367 = vpack.c.b16 %v1287, %v1279
    %v1368 = vpack.c.b16 %v1288, %v1280
    %v1369 = vpack.c.b16 %v1289, %v1281
    %v1370 = vpack.c.b16 %v1298, %v1290
    %v1371 = vpack.c.b16 %v1299, %v1291
    %v1372 = vpack.c.b16 %v1300, %v1292
    %v1373 = vpack.c.b16 %v1301, %v1293
    %v1374 = vpack.c.b16 %v1302, %v1294
    %v1375 = vpack.c.b16 %v1303, %v1295
    %v1376 = vpack.c.b16 %v1304, %v1296
    %v1377 = vpack.c.b16 %v1305, %v1297
    %v1378 = vpack.c.b16 %v1314, %v1306
    %v1379 = vpack.c.b16 %v1315, %v1307
    %v1380 = vpack.c.b16 %v1316, %v1308
    %v1381 = vpack.c.b16 %v1317, %v1309
    %v1382 = vpack.c.b16 %v1318, %v1310
    %v1383 = vpack.c.b16 %v1319, %v1311
    %v1384 = vpack.c.b16 %v1320, %v1312
    %v1385 = vpack.c.b16 %v1321, %v1313
    %1450 = vmatprep.subr.bf16.mxu0 %v1323
    %1451 = vmatpush1.bf16.msra.mxu0 %v1322
    %1452 = vmatprep.subr.bf16.mxu0 %v1331
    %1453 = vmatpush1.bf16.msra.mxu0 %v1330
    %1454 = vmatprep.subr.bf16.mxu0 %v1339
    %1455 = vmatpush1.bf16.msra.mxu0 %v1338
    %1456 = vmatprep.subr.bf16.mxu0 %v1347
    %1457 = vmatpush1.bf16.msra.mxu0 %v1346
    %1458 = vmatprep.subr.bf16.mxu0 %v1355
    %1459 = vmatpush1.bf16.msra.mxu0 %v1354
    %1460 = vmatprep.subr.bf16.mxu0 %v1363
    %1461 = vmatpush1.bf16.msra.mxu0 %v1362
    %1462 = vmatprep.subr.bf16.mxu0 %v1371
    %1463 = vmatpush1.bf16.msra.mxu0 %v1370
    %1464 = vmatprep.subr.bf16.mxu0 %v1379
    %1465 = vmatpush1.bf16.msra.mxu0 %v1378
    %1466 = vmatprep.subr.bf16.mxu0 0
    %1467 = vmatpush1.bf16.msra.mxu0 0
    %1468 = vmatprep.subr.bf16.mxu0 0
    %1469 = vmatpush1.bf16.msra.mxu0 0
    %1470 = vmatprep.subr.bf16.mxu0 0
    %1471 = vmatpush1.bf16.msra.mxu0 0
    %1472 = vmatprep.subr.bf16.mxu0 0
    %1473 = vmatpush1.bf16.msra.mxu0 0
    %1474 = vmatprep.subr.bf16.mxu0 0
    %1475 = vmatpush1.bf16.msra.mxu0 0
    %1476 = vmatprep.subr.bf16.mxu0 0
    %1477 = vmatpush1.bf16.msra.mxu0 0
    %1478 = vmatprep.subr.bf16.mxu0 0
    %1479 = vmatpush1.bf16.msra.mxu0 0
    %1480 = vmatprep.subr.bf16.mxu0 0
    %1481 = vmatpush1.bf16.msra.mxu0 0
    %1482 = vmatprep.mubr.bf16.mxu0 0
    %1483 = vmatmul.mubr.bf16.gmra.mrb[0].mxu0 %v324
    %v1484 = vpop.f32.mrb[0].mxu0
    %v1485 = vadd.f32 %v1001, %v1484
    %v1486 = vpop.f32.mrb[0].mxu0
    %v1487 = vadd.f32 %v1003, %v1486
    %v1488 = vpop.f32.mrb[0].mxu0
    %v1489 = vpop.f32.mrb[0].mxu0
    %1490 = vdwg.mxu0
    %1491 = vmatprep.subr.bf16.mxu0 %v1325
    %1492 = vmatpush1.bf16.msra.mxu0 %v1324
    %1493 = vmatprep.subr.bf16.mxu0 %v1333
    %1494 = vmatpush1.bf16.msra.mxu0 %v1332
    %1495 = vmatprep.subr.bf16.mxu0 %v1341
    %1496 = vmatpush1.bf16.msra.mxu0 %v1340
    %1497 = vmatprep.subr.bf16.mxu0 %v1349
    %1498 = vmatpush1.bf16.msra.mxu0 %v1348
    %1499 = vmatprep.subr.bf16.mxu0 %v1357
    %1500 = vmatpush1.bf16.msra.mxu0 %v1356
    %1501 = vmatprep.subr.bf16.mxu0 %v1365
    %1502 = vmatpush1.bf16.msra.mxu0 %v1364
    %1503 = vmatprep.subr.bf16.mxu0 %v1373
    %1504 = vmatpush1.bf16.msra.mxu0 %v1372
    %1505 = vmatprep.subr.bf16.mxu0 %v1381
    %1506 = vmatpush1.bf16.msra.mxu0 %v1380
    %1507 = vmatprep.subr.bf16.mxu0 0
    %1508 = vmatpush1.bf16.msra.mxu0 0
    %1509 = vmatprep.subr.bf16.mxu0 0
    %1510 = vmatpush1.bf16.msra.mxu0 0
    %1511 = vmatprep.subr.bf16.mxu0 0
    %1512 = vmatpush1.bf16.msra.mxu0 0
    %1513 = vmatprep.subr.bf16.mxu0 0
    %1514 = vmatpush1.bf16.msra.mxu0 0
    %1515 = vmatprep.subr.bf16.mxu0 0
    %1516 = vmatpush1.bf16.msra.mxu0 0
    %1517 = vmatprep.subr.bf16.mxu0 0
    %1518 = vmatpush1.bf16.msra.mxu0 0
    %1519 = vmatprep.subr.bf16.mxu0 0
    %1520 = vmatpush1.bf16.msra.mxu0 0
    %1521 = vmatprep.subr.bf16.mxu0 0
    %1522 = vmatpush1.bf16.msra.mxu0 0
    %1523 = vmatprep.mubr.bf16.mxu0 0
    %1524 = vmatmul.mubr.bf16.gmra.mrb[0].mxu0 %v324
    %v1525 = vpop.f32.mrb[0].mxu0
    %v1526 = vadd.f32 %v1042, %v1525
    %v1527 = vpop.f32.mrb[0].mxu0
    %v1528 = vadd.f32 %v1044, %v1527
    %v1529 = vpop.f32.mrb[0].mxu0
    %v1530 = vpop.f32.mrb[0].mxu0
    %1531 = vdwg.mxu0
    %1532 = vmatprep.subr.bf16.mxu0 %v1327
    %1533 = vmatpush1.bf16.msra.mxu0 %v1326
    %1534 = vmatprep.subr.bf16.mxu0 %v1335
    %1535 = vmatpush1.bf16.msra.mxu0 %v1334
    %1536 = vmatprep.subr.bf16.mxu0 %v1343
    %1537 = vmatpush1.bf16.msra.mxu0 %v1342
    %1538 = vmatprep.subr.bf16.mxu0 %v1351
    %1539 = vmatpush1.bf16.msra.mxu0 %v1350
    %1540 = vmatprep.subr.bf16.mxu0 %v1359
    %1541 = vmatpush1.bf16.msra.mxu0 %v1358
    %1542 = vmatprep.subr.bf16.mxu0 %v1367
    %1543 = vmatpush1.bf16.msra.mxu0 %v1366
    %1544 = vmatprep.subr.bf16.mxu0 %v1375
    %1545 = vmatpush1.bf16.msra.mxu0 %v1374
    %1546 = vmatprep.subr.bf16.mxu0 %v1383
    %1547 = vmatpush1.bf16.msra.mxu0 %v1382
    %1548 = vmatprep.subr.bf16.mxu0 0
    %1549 = vmatpush1.bf16.msra.mxu0 0
    %1550 = vmatprep.subr.bf16.mxu0 0
    %1551 = vmatpush1.bf16.msra.mxu0 0
    %1552 = vmatprep.subr.bf16.mxu0 0
    %1553 = vmatpush1.bf16.msra.mxu0 0
    %1554 = vmatprep.subr.bf16.mxu0 0
    %1555 = vmatpush1.bf16.msra.mxu0 0
    %1556 = vmatprep.subr.bf16.mxu0 0
    %1557 = vmatpush1.bf16.msra.mxu0 0
    %1558 = vmatprep.subr.bf16.mxu0 0
    %1559 = vmatpush1.bf16.msra.mxu0 0
    %1560 = vmatprep.subr.bf16.mxu0 0
    %1561 = vmatpush1.bf16.msra.mxu0 0
    %1562 = vmatprep.subr.bf16.mxu0 0
    %1563 = vmatpush1.bf16.msra.mxu0 0
    %1564 = vmatprep.mubr.bf16.mxu0 0
    %1565 = vmatmul.mubr.bf16.gmra.mrb[0].mxu0 %v324
    %v1566 = vpop.f32.mrb[0].mxu0
    %v1567 = vadd.f32 %v1083, %v1566
    %v1568 = vpop.f32.mrb[0].mxu0
    %v1569 = vadd.f32 %v1085, %v1568
    %v1570 = vpop.f32.mrb[0].mxu0
    %v1571 = vpop.f32.mrb[0].mxu0
    %1572 = vdwg.mxu0
    %1573 = vmatprep.subr.bf16.mxu0 %v1329
    %1574 = vmatpush1.bf16.msra.mxu0 %v1328
    %1575 = vmatprep.subr.bf16.mxu0 %v1337
    %1576 = vmatpush1.bf16.msra.mxu0 %v1336
    %1577 = vmatprep.subr.bf16.mxu0 %v1345
    %1578 = vmatpush1.bf16.msra.mxu0 %v1344
    %1579 = vmatprep.subr.bf16.mxu0 %v1353
    %1580 = vmatpush1.bf16.msra.mxu0 %v1352
    %1581 = vmatprep.subr.bf16.mxu0 %v1361
    %1582 = vmatpush1.bf16.msra.mxu0 %v1360
    %1583 = vmatprep.subr.bf16.mxu0 %v1369
    %1584 = vmatpush1.bf16.msra.mxu0 %v1368
    %1585 = vmatprep.subr.bf16.mxu0 %v1377
    %1586 = vmatpush1.bf16.msra.mxu0 %v1376
    %1587 = vmatprep.subr.bf16.mxu0 %v1385
    %1588 = vmatpush1.bf16.msra.mxu0 %v1384
    %1589 = vmatprep.subr.bf16.mxu0 0
    %1590 = vmatpush1.bf16.msra.mxu0 0
    %1591 = vmatprep.subr.bf16.mxu0 0
    %1592 = vmatpush1.bf16.msra.mxu0 0
    %1593 = vmatprep.subr.bf16.mxu0 0
    %1594 = vmatpush1.bf16.msra.mxu0 0
    %1595 = vmatprep.subr.bf16.mxu0 0
    %1596 = vmatpush1.bf16.msra.mxu0 0
    %1597 = vmatprep.subr.bf16.mxu0 0
    %1598 = vmatpush1.bf16.msra.mxu0 0
    %1599 = vmatprep.subr.bf16.mxu0 0
    %1600 = vmatpush1.bf16.msra.mxu0 0
    %1601 = vmatprep.subr.bf16.mxu0 0
    %1602 = vmatpush1.bf16.msra.mxu0 0
    %1603 = vmatprep.subr.bf16.mxu0 0
    %1604 = vmatpush1.bf16.msra.mxu0 0
    %1605 = vmatprep.mubr.bf16.mxu0 0
    %1606 = vmatmul.mubr.bf16.gmra.mrb[0].mxu0 %v324
    %v1607 = vpop.f32.mrb[0].mxu0
    %v1608 = vadd.f32 %v1124, %v1607
    %v1609 = vpop.f32.mrb[0].mxu0
    %v1610 = vadd.f32 %v1126, %v1609
    %v1611 = vpop.f32.mrb[0].mxu0
    %v1612 = vpop.f32.mrb[0].mxu0
    %1613 = vdwg.mxu0
    %v1614 = vadd.f32 %v1485, %v279
    %v1615 = vadd.f32 %v1487, %v283
    %v1616 = vadd.f32 %v1526, %v287
    %v1617 = vadd.f32 %v1528, %v291
    %v1618 = vadd.f32 %v1567, %v295
    %v1619 = vadd.f32 %v1569, %v299
    %v1620 = vadd.f32 %v1608, %v303
    %v1621 = vadd.f32 %v1610, %v307
    %v1622 = vxor.u32 %v1614, 2147483648
    %v1623 = vmul.f32 %v1622, 1.442695
    %v1624 = vpow.pop %v1623
    %v1625 = vadd.f32 %v1624, 1.0
    %v1626 = vrcp.pop %v1625
    %v1627 = vmul.f32 1.0, %v1626
    %v1628 = vxor.u32 %v1615, 2147483648
    %v1629 = vmul.f32 %v1628, 1.442695
    %v1630 = vpow.pop %v1629
    %v1631 = vadd.f32 %v1630, 1.0
    %v1632 = vrcp.pop %v1631
    %v1633 = vmul.f32 1.0, %v1632
    %v1634 = vxor.u32 %v1616, 2147483648
    %v1635 = vmul.f32 %v1634, 1.442695
    %v1636 = vpow.pop %v1635
    %v1637 = vadd.f32 %v1636, 1.0
    %v1638 = vrcp.pop %v1637
    %v1639 = vmul.f32 1.0, %v1638
    %v1640 = vtanh.pop %v1617
    %v1641 = vxor.u32 %v1618, 2147483648
    %v1642 = vmul.f32 %v1641, 1.442695
    %v1643 = vpow.pop %v1642
    %v1644 = vadd.f32 %v1643, 1.0
    %v1645 = vrcp.pop %v1644
    %v1646 = vmul.f32 1.0, %v1645
    %v1647 = vxor.u32 %v1619, 2147483648
    %v1648 = vmul.f32 %v1647, 1.442695
    %v1649 = vpow.pop %v1648
    %v1650 = vadd.f32 %v1649, 1.0
    %v1651 = vrcp.pop %v1650
    %v1652 = vmul.f32 1.0, %v1651
    %v1653 = vxor.u32 %v1620, 2147483648
    %v1654 = vmul.f32 %v1653, 1.442695
    %v1655 = vpow.pop %v1654
    %v1656 = vadd.f32 %v1655, 1.0
    %v1657 = vrcp.pop %v1656
    %v1658 = vmul.f32 1.0, %v1657
    %v1659 = vtanh.pop %v1621
    %v1660 = vmul.f32 %v321, 0.0
    %v1661 = vmul.f32 %v1627, %v1660
    %v1662 = vmul.f32 %v1633, %v1640
    %v1663 = vadd.f32 %v1661, %v1662
    %v1664 = vtanh.pop %v1663
    %v1665 = vmul.f32 %v1639, %v1664
    %v1666 = vmul.f32 %v1646, 0.0
    %v1667 = vmul.f32 %v1652, %v1659
    %v1668 = vadd.f32 %v1666, %v1667
    %v1669 = vtanh.pop %v1668
    %v1670 = vmul.f32 %v1658, %v1669
    %s1671 = scalar_lea.vmem %s0, 4
    %v1672 = vld [vmem:[%s1671] sm:$0xf]
    %v1673 = vpack.c.bf16 %v1665, %v1665
    %v1674 = vpack.c.bf16 %v1670, %v1670
    %1675 = vmatprep.subr.bf16.mxu0 %v711
    %1676 = vmatpush1.bf16.msra.mxu0 %v710
    %1677 = vmatprep.subr.bf16.mxu0 %v719
    %1678 = vmatpush1.bf16.msra.mxu0 %v718
    %1679 = vmatprep.subr.bf16.mxu0 %v727
    %1680 = vmatpush1.bf16.msra.mxu0 %v726
    %1681 = vmatprep.subr.bf16.mxu0 %v735
    %1682 = vmatpush1.bf16.msra.mxu0 %v734
    %1683 = vmatprep.subr.bf16.mxu0 %v743
    %1684 = vmatpush1.bf16.msra.mxu0 %v742
    %1685 = vmatprep.subr.bf16.mxu0 %v751
    %1686 = vmatpush1.bf16.msra.mxu0 %v750
    %1687 = vmatprep.subr.bf16.mxu0 %v759
    %1688 = vmatpush1.bf16.msra.mxu0 %v758
    %1689 = vmatprep.subr.bf16.mxu0 %v767
    %1690 = vmatpush1.bf16.msra.mxu0 %v766
    %1691 = vmatprep.subr.bf16.mxu0 %v775
    %1692 = vmatpush1.bf16.msra.mxu0 %v774
    %1693 = vmatprep.subr.bf16.mxu0 %v783
    %1694 = vmatpush1.bf16.msra.mxu0 %v782
    %1695 = vmatprep.subr.bf16.mxu0 %v791
    %1696 = vmatpush1.bf16.msra.mxu0 %v790
    %1697 = vmatprep.subr.bf16.mxu0 %v799
    %1698 = vmatpush1.bf16.msra.mxu0 %v798
    %1699 = vmatprep.subr.bf16.mxu0 %v807
    %1700 = vmatpush1.bf16.msra.mxu0 %v806
    %1701 = vmatprep.subr.bf16.mxu0 %v815
    %1702 = vmatpush1.bf16.msra.mxu0 %v814
    %1703 = vmatprep.subr.bf16.mxu0 %v823
    %1704 = vmatpush1.bf16.msra.mxu0 %v822
    %1705 = vmatprep.subr.bf16.mxu0 %v831
    %1706 = vmatpush1.bf16.msra.mxu0 %v830
    %1707 = vmatprep.mubr.bf16.mxu0 %v1674
    %1708 = vmatmul.mubr.bf16.gmra.mrb[0].mxu0 %v1673
    %v1709 = vpop.f32.mrb[0].mxu0
    %v1710 = vadd.f32 0.0, %v1709
    %v1711 = vpop.f32.mrb[0].mxu0
    %v1712 = vadd.f32 0.0, %v1711
    %v1713 = vpop.f32.mrb[0].mxu0
    %v1714 = vpop.f32.mrb[0].mxu0
    %1715 = vdwg.mxu0
    %1716 = vmatprep.subr.bf16.mxu0 %v713
    %1717 = vmatpush1.bf16.msra.mxu0 %v712
    %1718 = vmatprep.subr.bf16.mxu0 %v721
    %1719 = vmatpush1.bf16.msra.mxu0 %v720
    %1720 = vmatprep.subr.bf16.mxu0 %v729
    %1721 = vmatpush1.bf16.msra.mxu0 %v728
    %1722 = vmatprep.subr.bf16.mxu0 %v737
    %1723 = vmatpush1.bf16.msra.mxu0 %v736
    %1724 = vmatprep.subr.bf16.mxu0 %v745
    %1725 = vmatpush1.bf16.msra.mxu0 %v744
    %1726 = vmatprep.subr.bf16.mxu0 %v753
    %1727 = vmatpush1.bf16.msra.mxu0 %v752
    %1728 = vmatprep.subr.bf16.mxu0 %v761
    %1729 = vmatpush1.bf16.msra.mxu0 %v760
    %1730 = vmatprep.subr.bf16.mxu0 %v769
    %1731 = vmatpush1.bf16.msra.mxu0 %v768
    %1732 = vmatprep.subr.bf16.mxu0 %v777
    %1733 = vmatpush1.bf16.msra.mxu0 %v776
    %1734 = vmatprep.subr.bf16.mxu0 %v785
    %1735 = vmatpush1.bf16.msra.mxu0 %v784
    %1736 = vmatprep.subr.bf16.mxu0 %v793
    %1737 = vmatpush1.bf16.msra.mxu0 %v792
    %1738 = vmatprep.subr.bf16.mxu0 %v801
    %1739 = vmatpush1.bf16.msra.mxu0 %v800
    %1740 = vmatprep.subr.bf16.mxu0 %v809
    %1741 = vmatpush1.bf16.msra.mxu0 %v808
    %1742 = vmatprep.subr.bf16.mxu0 %v817
    %1743 = vmatpush1.bf16.msra.mxu0 %v816
    %1744 = vmatprep.subr.bf16.mxu0 %v825
    %1745 = vmatpush1.bf16.msra.mxu0 %v824
    %1746 = vmatprep.subr.bf16.mxu0 %v833
    %1747 = vmatpush1.bf16.msra.mxu0 %v832
    %1748 = vmatprep.mubr.bf16.mxu0 %v1674
    %1749 = vmatmul.mubr.bf16.gmra.mrb[0].mxu0 %v1673
    %v1750 = vpop.f32.mrb[0].mxu0
    %v1751 = vadd.f32 0.0, %v1750
    %v1752 = vpop.f32.mrb[0].mxu0
    %v1753 = vadd.f32 0.0, %v1752
    %v1754 = vpop.f32.mrb[0].mxu0
    %v1755 = vpop.f32.mrb[0].mxu0
    %1756 = vdwg.mxu0
    %1757 = vmatprep.subr.bf16.mxu0 %v715
    %1758 = vmatpush1.bf16.msra.mxu0 %v714
    %1759 = vmatprep.subr.bf16.mxu0 %v723
    %1760 = vmatpush1.bf16.msra.mxu0 %v722
    %1761 = vmatprep.subr.bf16.mxu0 %v731
    %1762 = vmatpush1.bf16.msra.mxu0 %v730
    %1763 = vmatprep.subr.bf16.mxu0 %v739
    %1764 = vmatpush1.bf16.msra.mxu0 %v738
    %1765 = vmatprep.subr.bf16.mxu0 %v747
    %1766 = vmatpush1.bf16.msra.mxu0 %v746
    %1767 = vmatprep.subr.bf16.mxu0 %v755
    %1768 = vmatpush1.bf16.msra.mxu0 %v754
    %1769 = vmatprep.subr.bf16.mxu0 %v763
    %1770 = vmatpush1.bf16.msra.mxu0 %v762
    %1771 = vmatprep.subr.bf16.mxu0 %v771
    %1772 = vmatpush1.bf16.msra.mxu0 %v770
    %1773 = vmatprep.subr.bf16.mxu0 %v779
    %1774 = vmatpush1.bf16.msra.mxu0 %v778
    %1775 = vmatprep.subr.bf16.mxu0 %v787
    %1776 = vmatpush1.bf16.msra.mxu0 %v786
    %1777 = vmatprep.subr.bf16.mxu0 %v795
    %1778 = vmatpush1.bf16.msra.mxu0 %v794
    %1779 = vmatprep.subr.bf16.mxu0 %v803
    %1780 = vmatpush1.bf16.msra.mxu0 %v802
    %1781 = vmatprep.subr.bf16.mxu0 %v811
    %1782 = vmatpush1.bf16.msra.mxu0 %v810
    %1783 = vmatprep.subr.bf16.mxu0 %v819
    %1784 = vmatpush1.bf16.msra.mxu0 %v818
    %1785 = vmatprep.subr.bf16.mxu0 %v827
    %1786 = vmatpush1.bf16.msra.mxu0 %v826
    %1787 = vmatprep.subr.bf16.mxu0 %v835
    %1788 = vmatpush1.bf16.msra.mxu0 %v834
    %1789 = vmatprep.mubr.bf16.mxu0 %v1674
    %1790 = vmatmul.mubr.bf16.gmra.mrb[0].mxu0 %v1673
    %v1791 = vpop.f32.mrb[0].mxu0
    %v1792 = vadd.f32 0.0, %v1791
    %v1793 = vpop.f32.mrb[0].mxu0
    %v1794 = vadd.f32 0.0, %v1793
    %v1795 = vpop.f32.mrb[0].mxu0
    %v1796 = vpop.f32.mrb[0].mxu0
    %1797 = vdwg.mxu0
    %1798 = vmatprep.subr.bf16.mxu0 %v717
    %1799 = vmatpush1.bf16.msra.mxu0 %v716
    %1800 = vmatprep.subr.bf16.mxu0 %v725
    %1801 = vmatpush1.bf16.msra.mxu0 %v724
    %1802 = vmatprep.subr.bf16.mxu0 %v733
    %1803 = vmatpush1.bf16.msra.mxu0 %v732
    %1804 = vmatprep.subr.bf16.mxu0 %v741
    %1805 = vmatpush1.bf16.msra.mxu0 %v740
    %1806 = vmatprep.subr.bf16.mxu0 %v749
    %1807 = vmatpush1.bf16.msra.mxu0 %v748
    %1808 = vmatprep.subr.bf16.mxu0 %v757
    %1809 = vmatpush1.bf16.msra.mxu0 %v756
    %1810 = vmatprep.subr.bf16.mxu0 %v765
    %1811 = vmatpush1.bf16.msra.mxu0 %v764
    %1812 = vmatprep.subr.bf16.mxu0 %v773
    %1813 = vmatpush1.bf16.msra.mxu0 %v772
    %1814 = vmatprep.subr.bf16.mxu0 %v781
    %1815 = vmatpush1.bf16.msra.mxu0 %v780
    %1816 = vmatprep.subr.bf16.mxu0 %v789
    %1817 = vmatpush1.bf16.msra.mxu0 %v788
    %1818 = vmatprep.subr.bf16.mxu0 %v797
    %1819 = vmatpush1.bf16.msra.mxu0 %v796
    %1820 = vmatprep.subr.bf16.mxu0 %v805
    %1821 = vmatpush1.bf16.msra.mxu0 %v804
    %1822 = vmatprep.subr.bf16.mxu0 %v813
    %1823 = vmatpush1.bf16.msra.mxu0 %v812
    %1824 = vmatprep.subr.bf16.mxu0 %v821
    %1825 = vmatpush1.bf16.msra.mxu0 %v820
    %1826 = vmatprep.subr.bf16.mxu0 %v829
    %1827 = vmatpush1.bf16.msra.mxu0 %v828
    %1828 = vmatprep.subr.bf16.mxu0 %v837
    %1829 = vmatpush1.bf16.msra.mxu0 %v836
    %1830 = vmatprep.mubr.bf16.mxu0 %v1674
    %1831 = vmatmul.mubr.bf16.gmra.mrb[0].mxu0 %v1673
    %v1832 = vpop.f32.mrb[0].mxu0
    %v1833 = vadd.f32 0.0, %v1832
    %v1834 = vpop.f32.mrb[0].mxu0
    %v1835 = vadd.f32 0.0, %v1834
    %v1836 = vpop.f32.mrb[0].mxu0
    %v1837 = vpop.f32.mrb[0].mxu0
    %1838 = vdwg.mxu0
    %1839 = vmatprep.subr.bf16.mxu0 %v1323
    %1840 = vmatpush1.bf16.msra.mxu0 %v1322
    %1841 = vmatprep.subr.bf16.mxu0 %v1331
    %1842 = vmatpush1.bf16.msra.mxu0 %v1330
    %1843 = vmatprep.subr.bf16.mxu0 %v1339
    %1844 = vmatpush1.bf16.msra.mxu0 %v1338
    %1845 = vmatprep.subr.bf16.mxu0 %v1347
    %1846 = vmatpush1.bf16.msra.mxu0 %v1346
    %1847 = vmatprep.subr.bf16.mxu0 %v1355
    %1848 = vmatpush1.bf16.msra.mxu0 %v1354
    %1849 = vmatprep.subr.bf16.mxu0 %v1363
    %1850 = vmatpush1.bf16.msra.mxu0 %v1362
    %1851 = vmatprep.subr.bf16.mxu0 %v1371
    %1852 = vmatpush1.bf16.msra.mxu0 %v1370
    %1853 = vmatprep.subr.bf16.mxu0 %v1379
    %1854 = vmatpush1.bf16.msra.mxu0 %v1378
    %1855 = vmatprep.subr.bf16.mxu0 0
    %1856 = vmatpush1.bf16.msra.mxu0 0
    %1857 = vmatprep.subr.bf16.mxu0 0
    %1858 = vmatpush1.bf16.msra.mxu0 0
    %1859 = vmatprep.subr.bf16.mxu0 0
    %1860 = vmatpush1.bf16.msra.mxu0 0
    %1861 = vmatprep.subr.bf16.mxu0 0
    %1862 = vmatpush1.bf16.msra.mxu0 0
    %1863 = vmatprep.subr.bf16.mxu0 0
    %1864 = vmatpush1.bf16.msra.mxu0 0
    %1865 = vmatprep.subr.bf16.mxu0 0
    %1866 = vmatpush1.bf16.msra.mxu0 0
    %1867 = vmatprep.subr.bf16.mxu0 0
    %1868 = vmatpush1.bf16.msra.mxu0 0
    %1869 = vmatprep.subr.bf16.mxu0 0
    %1870 = vmatpush1.bf16.msra.mxu0 0
    %1871 = vmatprep.mubr.bf16.mxu0 0
    %1872 = vmatmul.mubr.bf16.gmra.mrb[0].mxu0 %v1672
    %v1873 = vpop.f32.mrb[0].mxu0
    %v1874 = vadd.f32 %v1710, %v1873
    %v1875 = vpop.f32.mrb[0].mxu0
    %v1876 = vadd.f32 %v1712, %v1875
    %v1877 = vpop.f32.mrb[0].mxu0
    %v1878 = vpop.f32.mrb[0].mxu0
    %1879 = vdwg.mxu0
    %1880 = vmatprep.subr.bf16.mxu0 %v1325
    %1881 = vmatpush1.bf16.msra.mxu0 %v1324
    %1882 = vmatprep.subr.bf16.mxu0 %v1333
    %1883 = vmatpush1.bf16.msra.mxu0 %v1332
    %1884 = vmatprep.subr.bf16.mxu0 %v1341
    %1885 = vmatpush1.bf16.msra.mxu0 %v1340
    %1886 = vmatprep.subr.bf16.mxu0 %v1349
    %1887 = vmatpush1.bf16.msra.mxu0 %v1348
    %1888 = vmatprep.subr.bf16.mxu0 %v1357
    %1889 = vmatpush1.bf16.msra.mxu0 %v1356
    %1890 = vmatprep.subr.bf16.mxu0 %v1365
    %1891 = vmatpush1.bf16.msra.mxu0 %v1364
    %1892 = vmatprep.subr.bf16.mxu0 %v1373
    %1893 = vmatpush1.bf16.msra.mxu0 %v1372
    %1894 = vmatprep.subr.bf16.mxu0 %v1381
    %1895 = vmatpush1.bf16.msra.mxu0 %v1380
    %1896 = vmatprep.subr.bf16.mxu0 0
    %1897 = vmatpush1.bf16.msra.mxu0 0
    %1898 = vmatprep.subr.bf16.mxu0 0
    %1899 = vmatpush1.bf16.msra.mxu0 0
    %1900 = vmatprep.subr.bf16.mxu0 0
    %1901 = vmatpush1.bf16.msra.mxu0 0
    %1902 = vmatprep.subr.bf16.mxu0 0
    %1903 = vmatpush1.bf16.msra.mxu0 0
    %1904 = vmatprep.subr.bf16.mxu0 0
    %1905 = vmatpush1.bf16.msra.mxu0 0
    %1906 = vmatprep.subr.bf16.mxu0 0
    %1907 = vmatpush1.bf16.msra.mxu0 0
    %1908 = vmatprep.subr.bf16.mxu0 0
    %1909 = vmatpush1.bf16.msra.mxu0 0
    %1910 = vmatprep.subr.bf16.mxu0 0
    %1911 = vmatpush1.bf16.msra.mxu0 0
    %1912 = vmatprep.mubr.bf16.mxu0 0
    %1913 = vmatmul.mubr.bf16.gmra.mrb[0].mxu0 %v1672
    %v1914 = vpop.f32.mrb[0].mxu0
    %v1915 = vadd.f32 %v1751, %v1914
    %v1916 = vpop.f32.mrb[0].mxu0
    %v1917 = vadd.f32 %v1753, %v1916
    %v1918 = vpop.f32.mrb[0].mxu0
    %v1919 = vpop.f32.mrb[0].mxu0
    %1920 = vdwg.mxu0
    %1921 = vmatprep.subr.bf16.mxu0 %v1327
    %1922 = vmatpush1.bf16.msra.mxu0 %v1326
    %1923 = vmatprep.subr.bf16.mxu0 %v1335
    %1924 = vmatpush1.bf16.msra.mxu0 %v1334
    %1925 = vmatprep.subr.bf16.mxu0 %v1343
    %1926 = vmatpush1.bf16.msra.mxu0 %v1342
    %1927 = vmatprep.subr.bf16.mxu0 %v1351
    %1928 = vmatpush1.bf16.msra.mxu0 %v1350
    %1929 = vmatprep.subr.bf16.mxu0 %v1359
    %1930 = vmatpush1.bf16.msra.mxu0 %v1358
    %1931 = vmatprep.subr.bf16.mxu0 %v1367
    %1932 = vmatpush1.bf16.msra.mxu0 %v1366
    %1933 = vmatprep.subr.bf16.mxu0 %v1375
    %1934 = vmatpush1.bf16.msra.mxu0 %v1374
    %1935 = vmatprep.subr.bf16.mxu0 %v1383
    %1936 = vmatpush1.bf16.msra.mxu0 %v1382
    %1937 = vmatprep.subr.bf16.mxu0 0
    %1938 = vmatpush1.bf16.msra.mxu0 0
    %1939 = vmatprep.subr.bf16.mxu0 0
    %1940 = vmatpush1.bf16.msra.mxu0 0
    %1941 = vmatprep.subr.bf16.mxu0 0
    %1942 = vmatpush1.bf16.msra.mxu0 0
    %1943 = vmatprep.subr.bf16.mxu0 0
    %1944 = vmatpush1.bf16.msra.mxu0 0
    %1945 = vmatprep.subr.bf16.mxu0 0
    %1946 = vmatpush1.bf16.msra.mxu0 0
    %1947 = vmatprep.subr.bf16.mxu0 0
    %1948 = vmatpush1.bf16.msra.mxu0 0
    %1949 = vmatprep.subr.bf16.mxu0 0
    %1950 = vmatpush1.bf16.msra.mxu0 0
    %1951 = vmatprep.subr.bf16.mxu0 0
    %1952 = vmatpush1.bf16.msra.mxu0 0
    %1953 = vmatprep.mubr.bf16.mxu0 0
    %1954 = vmatmul.mubr.bf16.gmra.mrb[0].mxu0 %v1672
    %v1955 = vpop.f32.mrb[0].mxu0
    %v1956 = vadd.f32 %v1792, %v1955
    %v1957 = vpop.f32.mrb[0].mxu0
    %v1958 = vadd.f32 %v1794, %v1957
    %v1959 = vpop.f32.mrb[0].mxu0
    %v1960 = vpop.f32.mrb[0].mxu0
    %1961 = vdwg.mxu0
    %1962 = vmatprep.subr.bf16.mxu0 %v1329
    %1963 = vmatpush1.bf16.msra.mxu0 %v1328
    %1964 = vmatprep.subr.bf16.mxu0 %v1337
    %1965 = vmatpush1.bf16.msra.mxu0 %v1336
    %1966 = vmatprep.subr.bf16.mxu0 %v1345
    %1967 = vmatpush1.bf16.msra.mxu0 %v1344
    %1968 = vmatprep.subr.bf16.mxu0 %v1353
    %1969 = vmatpush1.bf16.msra.mxu0 %v1352
    %1970 = vmatprep.subr.bf16.mxu0 %v1361
    %1971 = vmatpush1.bf16.msra.mxu0 %v1360
    %1972 = vmatprep.subr.bf16.mxu0 %v1369
    %1973 = vmatpush1.bf16.msra.mxu0 %v1368
    %1974 = vmatprep.subr.bf16.mxu0 %v1377
    %1975 = vmatpush1.bf16.msra.mxu0 %v1376
    %1976 = vmatprep.subr.bf16.mxu0 %v1385
    %1977 = vmatpush1.bf16.msra.mxu0 %v1384
    %1978 = vmatprep.subr.bf16.mxu0 0
    %1979 = vmatpush1.bf16.msra.mxu0 0
    %1980 = vmatprep.subr.bf16.mxu0 0
    %1981 = vmatpush1.bf16.msra.mxu0 0
    %1982 = vmatprep.subr.bf16.mxu0 0
    %1983 = vmatpush1.bf16.msra.mxu0 0
    %1984 = vmatprep.subr.bf16.mxu0 0
    %1985 = vmatpush1.bf16.msra.mxu0 0
    %1986 = vmatprep.subr.bf16.mxu0 0
    %1987 = vmatpush1.bf16.msra.mxu0 0
    %1988 = vmatprep.subr.bf16.mxu0 0
    %1989 = vmatpush1.bf16.msra.mxu0 0
    %1990 = vmatprep.subr.bf16.mxu0 0
    %1991 = vmatpush1.bf16.msra.mxu0 0
    %1992 = vmatprep.subr.bf16.mxu0 0
    %1993 = vmatpush1.bf16.msra.mxu0 0
    %1994 = vmatprep.mubr.bf16.mxu0 0
    %1995 = vmatmul.mubr.bf16.gmra.mrb[0].mxu0 %v1672
    %v1996 = vpop.f32.mrb[0].mxu0
    %v1997 = vadd.f32 %v1833, %v1996
    %v1998 = vpop.f32.mrb[0].mxu0
    %v1999 = vadd.f32 %v1835, %v1998
    %v2000 = vpop.f32.mrb[0].mxu0
    %v2001 = vpop.f32.mrb[0].mxu0
    %2002 = vdwg.mxu0
    %v2003 = vadd.f32 %v1874, %v279
    %v2004 = vadd.f32 %v1876, %v283
    %v2005 = vadd.f32 %v1915, %v287
    %v2006 = vadd.f32 %v1917, %v291
    %v2007 = vadd.f32 %v1956, %v295
    %v2008 = vadd.f32 %v1958, %v299
    %v2009 = vadd.f32 %v1997, %v303
    %v2010 = vadd.f32 %v1999, %v307
    %v2011 = vxor.u32 %v2003, 2147483648
    %v2012 = vmul.f32 %v2011, 1.442695
    %v2013 = vpow.pop %v2012
    %v2014 = vadd.f32 %v2013, 1.0
    %v2015 = vrcp.pop %v2014
    %v2016 = vmul.f32 1.0, %v2015
    %v2017 = vxor.u32 %v2004, 2147483648
    %v2018 = vmul.f32 %v2017, 1.442695
    %v2019 = vpow.pop %v2018
    %v2020 = vadd.f32 %v2019, 1.0
    %v2021 = vrcp.pop %v2020
    %v2022 = vmul.f32 1.0, %v2021
    %v2023 = vxor.u32 %v2005, 2147483648
    %v2024 = vmul.f32 %v2023, 1.442695
    %v2025 = vpow.pop %v2024
    %v2026 = vadd.f32 %v2025, 1.0
    %v2027 = vrcp.pop %v2026
    %v2028 = vmul.f32 1.0, %v2027
    %v2029 = vtanh.pop %v2006
    %v2030 = vxor.u32 %v2007, 2147483648
    %v2031 = vmul.f32 %v2030, 1.442695
    %v2032 = vpow.pop %v2031
    %v2033 = vadd.f32 %v2032, 1.0
    %v2034 = vrcp.pop %v2033
    %v2035 = vmul.f32 1.0, %v2034
    %v2036 = vxor.u32 %v2008, 2147483648
    %v2037 = vmul.f32 %v2036, 1.442695
    %v2038 = vpow.pop %v2037
    %v2039 = vadd.f32 %v2038, 1.0
    %v2040 = vrcp.pop %v2039
    %v2041 = vmul.f32 1.0, %v2040
    %v2042 = vxor.u32 %v2009, 2147483648
    %v2043 = vmul.f32 %v2042, 1.442695
    %v2044 = vpow.pop %v2043
    %v2045 = vadd.f32 %v2044, 1.0
    %v2046 = vrcp.pop %v2045
    %v2047 = vmul.f32 1.0, %v2046
    %v2048 = vtanh.pop %v2010
    %v2049 = vmul.f32 %v1663, %v321
    %v2050 = vmul.f32 %v2016, %v2049
    %v2051 = vmul.f32 %v2022, %v2029
    %v2052 = vadd.f32 %v2050, %v2051
    %v2053 = vtanh.pop %v2052
    %v2054 = vmul.f32 %v2028, %v2053
    %v2055 = vmul.f32 %v2035, %v1668
    %v2056 = vmul.f32 %v2041, %v2048
    %v2057 = vadd.f32 %v2055, %v2056
    %v2058 = vtanh.pop %v2057
    %v2059 = vmul.f32 %v2047, %v2058
    %s2060 = scalar_lea.vmem %s0, 8
    %v2061 = vld [vmem:[%s2060] sm:$0xf]
    %v2062 = vpack.c.bf16 %v2054, %v2054
    %v2063 = vpack.c.bf16 %v2059, %v2059
    %2064 = vmatprep.subr.bf16.mxu0 %v711
    %2065 = vmatpush1.bf16.msra.mxu0 %v710
    %2066 = vmatprep.subr.bf16.mxu0 %v719
    %2067 = vmatpush1.bf16.msra.mxu0 %v718
    %2068 = vmatprep.subr.bf16.mxu0 %v727
    %2069 = vmatpush1.bf16.msra.mxu0 %v726
    %2070 = vmatprep.subr.bf16.mxu0 %v735
    %2071 = vmatpush1.bf16.msra.mxu0 %v734
    %2072 = vmatprep.subr.bf16.mxu0 %v743
    %2073 = vmatpush1.bf16.msra.mxu0 %v742
    %2074 = vmatprep.subr.bf16.mxu0 %v751
    %2075 = vmatpush1.bf16.msra.mxu0 %v750
    %2076 = vmatprep.subr.bf16.mxu0 %v759
    %2077 = vmatpush1.bf16.msra.mxu0 %v758
    %2078 = vmatprep.subr.bf16.mxu0 %v767
    %2079 = vmatpush1.bf16.msra.mxu0 %v766
    %2080 = vmatprep.subr.bf16.mxu0 %v775
    %2081 = vmatpush1.bf16.msra.mxu0 %v774
    %2082 = vmatprep.subr.bf16.mxu0 %v783
    %2083 = vmatpush1.bf16.msra.mxu0 %v782
    %2084 = vmatprep.subr.bf16.mxu0 %v791
    %2085 = vmatpush1.bf16.msra.mxu0 %v790
    %2086 = vmatprep.subr.bf16.mxu0 %v799
    %2087 = vmatpush1.bf16.msra.mxu0 %v798
    %2088 = vmatprep.subr.bf16.mxu0 %v807
    %2089 = vmatpush1.bf16.msra.mxu0 %v806
    %2090 = vmatprep.subr.bf16.mxu0 %v815
    %2091 = vmatpush1.bf16.msra.mxu0 %v814
    %2092 = vmatprep.subr.bf16.mxu0 %v823
    %2093 = vmatpush1.bf16.msra.mxu0 %v822
    %2094 = vmatprep.subr.bf16.mxu0 %v831
    %2095 = vmatpush1.bf16.msra.mxu0 %v830
    %2096 = vmatprep.mubr.bf16.mxu0 %v2063
    %2097 = vmatmul.mubr.bf16.gmra.mrb[0].mxu0 %v2062
    %v2098 = vpop.f32.mrb[0].mxu0
    %v2099 = vadd.f32 0.0, %v2098
    %v2100 = vpop.f32.mrb[0].mxu0
    %v2101 = vadd.f32 0.0, %v2100
    %v2102 = vpop.f32.mrb[0].mxu0
    %v2103 = vpop.f32.mrb[0].mxu0
    %2104 = vdwg.mxu0
    %2105 = vmatprep.subr.bf16.mxu0 %v713
    %2106 = vmatpush1.bf16.msra.mxu0 %v712
    %2107 = vmatprep.subr.bf16.mxu0 %v721
    %2108 = vmatpush1.bf16.msra.mxu0 %v720
    %2109 = vmatprep.subr.bf16.mxu0 %v729
    %2110 = vmatpush1.bf16.msra.mxu0 %v728
    %2111 = vmatprep.subr.bf16.mxu0 %v737
    %2112 = vmatpush1.bf16.msra.mxu0 %v736
    %2113 = vmatprep.subr.bf16.mxu0 %v745
    %2114 = vmatpush1.bf16.msra.mxu0 %v744
    %2115 = vmatprep.subr.bf16.mxu0 %v753
    %2116 = vmatpush1.bf16.msra.mxu0 %v752
    %2117 = vmatprep.subr.bf16.mxu0 %v761
    %2118 = vmatpush1.bf16.msra.mxu0 %v760
    %2119 = vmatprep.subr.bf16.mxu0 %v769
    %2120 = vmatpush1.bf16.msra.mxu0 %v768
    %2121 = vmatprep.subr.bf16.mxu0 %v777
    %2122 = vmatpush1.bf16.msra.mxu0 %v776
    %2123 = vmatprep.subr.bf16.mxu0 %v785
    %2124 = vmatpush1.bf16.msra.mxu0 %v784
    %2125 = vmatprep.subr.bf16.mxu0 %v793
    %2126 = vmatpush1.bf16.msra.mxu0 %v792
    %2127 = vmatprep.subr.bf16.mxu0 %v801
    %2128 = vmatpush1.bf16.msra.mxu0 %v800
    %2129 = vmatprep.subr.bf16.mxu0 %v809
    %2130 = vmatpush1.bf16.msra.mxu0 %v808
    %2131 = vmatprep.subr.bf16.mxu0 %v817
    %2132 = vmatpush1.bf16.msra.mxu0 %v816
    %2133 = vmatprep.subr.bf16.mxu0 %v825
    %2134 = vmatpush1.bf16.msra.mxu0 %v824
    %2135 = vmatprep.subr.bf16.mxu0 %v833
    %2136 = vmatpush1.bf16.msra.mxu0 %v832
    %2137 = vmatprep.mubr.bf16.mxu0 %v2063
    %2138 = vmatmul.mubr.bf16.gmra.mrb[0].mxu0 %v2062
    %v2139 = vpop.f32.mrb[0].mxu0
    %v2140 = vadd.f32 0.0, %v2139
    %v2141 = vpop.f32.mrb[0].mxu0
    %v2142 = vadd.f32 0.0, %v2141
    %v2143 = vpop.f32.mrb[0].mxu0
    %v2144 = vpop.f32.mrb[0].mxu0
    %2145 = vdwg.mxu0
    %2146 = vmatprep.subr.bf16.mxu0 %v715
    %2147 = vmatpush1.bf16.msra.mxu0 %v714
    %2148 = vmatprep.subr.bf16.mxu0 %v723
    %2149 = vmatpush1.bf16.msra.mxu0 %v722
    %2150 = vmatprep.subr.bf16.mxu0 %v731
    %2151 = vmatpush1.bf16.msra.mxu0 %v730
    %2152 = vmatprep.subr.bf16.mxu0 %v739
    %2153 = vmatpush1.bf16.msra.mxu0 %v738
    %2154 = vmatprep.subr.bf16.mxu0 %v747
    %2155 = vmatpush1.bf16.msra.mxu0 %v746
    %2156 = vmatprep.subr.bf16.mxu0 %v755
    %2157 = vmatpush1.bf16.msra.mxu0 %v754
    %2158 = vmatprep.subr.bf16.mxu0 %v763
    %2159 = vmatpush1.bf16.msra.mxu0 %v762
    %2160 = vmatprep.subr.bf16.mxu0 %v771
    %2161 = vmatpush1.bf16.msra.mxu0 %v770
    %2162 = vmatprep.subr.bf16.mxu0 %v779
    %2163 = vmatpush1.bf16.msra.mxu0 %v778
    %2164 = vmatprep.subr.bf16.mxu0 %v787
    %2165 = vmatpush1.bf16.msra.mxu0 %v786
    %2166 = vmatprep.subr.bf16.mxu0 %v795
    %2167 = vmatpush1.bf16.msra.mxu0 %v794
    %2168 = vmatprep.subr.bf16.mxu0 %v803
    %2169 = vmatpush1.bf16.msra.mxu0 %v802
    %2170 = vmatprep.subr.bf16.mxu0 %v811
    %2171 = vmatpush1.bf16.msra.mxu0 %v810
    %2172 = vmatprep.subr.bf16.mxu0 %v819
    %2173 = vmatpush1.bf16.msra.mxu0 %v818
    %2174 = vmatprep.subr.bf16.mxu0 %v827
    %2175 = vmatpush1.bf16.msra.mxu0 %v826
    %2176 = vmatprep.subr.bf16.mxu0 %v835
    %2177 = vmatpush1.bf16.msra.mxu0 %v834
    %2178 = vmatprep.mubr.bf16.mxu0 %v2063
    %2179 = vmatmul.mubr.bf16.gmra.mrb[0].mxu0 %v2062
    %v2180 = vpop.f32.mrb[0].mxu0
    %v2181 = vadd.f32 0.0, %v2180
    %v2182 = vpop.f32.mrb[0].mxu0
    %v2183 = vadd.f32 0.0, %v2182
    %v2184 = vpop.f32.mrb[0].mxu0
    %v2185 = vpop.f32.mrb[0].mxu0
    %2186 = vdwg.mxu0
    %2187 = vmatprep.subr.bf16.mxu0 %v717
    %2188 = vmatpush1.bf16.msra.mxu0 %v716
    %2189 = vmatprep.subr.bf16.mxu0 %v725
    %2190 = vmatpush1.bf16.msra.mxu0 %v724
    %2191 = vmatprep.subr.bf16.mxu0 %v733
    %2192 = vmatpush1.bf16.msra.mxu0 %v732
    %2193 = vmatprep.subr.bf16.mxu0 %v741
    %2194 = vmatpush1.bf16.msra.mxu0 %v740
    %2195 = vmatprep.subr.bf16.mxu0 %v749
    %2196 = vmatpush1.bf16.msra.mxu0 %v748
    %2197 = vmatprep.subr.bf16.mxu0 %v757
    %2198 = vmatpush1.bf16.msra.mxu0 %v756
    %2199 = vmatprep.subr.bf16.mxu0 %v765
    %2200 = vmatpush1.bf16.msra.mxu0 %v764
    %2201 = vmatprep.subr.bf16.mxu0 %v773
    %2202 = vmatpush1.bf16.msra.mxu0 %v772
    %2203 = vmatprep.subr.bf16.mxu0 %v781
    %2204 = vmatpush1.bf16.msra.mxu0 %v780
    %2205 = vmatprep.subr.bf16.mxu0 %v789
    %2206 = vmatpush1.bf16.msra.mxu0 %v788
    %2207 = vmatprep.subr.bf16.mxu0 %v797
    %2208 = vmatpush1.bf16.msra.mxu0 %v796
    %2209 = vmatprep.subr.bf16.mxu0 %v805
    %2210 = vmatpush1.bf16.msra.mxu0 %v804
    %2211 = vmatprep.subr.bf16.mxu0 %v813
    %2212 = vmatpush1.bf16.msra.mxu0 %v812
    %2213 = vmatprep.subr.bf16.mxu0 %v821
    %2214 = vmatpush1.bf16.msra.mxu0 %v820
    %2215 = vmatprep.subr.bf16.mxu0 %v829
    %2216 = vmatpush1.bf16.msra.mxu0 %v828
    %2217 = vmatprep.subr.bf16.mxu0 %v837
    %2218 = vmatpush1.bf16.msra.mxu0 %v836
    %2219 = vmatprep.mubr.bf16.mxu0 %v2063
    %2220 = vmatmul.mubr.bf16.gmra.mrb[0].mxu0 %v2062
    %v2221 = vpop.f32.mrb[0].mxu0
    %v2222 = vadd.f32 0.0, %v2221
    %v2223 = vpop.f32.mrb[0].mxu0
    %v2224 = vadd.f32 0.0, %v2223
    %v2225 = vpop.f32.mrb[0].mxu0
    %v2226 = vpop.f32.mrb[0].mxu0
    %2227 = vdwg.mxu0
    %2228 = vmatprep.subr.bf16.mxu0 %v1323
    %2229 = vmatpush1.bf16.msra.mxu0 %v1322
    %2230 = vmatprep.subr.bf16.mxu0 %v1331
    %2231 = vmatpush1.bf16.msra.mxu0 %v1330
    %2232 = vmatprep.subr.bf16.mxu0 %v1339
    %2233 = vmatpush1.bf16.msra.mxu0 %v1338
    %2234 = vmatprep.subr.bf16.mxu0 %v1347
    %2235 = vmatpush1.bf16.msra.mxu0 %v1346
    %2236 = vmatprep.subr.bf16.mxu0 %v1355
    %2237 = vmatpush1.bf16.msra.mxu0 %v1354
    %2238 = vmatprep.subr.bf16.mxu0 %v1363
    %2239 = vmatpush1.bf16.msra.mxu0 %v1362
    %2240 = vmatprep.subr.bf16.mxu0 %v1371
    %2241 = vmatpush1.bf16.msra.mxu0 %v1370
    %2242 = vmatprep.subr.bf16.mxu0 %v1379
    %2243 = vmatpush1.bf16.msra.mxu0 %v1378
    %2244 = vmatprep.subr.bf16.mxu0 0
    %2245 = vmatpush1.bf16.msra.mxu0 0
    %2246 = vmatprep.subr.bf16.mxu0 0
    %2247 = vmatpush1.bf16.msra.mxu0 0
    %2248 = vmatprep.subr.bf16.mxu0 0
    %2249 = vmatpush1.bf16.msra.mxu0 0
    %2250 = vmatprep.subr.bf16.mxu0 0
    %2251 = vmatpush1.bf16.msra.mxu0 0
    %2252 = vmatprep.subr.bf16.mxu0 0
    %2253 = vmatpush1.bf16.msra.mxu0 0
    %2254 = vmatprep.subr.bf16.mxu0 0
    %2255 = vmatpush1.bf16.msra.mxu0 0
    %2256 = vmatprep.subr.bf16.mxu0 0
    %2257 = vmatpush1.bf16.msra.mxu0 0
    %2258 = vmatprep.subr.bf16.mxu0 0
    %2259 = vmatpush1.bf16.msra.mxu0 0
    %2260 = vmatprep.mubr.bf16.mxu0 0
    %2261 = vmatmul.mubr.bf16.gmra.mrb[0].mxu0 %v2061
    %v2262 = vpop.f32.mrb[0].mxu0
    %v2263 = vadd.f32 %v2099, %v2262
    %v2264 = vpop.f32.mrb[0].mxu0
    %v2265 = vadd.f32 %v2101, %v2264
    %v2266 = vpop.f32.mrb[0].mxu0
    %v2267 = vpop.f32.mrb[0].mxu0
    %2268 = vdwg.mxu0
    %2269 = vmatprep.subr.bf16.mxu0 %v1325
    %2270 = vmatpush1.bf16.msra.mxu0 %v1324
    %2271 = vmatprep.subr.bf16.mxu0 %v1333
    %2272 = vmatpush1.bf16.msra.mxu0 %v1332
    %2273 = vmatprep.subr.bf16.mxu0 %v1341
    %2274 = vmatpush1.bf16.msra.mxu0 %v1340
    %2275 = vmatprep.subr.bf16.mxu0 %v1349
    %2276 = vmatpush1.bf16.msra.mxu0 %v1348
    %2277 = vmatprep.subr.bf16.mxu0 %v1357
    %2278 = vmatpush1.bf16.msra.mxu0 %v1356
    %2279 = vmatprep.subr.bf16.mxu0 %v1365
    %2280 = vmatpush1.bf16.msra.mxu0 %v1364
    %2281 = vmatprep.subr.bf16.mxu0 %v1373
    %2282 = vmatpush1.bf16.msra.mxu0 %v1372
    %2283 = vmatprep.subr.bf16.mxu0 %v1381
    %2284 = vmatpush1.bf16.msra.mxu0 %v1380
    %2285 = vmatprep.subr.bf16.mxu0 0
    %2286 = vmatpush1.bf16.msra.mxu0 0
    %2287 = vmatprep.subr.bf16.mxu0 0
    %2288 = vmatpush1.bf16.msra.mxu0 0
    %2289 = vmatprep.subr.bf16.mxu0 0
    %2290 = vmatpush1.bf16.msra.mxu0 0
    %2291 = vmatprep.subr.bf16.mxu0 0
    %2292 = vmatpush1.bf16.msra.mxu0 0
    %2293 = vmatprep.subr.bf16.mxu0 0
    %2294 = vmatpush1.bf16.msra.mxu0 0
    %2295 = vmatprep.subr.bf16.mxu0 0
    %2296 = vmatpush1.bf16.msra.mxu0 0
    %2297 = vmatprep.subr.bf16.mxu0 0
    %2298 = vmatpush1.bf16.msra.mxu0 0
    %2299 = vmatprep.subr.bf16.mxu0 0
    %2300 = vmatpush1.bf16.msra.mxu0 0
    %2301 = vmatprep.mubr.bf16.mxu0 0
    %2302 = vmatmul.mubr.bf16.gmra.mrb[0].mxu0 %v2061
    %v2303 = vpop.f32.mrb[0].mxu0
    %v2304 = vadd.f32 %v2140, %v2303
    %v2305 = vpop.f32.mrb[0].mxu0
    %v2306 = vadd.f32 %v2142, %v2305
    %v2307 = vpop.f32.mrb[0].mxu0
    %v2308 = vpop.f32.mrb[0].mxu0
    %2309 = vdwg.mxu0
    %2310 = vmatprep.subr.bf16.mxu0 %v1327
    %2311 = vmatpush1.bf16.msra.mxu0 %v1326
    %2312 = vmatprep.subr.bf16.mxu0 %v1335
    %2313 = vmatpush1.bf16.msra.mxu0 %v1334
    %2314 = vmatprep.subr.bf16.mxu0 %v1343
    %2315 = vmatpush1.bf16.msra.mxu0 %v1342
    %2316 = vmatprep.subr.bf16.mxu0 %v1351
    %2317 = vmatpush1.bf16.msra.mxu0 %v1350
    %2318 = vmatprep.subr.bf16.mxu0 %v1359
    %2319 = vmatpush1.bf16.msra.mxu0 %v1358
    %2320 = vmatprep.subr.bf16.mxu0 %v1367
    %2321 = vmatpush1.bf16.msra.mxu0 %v1366
    %2322 = vmatprep.subr.bf16.mxu0 %v1375
    %2323 = vmatpush1.bf16.msra.mxu0 %v1374
    %2324 = vmatprep.subr.bf16.mxu0 %v1383
    %2325 = vmatpush1.bf16.msra.mxu0 %v1382
    %2326 = vmatprep.subr.bf16.mxu0 0
    %2327 = vmatpush1.bf16.msra.mxu0 0
    %2328 = vmatprep.subr.bf16.mxu0 0
    %2329 = vmatpush1.bf16.msra.mxu0 0
    %2330 = vmatprep.subr.bf16.mxu0 0
    %2331 = vmatpush1.bf16.msra.mxu0 0
    %2332 = vmatprep.subr.bf16.mxu0 0
    %2333 = vmatpush1.bf16.msra.mxu0 0
    %2334 = vmatprep.subr.bf16.mxu0 0
    %2335 = vmatpush1.bf16.msra.mxu0 0
    %2336 = vmatprep.subr.bf16.mxu0 0
    %2337 = vmatpush1.bf16.msra.mxu0 0
    %2338 = vmatprep.subr.bf16.mxu0 0
    %2339 = vmatpush1.bf16.msra.mxu0 0
    %2340 = vmatprep.subr.bf16.mxu0 0
    %2341 = vmatpush1.bf16.msra.mxu0 0
    %2342 = vmatprep.mubr.bf16.mxu0 0
    %2343 = vmatmul.mubr.bf16.gmra.mrb[0].mxu0 %v2061
    %v2344 = vpop.f32.mrb[0].mxu0
    %v2345 = vadd.f32 %v2181, %v2344
    %v2346 = vpop.f32.mrb[0].mxu0
    %v2347 = vadd.f32 %v2183, %v2346
    %v2348 = vpop.f32.mrb[0].mxu0
    %v2349 = vpop.f32.mrb[0].mxu0
    %2350 = vdwg.mxu0
    %2351 = vmatprep.subr.bf16.mxu0 %v1329
    %2352 = vmatpush1.bf16.msra.mxu0 %v1328
    %2353 = vmatprep.subr.bf16.mxu0 %v1337
    %2354 = vmatpush1.bf16.msra.mxu0 %v1336
    %2355 = vmatprep.subr.bf16.mxu0 %v1345
    %2356 = vmatpush1.bf16.msra.mxu0 %v1344
    %2357 = vmatprep.subr.bf16.mxu0 %v1353
    %2358 = vmatpush1.bf16.msra.mxu0 %v1352
    %2359 = vmatprep.subr.bf16.mxu0 %v1361
    %2360 = vmatpush1.bf16.msra.mxu0 %v1360
    %2361 = vmatprep.subr.bf16.mxu0 %v1369
    %2362 = vmatpush1.bf16.msra.mxu0 %v1368
    %2363 = vmatprep.subr.bf16.mxu0 %v1377
    %2364 = vmatpush1.bf16.msra.mxu0 %v1376
    %2365 = vmatprep.subr.bf16.mxu0 %v1385
    %2366 = vmatpush1.bf16.msra.mxu0 %v1384
    %2367 = vmatprep.subr.bf16.mxu0 0
    %2368 = vmatpush1.bf16.msra.mxu0 0
    %2369 = vmatprep.subr.bf16.mxu0 0
    %2370 = vmatpush1.bf16.msra.mxu0 0
    %2371 = vmatprep.subr.bf16.mxu0 0
    %2372 = vmatpush1.bf16.msra.mxu0 0
    %2373 = vmatprep.subr.bf16.mxu0 0
    %2374 = vmatpush1.bf16.msra.mxu0 0
    %2375 = vmatprep.subr.bf16.mxu0 0
    %2376 = vmatpush1.bf16.msra.mxu0 0
    %2377 = vmatprep.subr.bf16.mxu0 0
    %2378 = vmatpush1.bf16.msra.mxu0 0
    %2379 = vmatprep.subr.bf16.mxu0 0
    %2380 = vmatpush1.bf16.msra.mxu0 0
    %2381 = vmatprep.subr.bf16.mxu0 0
    %2382 = vmatpush1.bf16.msra.mxu0 0
    %2383 = vmatprep.mubr.bf16.mxu0 0
    %2384 = vmatmul.mubr.bf16.gmra.mrb[0].mxu0 %v2061
    %v2385 = vpop.f32.mrb[0].mxu0
    %v2386 = vadd.f32 %v2222, %v2385
    %v2387 = vpop.f32.mrb[0].mxu0
    %v2388 = vadd.f32 %v2224, %v2387
    %v2389 = vpop.f32.mrb[0].mxu0
    %v2390 = vpop.f32.mrb[0].mxu0
    %2391 = vdwg.mxu0
    %v2392 = vadd.f32 %v2263, %v279
    %v2393 = vadd.f32 %v2265, %v283
    %v2394 = vadd.f32 %v2304, %v287
    %v2395 = vadd.f32 %v2306, %v291
    %v2396 = vadd.f32 %v2345, %v295
    %v2397 = vadd.f32 %v2347, %v299
    %v2398 = vadd.f32 %v2386, %v303
    %v2399 = vadd.f32 %v2388, %v307
    %v2400 = vxor.u32 %v2392, 2147483648
    %v2401 = vmul.f32 %v2400, 1.442695
    %v2402 = vpow.pop %v2401
    %v2403 = vadd.f32 %v2402, 1.0
    %v2404 = vrcp.pop %v2403
    %v2405 = vmul.f32 1.0, %v2404
    %v2406 = vxor.u32 %v2393, 2147483648
    %v2407 = vmul.f32 %v2406, 1.442695
    %v2408 = vpow.pop %v2407
    %v2409 = vadd.f32 %v2408, 1.0
    %v2410 = vrcp.pop %v2409
    %v2411 = vmul.f32 1.0, %v2410
    %v2412 = vxor.u32 %v2394, 2147483648
    %v2413 = vmul.f32 %v2412, 1.442695
    %v2414 = vpow.pop %v2413
    %v2415 = vadd.f32 %v2414, 1.0
    %v2416 = vrcp.pop %v2415
    %v2417 = vmul.f32 1.0, %v2416
    %v2418 = vtanh.pop %v2395
    %v2419 = vxor.u32 %v2396, 2147483648
    %v2420 = vmul.f32 %v2419, 1.442695
    %v2421 = vpow.pop %v2420
    %v2422 = vadd.f32 %v2421, 1.0
    %v2423 = vrcp.pop %v2422
    %v2424 = vmul.f32 1.0, %v2423
    %v2425 = vxor.u32 %v2397, 2147483648
    %v2426 = vmul.f32 %v2425, 1.442695
    %v2427 = vpow.pop %v2426
    %v2428 = vadd.f32 %v2427, 1.0
    %v2429 = vrcp.pop %v2428
    %v2430 = vmul.f32 1.0, %v2429
    %v2431 = vxor.u32 %v2398, 2147483648
    %v2432 = vmul.f32 %v2431, 1.442695
    %v2433 = vpow.pop %v2432
    %v2434 = vadd.f32 %v2433, 1.0
    %v2435 = vrcp.pop %v2434
    %v2436 = vmul.f32 1.0, %v2435
    %v2437 = vtanh.pop %v2399
    %v2438 = vmul.f32 %v2052, %v321
    %v2439 = vmul.f32 %v2405, %v2438
    %v2440 = vmul.f32 %v2411, %v2418
    %v2441 = vadd.f32 %v2439, %v2440
    %v2442 = vtanh.pop %v2441
    %v2443 = vmul.f32 %v2417, %v2442
    %v2444 = vmul.f32 %v2424, %v2057
    %v2445 = vmul.f32 %v2430, %v2437
    %v2446 = vadd.f32 %v2444, %v2445
    %v2447 = vtanh.pop %v2446
    %v2448 = vmul.f32 %v2436, %v2447
    %s2449 = scalar_lea.vmem %s0, 12
    %v2450 = vld [vmem:[%s2449] sm:$0xf]
    %v2451 = vpack.c.bf16 %v2443, %v2443
    %v2452 = vpack.c.bf16 %v2448, %v2448
    %2453 = vmatprep.subr.bf16.mxu0 %v711
    %2454 = vmatpush1.bf16.msra.mxu0 %v710
    %2455 = vmatprep.subr.bf16.mxu0 %v719
    %2456 = vmatpush1.bf16.msra.mxu0 %v718
    %2457 = vmatprep.subr.bf16.mxu0 %v727
    %2458 = vmatpush1.bf16.msra.mxu0 %v726
    %2459 = vmatprep.subr.bf16.mxu0 %v735
    %2460 = vmatpush1.bf16.msra.mxu0 %v734
    %2461 = vmatprep.subr.bf16.mxu0 %v743
    %2462 = vmatpush1.bf16.msra.mxu0 %v742
    %2463 = vmatprep.subr.bf16.mxu0 %v751
    %2464 = vmatpush1.bf16.msra.mxu0 %v750
    %2465 = vmatprep.subr.bf16.mxu0 %v759
    %2466 = vmatpush1.bf16.msra.mxu0 %v758
    %2467 = vmatprep.subr.bf16.mxu0 %v767
    %2468 = vmatpush1.bf16.msra.mxu0 %v766
    %2469 = vmatprep.subr.bf16.mxu0 %v775
    %2470 = vmatpush1.bf16.msra.mxu0 %v774
    %2471 = vmatprep.subr.bf16.mxu0 %v783
    %2472 = vmatpush1.bf16.msra.mxu0 %v782
    %2473 = vmatprep.subr.bf16.mxu0 %v791
    %2474 = vmatpush1.bf16.msra.mxu0 %v790
    %2475 = vmatprep.subr.bf16.mxu0 %v799
    %2476 = vmatpush1.bf16.msra.mxu0 %v798
    %2477 = vmatprep.subr.bf16.mxu0 %v807
    %2478 = vmatpush1.bf16.msra.mxu0 %v806
    %2479 = vmatprep.subr.bf16.mxu0 %v815
    %2480 = vmatpush1.bf16.msra.mxu0 %v814
    %2481 = vmatprep.subr.bf16.mxu0 %v823
    %2482 = vmatpush1.bf16.msra.mxu0 %v822
    %2483 = vmatprep.subr.bf16.mxu0 %v831
    %2484 = vmatpush1.bf16.msra.mxu0 %v830
    %2485 = vmatprep.mubr.bf16.mxu0 %v2452
    %2486 = vmatmul.mubr.bf16.gmra.mrb[0].mxu0 %v2451
    %v2487 = vpop.f32.mrb[0].mxu0
    %v2488 = vadd.f32 0.0, %v2487
    %v2489 = vpop.f32.mrb[0].mxu0
    %v2490 = vadd.f32 0.0, %v2489
    %v2491 = vpop.f32.mrb[0].mxu0
    %v2492 = vpop.f32.mrb[0].mxu0
    %2493 = vdwg.mxu0
    %2494 = vmatprep.subr.bf16.mxu0 %v713
    %2495 = vmatpush1.bf16.msra.mxu0 %v712
    %2496 = vmatprep.subr.bf16.mxu0 %v721
    %2497 = vmatpush1.bf16.msra.mxu0 %v720
    %2498 = vmatprep.subr.bf16.mxu0 %v729
    %2499 = vmatpush1.bf16.msra.mxu0 %v728
    %2500 = vmatprep.subr.bf16.mxu0 %v737
    %2501 = vmatpush1.bf16.msra.mxu0 %v736
    %2502 = vmatprep.subr.bf16.mxu0 %v745
    %2503 = vmatpush1.bf16.msra.mxu0 %v744
    %2504 = vmatprep.subr.bf16.mxu0 %v753
    %2505 = vmatpush1.bf16.msra.mxu0 %v752
    %2506 = vmatprep.subr.bf16.mxu0 %v761
    %2507 = vmatpush1.bf16.msra.mxu0 %v760
    %2508 = vmatprep.subr.bf16.mxu0 %v769
    %2509 = vmatpush1.bf16.msra.mxu0 %v768
    %2510 = vmatprep.subr.bf16.mxu0 %v777
    %2511 = vmatpush1.bf16.msra.mxu0 %v776
    %2512 = vmatprep.subr.bf16.mxu0 %v785
    %2513 = vmatpush1.bf16.msra.mxu0 %v784
    %2514 = vmatprep.subr.bf16.mxu0 %v793
    %2515 = vmatpush1.bf16.msra.mxu0 %v792
    %2516 = vmatprep.subr.bf16.mxu0 %v801
    %2517 = vmatpush1.bf16.msra.mxu0 %v800
    %2518 = vmatprep.subr.bf16.mxu0 %v809
    %2519 = vmatpush1.bf16.msra.mxu0 %v808
    %2520 = vmatprep.subr.bf16.mxu0 %v817
    %2521 = vmatpush1.bf16.msra.mxu0 %v816
    %2522 = vmatprep.subr.bf16.mxu0 %v825
    %2523 = vmatpush1.bf16.msra.mxu0 %v824
    %2524 = vmatprep.subr.bf16.mxu0 %v833
    %2525 = vmatpush1.bf16.msra.mxu0 %v832
    %2526 = vmatprep.mubr.bf16.mxu0 %v2452
    %2527 = vmatmul.mubr.bf16.gmra.mrb[0].mxu0 %v2451
    %v2528 = vpop.f32.mrb[0].mxu0
    %v2529 = vadd.f32 0.0, %v2528
    %v2530 = vpop.f32.mrb[0].mxu0
    %v2531 = vadd.f32 0.0, %v2530
    %v2532 = vpop.f32.mrb[0].mxu0
    %v2533 = vpop.f32.mrb[0].mxu0
    %2534 = vdwg.mxu0
    %2535 = vmatprep.subr.bf16.mxu0 %v715
    %2536 = vmatpush1.bf16.msra.mxu0 %v714
    %2537 = vmatprep.subr.bf16.mxu0 %v723
    %2538 = vmatpush1.bf16.msra.mxu0 %v722
    %2539 = vmatprep.subr.bf16.mxu0 %v731
    %2540 = vmatpush1.bf16.msra.mxu0 %v730
    %2541 = vmatprep.subr.bf16.mxu0 %v739
    %2542 = vmatpush1.bf16.msra.mxu0 %v738
    %2543 = vmatprep.subr.bf16.mxu0 %v747
    %2544 = vmatpush1.bf16.msra.mxu0 %v746
    %2545 = vmatprep.subr.bf16.mxu0 %v755
    %2546 = vmatpush1.bf16.msra.mxu0 %v754
    %2547 = vmatprep.subr.bf16.mxu0 %v763
    %2548 = vmatpush1.bf16.msra.mxu0 %v762
    %2549 = vmatprep.subr.bf16.mxu0 %v771
    %2550 = vmatpush1.bf16.msra.mxu0 %v770
    %2551 = vmatprep.subr.bf16.mxu0 %v779
    %2552 = vmatpush1.bf16.msra.mxu0 %v778
    %2553 = vmatprep.subr.bf16.mxu0 %v787
    %2554 = vmatpush1.bf16.msra.mxu0 %v786
    %2555 = vmatprep.subr.bf16.mxu0 %v795
    %2556 = vmatpush1.bf16.msra.mxu0 %v794
    %2557 = vmatprep.subr.bf16.mxu0 %v803
    %2558 = vmatpush1.bf16.msra.mxu0 %v802
    %2559 = vmatprep.subr.bf16.mxu0 %v811
    %2560 = vmatpush1.bf16.msra.mxu0 %v810
    %2561 = vmatprep.subr.bf16.mxu0 %v819
    %2562 = vmatpush1.bf16.msra.mxu0 %v818
    %2563 = vmatprep.subr.bf16.mxu0 %v827
    %2564 = vmatpush1.bf16.msra.mxu0 %v826
    %2565 = vmatprep.subr.bf16.mxu0 %v835
    %2566 = vmatpush1.bf16.msra.mxu0 %v834
    %2567 = vmatprep.mubr.bf16.mxu0 %v2452
    %2568 = vmatmul.mubr.bf16.gmra.mrb[0].mxu0 %v2451
    %v2569 = vpop.f32.mrb[0].mxu0
    %v2570 = vadd.f32 0.0, %v2569
    %v2571 = vpop.f32.mrb[0].mxu0
    %v2572 = vadd.f32 0.0, %v2571
    %v2573 = vpop.f32.mrb[0].mxu0
    %v2574 = vpop.f32.mrb[0].mxu0
    %2575 = vdwg.mxu0
    %2576 = vmatprep.subr.bf16.mxu0 %v717
    %2577 = vmatpush1.bf16.msra.mxu0 %v716
    %2578 = vmatprep.subr.bf16.mxu0 %v725
    %2579 = vmatpush1.bf16.msra.mxu0 %v724
    %2580 = vmatprep.subr.bf16.mxu0 %v733
    %2581 = vmatpush1.bf16.msra.mxu0 %v732
    %2582 = vmatprep.subr.bf16.mxu0 %v741
    %2583 = vmatpush1.bf16.msra.mxu0 %v740
    %2584 = vmatprep.subr.bf16.mxu0 %v749
    %2585 = vmatpush1.bf16.msra.mxu0 %v748
    %2586 = vmatprep.subr.bf16.mxu0 %v757
    %2587 = vmatpush1.bf16.msra.mxu0 %v756
    %2588 = vmatprep.subr.bf16.mxu0 %v765
    %2589 = vmatpush1.bf16.msra.mxu0 %v764
    %2590 = vmatprep.subr.bf16.mxu0 %v773
    %2591 = vmatpush1.bf16.msra.mxu0 %v772
    %2592 = vmatprep.subr.bf16.mxu0 %v781
    %2593 = vmatpush1.bf16.msra.mxu0 %v780
    %2594 = vmatprep.subr.bf16.mxu0 %v789
    %2595 = vmatpush1.bf16.msra.mxu0 %v788
    %2596 = vmatprep.subr.bf16.mxu0 %v797
    %2597 = vmatpush1.bf16.msra.mxu0 %v796
    %2598 = vmatprep.subr.bf16.mxu0 %v805
    %2599 = vmatpush1.bf16.msra.mxu0 %v804
    %2600 = vmatprep.subr.bf16.mxu0 %v813
    %2601 = vmatpush1.bf16.msra.mxu0 %v812
    %2602 = vmatprep.subr.bf16.mxu0 %v821
    %2603 = vmatpush1.bf16.msra.mxu0 %v820
    %2604 = vmatprep.subr.bf16.mxu0 %v829
    %2605 = vmatpush1.bf16.msra.mxu0 %v828
    %2606 = vmatprep.subr.bf16.mxu0 %v837
    %2607 = vmatpush1.bf16.msra.mxu0 %v836
    %2608 = vmatprep.mubr.bf16.mxu0 %v2452
    %2609 = vmatmul.mubr.bf16.gmra.mrb[0].mxu0 %v2451
    %v2610 = vpop.f32.mrb[0].mxu0
    %v2611 = vadd.f32 0.0, %v2610
    %v2612 = vpop.f32.mrb[0].mxu0
    %v2613 = vadd.f32 0.0, %v2612
    %v2614 = vpop.f32.mrb[0].mxu0
    %v2615 = vpop.f32.mrb[0].mxu0
    %2616 = vdwg.mxu0
    %2617 = vmatprep.subr.bf16.mxu0 %v1323
    %2618 = vmatpush1.bf16.msra.mxu0 %v1322
    %2619 = vmatprep.subr.bf16.mxu0 %v1331
    %2620 = vmatpush1.bf16.msra.mxu0 %v1330
    %2621 = vmatprep.subr.bf16.mxu0 %v1339
    %2622 = vmatpush1.bf16.msra.mxu0 %v1338
    %2623 = vmatprep.subr.bf16.mxu0 %v1347
    %2624 = vmatpush1.bf16.msra.mxu0 %v1346
    %2625 = vmatprep.subr.bf16.mxu0 %v1355
    %2626 = vmatpush1.bf16.msra.mxu0 %v1354
    %2627 = vmatprep.subr.bf16.mxu0 %v1363
    %2628 = vmatpush1.bf16.msra.mxu0 %v1362
    %2629 = vmatprep.subr.bf16.mxu0 %v1371
    %2630 = vmatpush1.bf16.msra.mxu0 %v1370
    %2631 = vmatprep.subr.bf16.mxu0 %v1379
    %2632 = vmatpush1.bf16.msra.mxu0 %v1378
    %2633 = vmatprep.subr.bf16.mxu0 0
    %2634 = vmatpush1.bf16.msra.mxu0 0
    %2635 = vmatprep.subr.bf16.mxu0 0
    %2636 = vmatpush1.bf16.msra.mxu0 0
    %2637 = vmatprep.subr.bf16.mxu0 0
    %2638 = vmatpush1.bf16.msra.mxu0 0
    %2639 = vmatprep.subr.bf16.mxu0 0
    %2640 = vmatpush1.bf16.msra.mxu0 0
    %2641 = vmatprep.subr.bf16.mxu0 0
    %2642 = vmatpush1.bf16.msra.mxu0 0
    %2643 = vmatprep.subr.bf16.mxu0 0
    %2644 = vmatpush1.bf16.msra.mxu0 0
    %2645 = vmatprep.subr.bf16.mxu0 0
    %2646 = vmatpush1.bf16.msra.mxu0 0
    %2647 = vmatprep.subr.bf16.mxu0 0
    %2648 = vmatpush1.bf16.msra.mxu0 0
    %2649 = vmatprep.mubr.bf16.mxu0 0
    %2650 = vmatmul.mubr.bf16.gmra.mrb[0].mxu0 %v2450
    %v2651 = vpop.f32.mrb[0].mxu0
    %v2652 = vadd.f32 %v2488, %v2651
    %v2653 = vpop.f32.mrb[0].mxu0
    %v2654 = vadd.f32 %v2490, %v2653
    %v2655 = vpop.f32.mrb[0].mxu0
    %v2656 = vpop.f32.mrb[0].mxu0
    %2657 = vdwg.mxu0
    %2658 = vmatprep.subr.bf16.mxu0 %v1325
    %2659 = vmatpush1.bf16.msra.mxu0 %v1324
    %2660 = vmatprep.subr.bf16.mxu0 %v1333
    %2661 = vmatpush1.bf16.msra.mxu0 %v1332
    %2662 = vmatprep.subr.bf16.mxu0 %v1341
    %2663 = vmatpush1.bf16.msra.mxu0 %v1340
    %2664 = vmatprep.subr.bf16.mxu0 %v1349
    %2665 = vmatpush1.bf16.msra.mxu0 %v1348
    %2666 = vmatprep.subr.bf16.mxu0 %v1357
    %2667 = vmatpush1.bf16.msra.mxu0 %v1356
    %2668 = vmatprep.subr.bf16.mxu0 %v1365
    %2669 = vmatpush1.bf16.msra.mxu0 %v1364
    %2670 = vmatprep.subr.bf16.mxu0 %v1373
    %2671 = vmatpush1.bf16.msra.mxu0 %v1372
    %2672 = vmatprep.subr.bf16.mxu0 %v1381
    %2673 = vmatpush1.bf16.msra.mxu0 %v1380
    %2674 = vmatprep.subr.bf16.mxu0 0
    %2675 = vmatpush1.bf16.msra.mxu0 0
    %2676 = vmatprep.subr.bf16.mxu0 0
    %2677 = vmatpush1.bf16.msra.mxu0 0
    %2678 = vmatprep.subr.bf16.mxu0 0
    %2679 = vmatpush1.bf16.msra.mxu0 0
    %2680 = vmatprep.subr.bf16.mxu0 0
    %2681 = vmatpush1.bf16.msra.mxu0 0
    %2682 = vmatprep.subr.bf16.mxu0 0
    %2683 = vmatpush1.bf16.msra.mxu0 0
    %2684 = vmatprep.subr.bf16.mxu0 0
    %2685 = vmatpush1.bf16.msra.mxu0 0
    %2686 = vmatprep.subr.bf16.mxu0 0
    %2687 = vmatpush1.bf16.msra.mxu0 0
    %2688 = vmatprep.subr.bf16.mxu0 0
    %2689 = vmatpush1.bf16.msra.mxu0 0
    %2690 = vmatprep.mubr.bf16.mxu0 0
    %2691 = vmatmul.mubr.bf16.gmra.mrb[0].mxu0 %v2450
    %v2692 = vpop.f32.mrb[0].mxu0
    %v2693 = vadd.f32 %v2529, %v2692
    %v2694 = vpop.f32.mrb[0].mxu0
    %v2695 = vadd.f32 %v2531, %v2694
    %v2696 = vpop.f32.mrb[0].mxu0
    %v2697 = vpop.f32.mrb[0].mxu0
    %2698 = vdwg.mxu0
    %2699 = vmatprep.subr.bf16.mxu0 %v1327
    %2700 = vmatpush1.bf16.msra.mxu0 %v1326
    %2701 = vmatprep.subr.bf16.mxu0 %v1335
    %2702 = vmatpush1.bf16.msra.mxu0 %v1334
    %2703 = vmatprep.subr.bf16.mxu0 %v1343
    %2704 = vmatpush1.bf16.msra.mxu0 %v1342
    %2705 = vmatprep.subr.bf16.mxu0 %v1351
    %2706 = vmatpush1.bf16.msra.mxu0 %v1350
    %2707 = vmatprep.subr.bf16.mxu0 %v1359
    %2708 = vmatpush1.bf16.msra.mxu0 %v1358
    %2709 = vmatprep.subr.bf16.mxu0 %v1367
    %2710 = vmatpush1.bf16.msra.mxu0 %v1366
    %2711 = vmatprep.subr.bf16.mxu0 %v1375
    %2712 = vmatpush1.bf16.msra.mxu0 %v1374
    %2713 = vmatprep.subr.bf16.mxu0 %v1383
    %2714 = vmatpush1.bf16.msra.mxu0 %v1382
    %2715 = vmatprep.subr.bf16.mxu0 0
    %2716 = vmatpush1.bf16.msra.mxu0 0
    %2717 = vmatprep.subr.bf16.mxu0 0
    %2718 = vmatpush1.bf16.msra.mxu0 0
    %2719 = vmatprep.subr.bf16.mxu0 0
    %2720 = vmatpush1.bf16.msra.mxu0 0
    %2721 = vmatprep.subr.bf16.mxu0 0
    %2722 = vmatpush1.bf16.msra.mxu0 0
    %2723 = vmatprep.subr.bf16.mxu0 0
    %2724 = vmatpush1.bf16.msra.mxu0 0
    %2725 = vmatprep.subr.bf16.mxu0 0
    %2726 = vmatpush1.bf16.msra.mxu0 0
    %2727 = vmatprep.subr.bf16.mxu0 0
    %2728 = vmatpush1.bf16.msra.mxu0 0
    %2729 = vmatprep.subr.bf16.mxu0 0
    %2730 = vmatpush1.bf16.msra.mxu0 0
    %2731 = vmatprep.mubr.bf16.mxu0 0
    %2732 = vmatmul.mubr.bf16.gmra.mrb[0].mxu0 %v2450
    %v2733 = vpop.f32.mrb[0].mxu0
    %v2734 = vadd.f32 %v2570, %v2733
    %v2735 = vpop.f32.mrb[0].mxu0
    %v2736 = vadd.f32 %v2572, %v2735
    %v2737 = vpop.f32.mrb[0].mxu0
    %v2738 = vpop.f32.mrb[0].mxu0
    %2739 = vdwg.mxu0
    %2740 = vmatprep.subr.bf16.mxu0 %v1329
    %2741 = vmatpush1.bf16.msra.mxu0 %v1328
    %2742 = vmatprep.subr.bf16.mxu0 %v1337
    %2743 = vmatpush1.bf16.msra.mxu0 %v1336
    %2744 = vmatprep.subr.bf16.mxu0 %v1345
    %2745 = vmatpush1.bf16.msra.mxu0 %v1344
    %2746 = vmatprep.subr.bf16.mxu0 %v1353
    %2747 = vmatpush1.bf16.msra.mxu0 %v1352
    %2748 = vmatprep.subr.bf16.mxu0 %v1361
    %2749 = vmatpush1.bf16.msra.mxu0 %v1360
    %2750 = vmatprep.subr.bf16.mxu0 %v1369
    %2751 = vmatpush1.bf16.msra.mxu0 %v1368
    %2752 = vmatprep.subr.bf16.mxu0 %v1377
    %2753 = vmatpush1.bf16.msra.mxu0 %v1376
    %2754 = vmatprep.subr.bf16.mxu0 %v1385
    %2755 = vmatpush1.bf16.msra.mxu0 %v1384
    %2756 = vmatprep.subr.bf16.mxu0 0
    %2757 = vmatpush1.bf16.msra.mxu0 0
    %2758 = vmatprep.subr.bf16.mxu0 0
    %2759 = vmatpush1.bf16.msra.mxu0 0
    %2760 = vmatprep.subr.bf16.mxu0 0
    %2761 = vmatpush1.bf16.msra.mxu0 0
    %2762 = vmatprep.subr.bf16.mxu0 0
    %2763 = vmatpush1.bf16.msra.mxu0 0
    %2764 = vmatprep.subr.bf16.mxu0 0
    %2765 = vmatpush1.bf16.msra.mxu0 0
    %2766 = vmatprep.subr.bf16.mxu0 0
    %2767 = vmatpush1.bf16.msra.mxu0 0
    %2768 = vmatprep.subr.bf16.mxu0 0
    %2769 = vmatpush1.bf16.msra.mxu0 0
    %2770 = vmatprep.subr.bf16.mxu0 0
    %2771 = vmatpush1.bf16.msra.mxu0 0
    %2772 = vmatprep.mubr.bf16.mxu0 0
    %2773 = vmatmul.mubr.bf16.gmra.mrb[0].mxu0 %v2450
    %v2774 = vpop.f32.mrb[0].mxu0
    %v2775 = vadd.f32 %v2611, %v2774
    %v2776 = vpop.f32.mrb[0].mxu0
    %v2777 = vadd.f32 %v2613, %v2776
    %v2778 = vpop.f32.mrb[0].mxu0
    %v2779 = vpop.f32.mrb[0].mxu0
    %2780 = vdwg.mxu0
    %v2781 = vadd.f32 %v2652, %v279
    %v2782 = vadd.f32 %v2654, %v283
    %v2783 = vadd.f32 %v2693, %v287
    %v2784 = vadd.f32 %v2695, %v291
    %v2785 = vadd.f32 %v2734, %v295
    %v2786 = vadd.f32 %v2736, %v299
    %v2787 = vadd.f32 %v2775, %v303
    %v2788 = vadd.f32 %v2777, %v307
    %v2789 = vxor.u32 %v2781, 2147483648
    %v2790 = vmul.f32 %v2789, 1.442695
    %v2791 = vpow.pop %v2790
    %v2792 = vadd.f32 %v2791, 1.0
    %v2793 = vrcp.pop %v2792
    %v2794 = vmul.f32 1.0, %v2793
    %v2795 = vxor.u32 %v2782, 2147483648
    %v2796 = vmul.f32 %v2795, 1.442695
    %v2797 = vpow.pop %v2796
    %v2798 = vadd.f32 %v2797, 1.0
    %v2799 = vrcp.pop %v2798
    %v2800 = vmul.f32 1.0, %v2799
    %v2801 = vxor.u32 %v2783, 2147483648
    %v2802 = vmul.f32 %v2801, 1.442695
    %v2803 = vpow.pop %v2802
    %v2804 = vadd.f32 %v2803, 1.0
    %v2805 = vrcp.pop %v2804
    %v2806 = vmul.f32 1.0, %v2805
    %v2807 = vtanh.pop %v2784
    %v2808 = vxor.u32 %v2785, 2147483648
    %v2809 = vmul.f32 %v2808, 1.442695
    %v2810 = vpow.pop %v2809
    %v2811 = vadd.f32 %v2810, 1.0
    %v2812 = vrcp.pop %v2811
    %v2813 = vmul.f32 1.0, %v2812
    %v2814 = vxor.u32 %v2786, 2147483648
    %v2815 = vmul.f32 %v2814, 1.442695
    %v2816 = vpow.pop %v2815
    %v2817 = vadd.f32 %v2816, 1.0
    %v2818 = vrcp.pop %v2817
    %v2819 = vmul.f32 1.0, %v2818
    %v2820 = vxor.u32 %v2787, 2147483648
    %v2821 = vmul.f32 %v2820, 1.442695
    %v2822 = vpow.pop %v2821
    %v2823 = vadd.f32 %v2822, 1.0
    %v2824 = vrcp.pop %v2823
    %v2825 = vmul.f32 1.0, %v2824
    %v2826 = vtanh.pop %v2788
    %v2827 = vmul.f32 %v2441, %v321
    %v2828 = vmul.f32 %v2794, %v2827
    %v2829 = vmul.f32 %v2800, %v2807
    %v2830 = vadd.f32 %v2828, %v2829
    %v2831 = vtanh.pop %v2830
    %v2832 = vmul.f32 %v2806, %v2831
    %v2833 = vmul.f32 %v2813, %v2446
    %v2834 = vmul.f32 %v2819, %v2826
    %v2835 = vadd.f32 %v2833, %v2834
    %v2836 = vtanh.pop %v2835
    %v2837 = vmul.f32 %v2825, %v2836
    %s2838 = scalar_lea.vmem %s0, 16
    %v2839 = vld [vmem:[%s2838] sm:$0xf]
    %v2840 = vpack.c.bf16 %v2832, %v2832
    %v2841 = vpack.c.bf16 %v2837, %v2837
    %2842 = vmatprep.subr.bf16.mxu0 %v711
    %2843 = vmatpush1.bf16.msra.mxu0 %v710
    %2844 = vmatprep.subr.bf16.mxu0 %v719
    %2845 = vmatpush1.bf16.msra.mxu0 %v718
    %2846 = vmatprep.subr.bf16.mxu0 %v727
    %2847 = vmatpush1.bf16.msra.mxu0 %v726
    %2848 = vmatprep.subr.bf16.mxu0 %v735
    %2849 = vmatpush1.bf16.msra.mxu0 %v734
    %2850 = vmatprep.subr.bf16.mxu0 %v743
    %2851 = vmatpush1.bf16.msra.mxu0 %v742
    %2852 = vmatprep.subr.bf16.mxu0 %v751
    %2853 = vmatpush1.bf16.msra.mxu0 %v750
    %2854 = vmatprep.subr.bf16.mxu0 %v759
    %2855 = vmatpush1.bf16.msra.mxu0 %v758
    %2856 = vmatprep.subr.bf16.mxu0 %v767
    %2857 = vmatpush1.bf16.msra.mxu0 %v766
    %2858 = vmatprep.subr.bf16.mxu0 %v775
    %2859 = vmatpush1.bf16.msra.mxu0 %v774
    %2860 = vmatprep.subr.bf16.mxu0 %v783
    %2861 = vmatpush1.bf16.msra.mxu0 %v782
    %2862 = vmatprep.subr.bf16.mxu0 %v791
    %2863 = vmatpush1.bf16.msra.mxu0 %v790
    %2864 = vmatprep.subr.bf16.mxu0 %v799
    %2865 = vmatpush1.bf16.msra.mxu0 %v798
    %2866 = vmatprep.subr.bf16.mxu0 %v807
    %2867 = vmatpush1.bf16.msra.mxu0 %v806
    %2868 = vmatprep.subr.bf16.mxu0 %v815
    %2869 = vmatpush1.bf16.msra.mxu0 %v814
    %2870 = vmatprep.subr.bf16.mxu0 %v823
    %2871 = vmatpush1.bf16.msra.mxu0 %v822
    %2872 = vmatprep.subr.bf16.mxu0 %v831
    %2873 = vmatpush1.bf16.msra.mxu0 %v830
    %2874 = vmatprep.mubr.bf16.mxu0 %v2841
    %2875 = vmatmul.mubr.bf16.gmra.mrb[0].mxu0 %v2840
    %v2876 = vpop.f32.mrb[0].mxu0
    %v2877 = vadd.f32 0.0, %v2876
    %v2878 = vpop.f32.mrb[0].mxu0
    %v2879 = vadd.f32 0.0, %v2878
    %v2880 = vpop.f32.mrb[0].mxu0
    %v2881 = vpop.f32.mrb[0].mxu0
    %2882 = vdwg.mxu0
    %2883 = vmatprep.subr.bf16.mxu0 %v713
    %2884 = vmatpush1.bf16.msra.mxu0 %v712
    %2885 = vmatprep.subr.bf16.mxu0 %v721
    %2886 = vmatpush1.bf16.msra.mxu0 %v720
    %2887 = vmatprep.subr.bf16.mxu0 %v729
    %2888 = vmatpush1.bf16.msra.mxu0 %v728
    %2889 = vmatprep.subr.bf16.mxu0 %v737
    %2890 = vmatpush1.bf16.msra.mxu0 %v736
    %2891 = vmatprep.subr.bf16.mxu0 %v745
    %2892 = vmatpush1.bf16.msra.mxu0 %v744
    %2893 = vmatprep.subr.bf16.mxu0 %v753
    %2894 = vmatpush1.bf16.msra.mxu0 %v752
    %2895 = vmatprep.subr.bf16.mxu0 %v761
    %2896 = vmatpush1.bf16.msra.mxu0 %v760
    %2897 = vmatprep.subr.bf16.mxu0 %v769
    %2898 = vmatpush1.bf16.msra.mxu0 %v768
    %2899 = vmatprep.subr.bf16.mxu0 %v777
    %2900 = vmatpush1.bf16.msra.mxu0 %v776
    %2901 = vmatprep.subr.bf16.mxu0 %v785
    %2902 = vmatpush1.bf16.msra.mxu0 %v784
    %2903 = vmatprep.subr.bf16.mxu0 %v793
    %2904 = vmatpush1.bf16.msra.mxu0 %v792
    %2905 = vmatprep.subr.bf16.mxu0 %v801
    %2906 = vmatpush1.bf16.msra.mxu0 %v800
    %2907 = vmatprep.subr.bf16.mxu0 %v809
    %2908 = vmatpush1.bf16.msra.mxu0 %v808
    %2909 = vmatprep.subr.bf16.mxu0 %v817
    %2910 = vmatpush1.bf16.msra.mxu0 %v816
    %2911 = vmatprep.subr.bf16.mxu0 %v825
    %2912 = vmatpush1.bf16.msra.mxu0 %v824
    %2913 = vmatprep.subr.bf16.mxu0 %v833
    %2914 = vmatpush1.bf16.msra.mxu0 %v832
    %2915 = vmatprep.mubr.bf16.mxu0 %v2841
    %2916 = vmatmul.mubr.bf16.gmra.mrb[0].mxu0 %v2840
    %v2917 = vpop.f32.mrb[0].mxu0
    %v2918 = vadd.f32 0.0, %v2917
    %v2919 = vpop.f32.mrb[0].mxu0
    %v2920 = vadd.f32 0.0, %v2919
    %v2921 = vpop.f32.mrb[0].mxu0
    %v2922 = vpop.f32.mrb[0].mxu0
    %2923 = vdwg.mxu0
    %2924 = vmatprep.subr.bf16.mxu0 %v715
    %2925 = vmatpush1.bf16.msra.mxu0 %v714
    %2926 = vmatprep.subr.bf16.mxu0 %v723
    %2927 = vmatpush1.bf16.msra.mxu0 %v722
    %2928 = vmatprep.subr.bf16.mxu0 %v731
    %2929 = vmatpush1.bf16.msra.mxu0 %v730
    %2930 = vmatprep.subr.bf16.mxu0 %v739
    %2931 = vmatpush1.bf16.msra.mxu0 %v738
    %2932 = vmatprep.subr.bf16.mxu0 %v747
    %2933 = vmatpush1.bf16.msra.mxu0 %v746
    %2934 = vmatprep.subr.bf16.mxu0 %v755
    %2935 = vmatpush1.bf16.msra.mxu0 %v754
    %2936 = vmatprep.subr.bf16.mxu0 %v763
    %2937 = vmatpush1.bf16.msra.mxu0 %v762
    %2938 = vmatprep.subr.bf16.mxu0 %v771
    %2939 = vmatpush1.bf16.msra.mxu0 %v770
    %2940 = vmatprep.subr.bf16.mxu0 %v779
    %2941 = vmatpush1.bf16.msra.mxu0 %v778
    %2942 = vmatprep.subr.bf16.mxu0 %v787
    %2943 = vmatpush1.bf16.msra.mxu0 %v786
    %2944 = vmatprep.subr.bf16.mxu0 %v795
    %2945 = vmatpush1.bf16.msra.mxu0 %v794
    %2946 = vmatprep.subr.bf16.mxu0 %v803
    %2947 = vmatpush1.bf16.msra.mxu0 %v802
    %2948 = vmatprep.subr.bf16.mxu0 %v811
    %2949 = vmatpush1.bf16.msra.mxu0 %v810
    %2950 = vmatprep.subr.bf16.mxu0 %v819
    %2951 = vmatpush1.bf16.msra.mxu0 %v818
    %2952 = vmatprep.subr.bf16.mxu0 %v827
    %2953 = vmatpush1.bf16.msra.mxu0 %v826
    %2954 = vmatprep.subr.bf16.mxu0 %v835
    %2955 = vmatpush1.bf16.msra.mxu0 %v834
    %2956 = vmatprep.mubr.bf16.mxu0 %v2841
    %2957 = vmatmul.mubr.bf16.gmra.mrb[0].mxu0 %v2840
    %v2958 = vpop.f32.mrb[0].mxu0
    %v2959 = vadd.f32 0.0, %v2958
    %v2960 = vpop.f32.mrb[0].mxu0
    %v2961 = vadd.f32 0.0, %v2960
    %v2962 = vpop.f32.mrb[0].mxu0
    %v2963 = vpop.f32.mrb[0].mxu0
    %2964 = vdwg.mxu0
    %2965 = vmatprep.subr.bf16.mxu0 %v717
    %2966 = vmatpush1.bf16.msra.mxu0 %v716
    %2967 = vmatprep.subr.bf16.mxu0 %v725
    %2968 = vmatpush1.bf16.msra.mxu0 %v724
    %2969 = vmatprep.subr.bf16.mxu0 %v733
    %2970 = vmatpush1.bf16.msra.mxu0 %v732
    %2971 = vmatprep.subr.bf16.mxu0 %v741
    %2972 = vmatpush1.bf16.msra.mxu0 %v740
    %2973 = vmatprep.subr.bf16.mxu0 %v749
    %2974 = vmatpush1.bf16.msra.mxu0 %v748
    %2975 = vmatprep.subr.bf16.mxu0 %v757
    %2976 = vmatpush1.bf16.msra.mxu0 %v756
    %2977 = vmatprep.subr.bf16.mxu0 %v765
    %2978 = vmatpush1.bf16.msra.mxu0 %v764
    %2979 = vmatprep.subr.bf16.mxu0 %v773
    %2980 = vmatpush1.bf16.msra.mxu0 %v772
    %2981 = vmatprep.subr.bf16.mxu0 %v781
    %2982 = vmatpush1.bf16.msra.mxu0 %v780
    %2983 = vmatprep.subr.bf16.mxu0 %v789
    %2984 = vmatpush1.bf16.msra.mxu0 %v788
    %2985 = vmatprep.subr.bf16.mxu0 %v797
    %2986 = vmatpush1.bf16.msra.mxu0 %v796
    %2987 = vmatprep.subr.bf16.mxu0 %v805
    %2988 = vmatpush1.bf16.msra.mxu0 %v804
    %2989 = vmatprep.subr.bf16.mxu0 %v813
    %2990 = vmatpush1.bf16.msra.mxu0 %v812
    %2991 = vmatprep.subr.bf16.mxu0 %v821
    %2992 = vmatpush1.bf16.msra.mxu0 %v820
    %2993 = vmatprep.subr.bf16.mxu0 %v829
    %2994 = vmatpush1.bf16.msra.mxu0 %v828
    %2995 = vmatprep.subr.bf16.mxu0 %v837
    %2996 = vmatpush1.bf16.msra.mxu0 %v836
    %2997 = vmatprep.mubr.bf16.mxu0 %v2841
    %2998 = vmatmul.mubr.bf16.gmra.mrb[0].mxu0 %v2840
    %v2999 = vpop.f32.mrb[0].mxu0
    %v3000 = vadd.f32 0.0, %v2999
    %v3001 = vpop.f32.mrb[0].mxu0
    %v3002 = vadd.f32 0.0, %v3001
    %v3003 = vpop.f32.mrb[0].mxu0
    %v3004 = vpop.f32.mrb[0].mxu0
    %3005 = vdwg.mxu0
    %3006 = vmatprep.subr.bf16.mxu0 %v1323
    %3007 = vmatpush1.bf16.msra.mxu0 %v1322
    %3008 = vmatprep.subr.bf16.mxu0 %v1331
    %3009 = vmatpush1.bf16.msra.mxu0 %v1330
    %3010 = vmatprep.subr.bf16.mxu0 %v1339
    %3011 = vmatpush1.bf16.msra.mxu0 %v1338
    %3012 = vmatprep.subr.bf16.mxu0 %v1347
    %3013 = vmatpush1.bf16.msra.mxu0 %v1346
    %3014 = vmatprep.subr.bf16.mxu0 %v1355
    %3015 = vmatpush1.bf16.msra.mxu0 %v1354
    %3016 = vmatprep.subr.bf16.mxu0 %v1363
    %3017 = vmatpush1.bf16.msra.mxu0 %v1362
    %3018 = vmatprep.subr.bf16.mxu0 %v1371
    %3019 = vmatpush1.bf16.msra.mxu0 %v1370
    %3020 = vmatprep.subr.bf16.mxu0 %v1379
    %3021 = vmatpush1.bf16.msra.mxu0 %v1378
    %3022 = vmatprep.subr.bf16.mxu0 0
    %3023 = vmatpush1.bf16.msra.mxu0 0
    %3024 = vmatprep.subr.bf16.mxu0 0
    %3025 = vmatpush1.bf16.msra.mxu0 0
    %3026 = vmatprep.subr.bf16.mxu0 0
    %3027 = vmatpush1.bf16.msra.mxu0 0
    %3028 = vmatprep.subr.bf16.mxu0 0
    %3029 = vmatpush1.bf16.msra.mxu0 0
    %3030 = vmatprep.subr.bf16.mxu0 0
    %3031 = vmatpush1.bf16.msra.mxu0 0
    %3032 = vmatprep.subr.bf16.mxu0 0
    %3033 = vmatpush1.bf16.msra.mxu0 0
    %3034 = vmatprep.subr.bf16.mxu0 0
    %3035 = vmatpush1.bf16.msra.mxu0 0
    %3036 = vmatprep.subr.bf16.mxu0 0
    %3037 = vmatpush1.bf16.msra.mxu0 0
    %3038 = vmatprep.mubr.bf16.mxu0 0
    %3039 = vmatmul.mubr.bf16.gmra.mrb[0].mxu0 %v2839
    %v3040 = vpop.f32.mrb[0].mxu0
    %v3041 = vadd.f32 %v2877, %v3040
    %v3042 = vpop.f32.mrb[0].mxu0
    %v3043 = vadd.f32 %v2879, %v3042
    %v3044 = vpop.f32.mrb[0].mxu0
    %v3045 = vpop.f32.mrb[0].mxu0
    %3046 = vdwg.mxu0
    %3047 = vmatprep.subr.bf16.mxu0 %v1325
    %3048 = vmatpush1.bf16.msra.mxu0 %v1324
    %3049 = vmatprep.subr.bf16.mxu0 %v1333
    %3050 = vmatpush1.bf16.msra.mxu0 %v1332
    %3051 = vmatprep.subr.bf16.mxu0 %v1341
    %3052 = vmatpush1.bf16.msra.mxu0 %v1340
    %3053 = vmatprep.subr.bf16.mxu0 %v1349
    %3054 = vmatpush1.bf16.msra.mxu0 %v1348
    %3055 = vmatprep.subr.bf16.mxu0 %v1357
    %3056 = vmatpush1.bf16.msra.mxu0 %v1356
    %3057 = vmatprep.subr.bf16.mxu0 %v1365
    %3058 = vmatpush1.bf16.msra.mxu0 %v1364
    %3059 = vmatprep.subr.bf16.mxu0 %v1373
    %3060 = vmatpush1.bf16.msra.mxu0 %v1372
    %3061 = vmatprep.subr.bf16.mxu0 %v1381
    %3062 = vmatpush1.bf16.msra.mxu0 %v1380
    %3063 = vmatprep.subr.bf16.mxu0 0
    %3064 = vmatpush1.bf16.msra.mxu0 0
    %3065 = vmatprep.subr.bf16.mxu0 0
    %3066 = vmatpush1.bf16.msra.mxu0 0
    %3067 = vmatprep.subr.bf16.mxu0 0
    %3068 = vmatpush1.bf16.msra.mxu0 0
    %3069 = vmatprep.subr.bf16.mxu0 0
    %3070 = vmatpush1.bf16.msra.mxu0 0
    %3071 = vmatprep.subr.bf16.mxu0 0
    %3072 = vmatpush1.bf16.msra.mxu0 0
    %3073 = vmatprep.subr.bf16.mxu0 0
    %3074 = vmatpush1.bf16.msra.mxu0 0
    %3075 = vmatprep.subr.bf16.mxu0 0
    %3076 = vmatpush1.bf16.msra.mxu0 0
    %3077 = vmatprep.subr.bf16.mxu0 0
    %3078 = vmatpush1.bf16.msra.mxu0 0
    %3079 = vmatprep.mubr.bf16.mxu0 0
    %3080 = vmatmul.mubr.bf16.gmra.mrb[0].mxu0 %v2839
    %v3081 = vpop.f32.mrb[0].mxu0
    %v3082 = vadd.f32 %v2918, %v3081
    %v3083 = vpop.f32.mrb[0].mxu0
    %v3084 = vadd.f32 %v2920, %v3083
    %v3085 = vpop.f32.mrb[0].mxu0
    %v3086 = vpop.f32.mrb[0].mxu0
    %3087 = vdwg.mxu0
    %3088 = vmatprep.subr.bf16.mxu0 %v1327
    %3089 = vmatpush1.bf16.msra.mxu0 %v1326
    %3090 = vmatprep.subr.bf16.mxu0 %v1335
    %3091 = vmatpush1.bf16.msra.mxu0 %v1334
    %3092 = vmatprep.subr.bf16.mxu0 %v1343
    %3093 = vmatpush1.bf16.msra.mxu0 %v1342
    %3094 = vmatprep.subr.bf16.mxu0 %v1351
    %3095 = vmatpush1.bf16.msra.mxu0 %v1350
    %3096 = vmatprep.subr.bf16.mxu0 %v1359
    %3097 = vmatpush1.bf16.msra.mxu0 %v1358
    %3098 = vmatprep.subr.bf16.mxu0 %v1367
    %3099 = vmatpush1.bf16.msra.mxu0 %v1366
    %3100 = vmatprep.subr.bf16.mxu0 %v1375
    %3101 = vmatpush1.bf16.msra.mxu0 %v1374
    %3102 = vmatprep.subr.bf16.mxu0 %v1383
    %3103 = vmatpush1.bf16.msra.mxu0 %v1382
    %3104 = vmatprep.subr.bf16.mxu0 0
    %3105 = vmatpush1.bf16.msra.mxu0 0
    %3106 = vmatprep.subr.bf16.mxu0 0
    %3107 = vmatpush1.bf16.msra.mxu0 0
    %3108 = vmatprep.subr.bf16.mxu0 0
    %3109 = vmatpush1.bf16.msra.mxu0 0
    %3110 = vmatprep.subr.bf16.mxu0 0
    %3111 = vmatpush1.bf16.msra.mxu0 0
    %3112 = vmatprep.subr.bf16.mxu0 0
    %3113 = vmatpush1.bf16.msra.mxu0 0
    %3114 = vmatprep.subr.bf16.mxu0 0
    %3115 = vmatpush1.bf16.msra.mxu0 0
    %3116 = vmatprep.subr.bf16.mxu0 0
    %3117 = vmatpush1.bf16.msra.mxu0 0
    %3118 = vmatprep.subr.bf16.mxu0 0
    %3119 = vmatpush1.bf16.msra.mxu0 0
    %3120 = vmatprep.mubr.bf16.mxu0 0
    %3121 = vmatmul.mubr.bf16.gmra.mrb[0].mxu0 %v2839
    %v3122 = vpop.f32.mrb[0].mxu0
    %v3123 = vadd.f32 %v2959, %v3122
    %v3124 = vpop.f32.mrb[0].mxu0
    %v3125 = vadd.f32 %v2961, %v3124
    %v3126 = vpop.f32.mrb[0].mxu0
    %v3127 = vpop.f32.mrb[0].mxu0
    %3128 = vdwg.mxu0
    %3129 = vmatprep.subr.bf16.mxu0 %v1329
    %3130 = vmatpush1.bf16.msra.mxu0 %v1328
    %3131 = vmatprep.subr.bf16.mxu0 %v1337
    %3132 = vmatpush1.bf16.msra.mxu0 %v1336
    %3133 = vmatprep.subr.bf16.mxu0 %v1345
    %3134 = vmatpush1.bf16.msra.mxu0 %v1344
    %3135 = vmatprep.subr.bf16.mxu0 %v1353
    %3136 = vmatpush1.bf16.msra.mxu0 %v1352
    %3137 = vmatprep.subr.bf16.mxu0 %v1361
    %3138 = vmatpush1.bf16.msra.mxu0 %v1360
    %3139 = vmatprep.subr.bf16.mxu0 %v1369
    %3140 = vmatpush1.bf16.msra.mxu0 %v1368
    %3141 = vmatprep.subr.bf16.mxu0 %v1377
    %3142 = vmatpush1.bf16.msra.mxu0 %v1376
    %3143 = vmatprep.subr.bf16.mxu0 %v1385
    %3144 = vmatpush1.bf16.msra.mxu0 %v1384
    %3145 = vmatprep.subr.bf16.mxu0 0
    %3146 = vmatpush1.bf16.msra.mxu0 0
    %3147 = vmatprep.subr.bf16.mxu0 0
    %3148 = vmatpush1.bf16.msra.mxu0 0
    %3149 = vmatprep.subr.bf16.mxu0 0
    %3150 = vmatpush1.bf16.msra.mxu0 0
    %3151 = vmatprep.subr.bf16.mxu0 0
    %3152 = vmatpush1.bf16.msra.mxu0 0
    %3153 = vmatprep.subr.bf16.mxu0 0
    %3154 = vmatpush1.bf16.msra.mxu0 0
    %3155 = vmatprep.subr.bf16.mxu0 0
    %3156 = vmatpush1.bf16.msra.mxu0 0
    %3157 = vmatprep.subr.bf16.mxu0 0
    %3158 = vmatpush1.bf16.msra.mxu0 0
    %3159 = vmatprep.subr.bf16.mxu0 0
    %3160 = vmatpush1.bf16.msra.mxu0 0
    %3161 = vmatprep.mubr.bf16.mxu0 0
    %3162 = vmatmul.mubr.bf16.gmra.mrb[0].mxu0 %v2839
    %v3163 = vpop.f32.mrb[0].mxu0
    %v3164 = vadd.f32 %v3000, %v3163
    %v3165 = vpop.f32.mrb[0].mxu0
    %v3166 = vadd.f32 %v3002, %v3165
    %v3167 = vpop.f32.mrb[0].mxu0
    %v3168 = vpop.f32.mrb[0].mxu0
    %3169 = vdwg.mxu0
    %v3170 = vadd.f32 %v3041, %v279
    %v3171 = vadd.f32 %v3043, %v283
    %v3172 = vadd.f32 %v3082, %v287
    %v3173 = vadd.f32 %v3084, %v291
    %v3174 = vadd.f32 %v3123, %v295
    %v3175 = vadd.f32 %v3125, %v299
    %v3176 = vadd.f32 %v3164, %v303
    %v3177 = vadd.f32 %v3166, %v307
    %v3178 = vxor.u32 %v3170, 2147483648
    %v3179 = vmul.f32 %v3178, 1.442695
    %v3180 = vpow.pop %v3179
    %v3181 = vadd.f32 %v3180, 1.0
    %v3182 = vrcp.pop %v3181
    %v3183 = vmul.f32 1.0, %v3182
    %v3184 = vxor.u32 %v3171, 2147483648
    %v3185 = vmul.f32 %v3184, 1.442695
    %v3186 = vpow.pop %v3185
    %v3187 = vadd.f32 %v3186, 1.0
    %v3188 = vrcp.pop %v3187
    %v3189 = vmul.f32 1.0, %v3188
    %v3190 = vxor.u32 %v3172, 2147483648
    %v3191 = vmul.f32 %v3190, 1.442695
    %v3192 = vpow.pop %v3191
    %v3193 = vadd.f32 %v3192, 1.0
    %v3194 = vrcp.pop %v3193
    %v3195 = vmul.f32 1.0, %v3194
    %v3196 = vtanh.pop %v3173
    %v3197 = vxor.u32 %v3174, 2147483648
    %v3198 = vmul.f32 %v3197, 1.442695
    %v3199 = vpow.pop %v3198
    %v3200 = vadd.f32 %v3199, 1.0
    %v3201 = vrcp.pop %v3200
    %v3202 = vmul.f32 1.0, %v3201
    %v3203 = vxor.u32 %v3175, 2147483648
    %v3204 = vmul.f32 %v3203, 1.442695
    %v3205 = vpow.pop %v3204
    %v3206 = vadd.f32 %v3205, 1.0
    %v3207 = vrcp.pop %v3206
    %v3208 = vmul.f32 1.0, %v3207
    %v3209 = vxor.u32 %v3176, 2147483648
    %v3210 = vmul.f32 %v3209, 1.442695
    %v3211 = vpow.pop %v3210
    %v3212 = vadd.f32 %v3211, 1.0
    %v3213 = vrcp.pop %v3212
    %v3214 = vmul.f32 1.0, %v3213
    %v3215 = vtanh.pop %v3177
    %v3216 = vmul.f32 %v2830, %v321
    %v3217 = vmul.f32 %v3183, %v3216
    %v3218 = vmul.f32 %v3189, %v3196
    %v3219 = vadd.f32 %v3217, %v3218
    %v3220 = vtanh.pop %v3219
    %v3221 = vmul.f32 %v3195, %v3220
    %v3222 = vmul.f32 %v3202, %v2835
    %v3223 = vmul.f32 %v3208, %v3215
    %v3224 = vadd.f32 %v3222, %v3223
    %v3225 = vtanh.pop %v3224
    %v3226 = vmul.f32 %v3214, %v3225
    %s3227 = scalar_lea.vmem %s0, 20
    %v3228 = vld [vmem:[%s3227] sm:$0xf]
    %v3229 = vpack.c.bf16 %v3221, %v3221
    %v3230 = vpack.c.bf16 %v3226, %v3226
    %3231 = vmatprep.subr.bf16.mxu0 %v711
    %3232 = vmatpush1.bf16.msra.mxu0 %v710
    %3233 = vmatprep.subr.bf16.mxu0 %v719
    %3234 = vmatpush1.bf16.msra.mxu0 %v718
    %3235 = vmatprep.subr.bf16.mxu0 %v727
    %3236 = vmatpush1.bf16.msra.mxu0 %v726
    %3237 = vmatprep.subr.bf16.mxu0 %v735
    %3238 = vmatpush1.bf16.msra.mxu0 %v734
    %3239 = vmatprep.subr.bf16.mxu0 %v743
    %3240 = vmatpush1.bf16.msra.mxu0 %v742
    %3241 = vmatprep.subr.bf16.mxu0 %v751
    %3242 = vmatpush1.bf16.msra.mxu0 %v750
    %3243 = vmatprep.subr.bf16.mxu0 %v759
    %3244 = vmatpush1.bf16.msra.mxu0 %v758
    %3245 = vmatprep.subr.bf16.mxu0 %v767
    %3246 = vmatpush1.bf16.msra.mxu0 %v766
    %3247 = vmatprep.subr.bf16.mxu0 %v775
    %3248 = vmatpush1.bf16.msra.mxu0 %v774
    %3249 = vmatprep.subr.bf16.mxu0 %v783
    %3250 = vmatpush1.bf16.msra.mxu0 %v782
    %3251 = vmatprep.subr.bf16.mxu0 %v791
    %3252 = vmatpush1.bf16.msra.mxu0 %v790
    %3253 = vmatprep.subr.bf16.mxu0 %v799
    %3254 = vmatpush1.bf16.msra.mxu0 %v798
    %3255 = vmatprep.subr.bf16.mxu0 %v807
    %3256 = vmatpush1.bf16.msra.mxu0 %v806
    %3257 = vmatprep.subr.bf16.mxu0 %v815
    %3258 = vmatpush1.bf16.msra.mxu0 %v814
    %3259 = vmatprep.subr.bf16.mxu0 %v823
    %3260 = vmatpush1.bf16.msra.mxu0 %v822
    %3261 = vmatprep.subr.bf16.mxu0 %v831
    %3262 = vmatpush1.bf16.msra.mxu0 %v830
    %3263 = vmatprep.mubr.bf16.mxu0 %v3230
    %3264 = vmatmul.mubr.bf16.gmra.mrb[0].mxu0 %v3229
    %v3265 = vpop.f32.mrb[0].mxu0
    %v3266 = vadd.f32 0.0, %v3265
    %v3267 = vpop.f32.mrb[0].mxu0
    %v3268 = vadd.f32 0.0, %v3267
    %v3269 = vpop.f32.mrb[0].mxu0
    %v3270 = vpop.f32.mrb[0].mxu0
    %3271 = vdwg.mxu0
    %3272 = vmatprep.subr.bf16.mxu0 %v713
    %3273 = vmatpush1.bf16.msra.mxu0 %v712
    %3274 = vmatprep.subr.bf16.mxu0 %v721
    %3275 = vmatpush1.bf16.msra.mxu0 %v720
    %3276 = vmatprep.subr.bf16.mxu0 %v729
    %3277 = vmatpush1.bf16.msra.mxu0 %v728
    %3278 = vmatprep.subr.bf16.mxu0 %v737
    %3279 = vmatpush1.bf16.msra.mxu0 %v736
    %3280 = vmatprep.subr.bf16.mxu0 %v745
    %3281 = vmatpush1.bf16.msra.mxu0 %v744
    %3282 = vmatprep.subr.bf16.mxu0 %v753
    %3283 = vmatpush1.bf16.msra.mxu0 %v752
    %3284 = vmatprep.subr.bf16.mxu0 %v761
    %3285 = vmatpush1.bf16.msra.mxu0 %v760
    %3286 = vmatprep.subr.bf16.mxu0 %v769
    %3287 = vmatpush1.bf16.msra.mxu0 %v768
    %3288 = vmatprep.subr.bf16.mxu0 %v777
    %3289 = vmatpush1.bf16.msra.mxu0 %v776
    %3290 = vmatprep.subr.bf16.mxu0 %v785
    %3291 = vmatpush1.bf16.msra.mxu0 %v784
    %3292 = vmatprep.subr.bf16.mxu0 %v793
    %3293 = vmatpush1.bf16.msra.mxu0 %v792
    %3294 = vmatprep.subr.bf16.mxu0 %v801
    %3295 = vmatpush1.bf16.msra.mxu0 %v800
    %3296 = vmatprep.subr.bf16.mxu0 %v809
    %3297 = vmatpush1.bf16.msra.mxu0 %v808
    %3298 = vmatprep.subr.bf16.mxu0 %v817
    %3299 = vmatpush1.bf16.msra.mxu0 %v816
    %3300 = vmatprep.subr.bf16.mxu0 %v825
    %3301 = vmatpush1.bf16.msra.mxu0 %v824
    %3302 = vmatprep.subr.bf16.mxu0 %v833
    %3303 = vmatpush1.bf16.msra.mxu0 %v832
    %3304 = vmatprep.mubr.bf16.mxu0 %v3230
    %3305 = vmatmul.mubr.bf16.gmra.mrb[0].mxu0 %v3229
    %v3306 = vpop.f32.mrb[0].mxu0
    %v3307 = vadd.f32 0.0, %v3306
    %v3308 = vpop.f32.mrb[0].mxu0
    %v3309 = vadd.f32 0.0, %v3308
    %v3310 = vpop.f32.mrb[0].mxu0
    %v3311 = vpop.f32.mrb[0].mxu0
    %3312 = vdwg.mxu0
    %3313 = vmatprep.subr.bf16.mxu0 %v715
    %3314 = vmatpush1.bf16.msra.mxu0 %v714
    %3315 = vmatprep.subr.bf16.mxu0 %v723
    %3316 = vmatpush1.bf16.msra.mxu0 %v722
    %3317 = vmatprep.subr.bf16.mxu0 %v731
    %3318 = vmatpush1.bf16.msra.mxu0 %v730
    %3319 = vmatprep.subr.bf16.mxu0 %v739
    %3320 = vmatpush1.bf16.msra.mxu0 %v738
    %3321 = vmatprep.subr.bf16.mxu0 %v747
    %3322 = vmatpush1.bf16.msra.mxu0 %v746
    %3323 = vmatprep.subr.bf16.mxu0 %v755
    %3324 = vmatpush1.bf16.msra.mxu0 %v754
    %3325 = vmatprep.subr.bf16.mxu0 %v763
    %3326 = vmatpush1.bf16.msra.mxu0 %v762
    %3327 = vmatprep.subr.bf16.mxu0 %v771
    %3328 = vmatpush1.bf16.msra.mxu0 %v770
    %3329 = vmatprep.subr.bf16.mxu0 %v779
    %3330 = vmatpush1.bf16.msra.mxu0 %v778
    %3331 = vmatprep.subr.bf16.mxu0 %v787
    %3332 = vmatpush1.bf16.msra.mxu0 %v786
    %3333 = vmatprep.subr.bf16.mxu0 %v795
    %3334 = vmatpush1.bf16.msra.mxu0 %v794
    %3335 = vmatprep.subr.bf16.mxu0 %v803
    %3336 = vmatpush1.bf16.msra.mxu0 %v802
    %3337 = vmatprep.subr.bf16.mxu0 %v811
    %3338 = vmatpush1.bf16.msra.mxu0 %v810
    %3339 = vmatprep.subr.bf16.mxu0 %v819
    %3340 = vmatpush1.bf16.msra.mxu0 %v818
    %3341 = vmatprep.subr.bf16.mxu0 %v827
    %3342 = vmatpush1.bf16.msra.mxu0 %v826
    %3343 = vmatprep.subr.bf16.mxu0 %v835
    %3344 = vmatpush1.bf16.msra.mxu0 %v834
    %3345 = vmatprep.mubr.bf16.mxu0 %v3230
    %3346 = vmatmul.mubr.bf16.gmra.mrb[0].mxu0 %v3229
    %v3347 = vpop.f32.mrb[0].mxu0
    %v3348 = vadd.f32 0.0, %v3347
    %v3349 = vpop.f32.mrb[0].mxu0
    %v3350 = vadd.f32 0.0, %v3349
    %v3351 = vpop.f32.mrb[0].mxu0
    %v3352 = vpop.f32.mrb[0].mxu0
    %3353 = vdwg.mxu0
    %3354 = vmatprep.subr.bf16.mxu0 %v717
    %3355 = vmatpush1.bf16.msra.mxu0 %v716
    %3356 = vmatprep.subr.bf16.mxu0 %v725
    %3357 = vmatpush1.bf16.msra.mxu0 %v724
    %3358 = vmatprep.subr.bf16.mxu0 %v733
    %3359 = vmatpush1.bf16.msra.mxu0 %v732
    %3360 = vmatprep.subr.bf16.mxu0 %v741
    %3361 = vmatpush1.bf16.msra.mxu0 %v740
    %3362 = vmatprep.subr.bf16.mxu0 %v749
    %3363 = vmatpush1.bf16.msra.mxu0 %v748
    %3364 = vmatprep.subr.bf16.mxu0 %v757
    %3365 = vmatpush1.bf16.msra.mxu0 %v756
    %3366 = vmatprep.subr.bf16.mxu0 %v765
    %3367 = vmatpush1.bf16.msra.mxu0 %v764
    %3368 = vmatprep.subr.bf16.mxu0 %v773
    %3369 = vmatpush1.bf16.msra.mxu0 %v772
    %3370 = vmatprep.subr.bf16.mxu0 %v781
    %3371 = vmatpush1.bf16.msra.mxu0 %v780
    %3372 = vmatprep.subr.bf16.mxu0 %v789
    %3373 = vmatpush1.bf16.msra.mxu0 %v788
    %3374 = vmatprep.subr.bf16.mxu0 %v797
    %3375 = vmatpush1.bf16.msra.mxu0 %v796
    %3376 = vmatprep.subr.bf16.mxu0 %v805
    %3377 = vmatpush1.bf16.msra.mxu0 %v804
    %3378 = vmatprep.subr.bf16.mxu0 %v813
    %3379 = vmatpush1.bf16.msra.mxu0 %v812
    %3380 = vmatprep.subr.bf16.mxu0 %v821
    %3381 = vmatpush1.bf16.msra.mxu0 %v820
    %3382 = vmatprep.subr.bf16.mxu0 %v829
    %3383 = vmatpush1.bf16.msra.mxu0 %v828
    %3384 = vmatprep.subr.bf16.mxu0 %v837
    %3385 = vmatpush1.bf16.msra.mxu0 %v836
    %3386 = vmatprep.mubr.bf16.mxu0 %v3230
    %3387 = vmatmul.mubr.bf16.gmra.mrb[0].mxu0 %v3229
    %v3388 = vpop.f32.mrb[0].mxu0
    %v3389 = vadd.f32 0.0, %v3388
    %v3390 = vpop.f32.mrb[0].mxu0
    %v3391 = vadd.f32 0.0, %v3390
    %v3392 = vpop.f32.mrb[0].mxu0
    %v3393 = vpop.f32.mrb[0].mxu0
    %3394 = vdwg.mxu0
    %3395 = vmatprep.subr.bf16.mxu0 %v1323
    %3396 = vmatpush1.bf16.msra.mxu0 %v1322
    %3397 = vmatprep.subr.bf16.mxu0 %v1331
    %3398 = vmatpush1.bf16.msra.mxu0 %v1330
    %3399 = vmatprep.subr.bf16.mxu0 %v1339
    %3400 = vmatpush1.bf16.msra.mxu0 %v1338
    %3401 = vmatprep.subr.bf16.mxu0 %v1347
    %3402 = vmatpush1.bf16.msra.mxu0 %v1346
    %3403 = vmatprep.subr.bf16.mxu0 %v1355
    %3404 = vmatpush1.bf16.msra.mxu0 %v1354
    %3405 = vmatprep.subr.bf16.mxu0 %v1363
    %3406 = vmatpush1.bf16.msra.mxu0 %v1362
    %3407 = vmatprep.subr.bf16.mxu0 %v1371
    %3408 = vmatpush1.bf16.msra.mxu0 %v1370
    %3409 = vmatprep.subr.bf16.mxu0 %v1379
    %3410 = vmatpush1.bf16.msra.mxu0 %v1378
    %3411 = vmatprep.subr.bf16.mxu0 0
    %3412 = vmatpush1.bf16.msra.mxu0 0
    %3413 = vmatprep.subr.bf16.mxu0 0
    %3414 = vmatpush1.bf16.msra.mxu0 0
    %3415 = vmatprep.subr.bf16.mxu0 0
    %3416 = vmatpush1.bf16.msra.mxu0 0
    %3417 = vmatprep.subr.bf16.mxu0 0
    %3418 = vmatpush1.bf16.msra.mxu0 0
    %3419 = vmatprep.subr.bf16.mxu0 0
    %3420 = vmatpush1.bf16.msra.mxu0 0
    %3421 = vmatprep.subr.bf16.mxu0 0
    %3422 = vmatpush1.bf16.msra.mxu0 0
    %3423 = vmatprep.subr.bf16.mxu0 0
    %3424 = vmatpush1.bf16.msra.mxu0 0
    %3425 = vmatprep.subr.bf16.mxu0 0
    %3426 = vmatpush1.bf16.msra.mxu0 0
    %3427 = vmatprep.mubr.bf16.mxu0 0
    %3428 = vmatmul.mubr.bf16.gmra.mrb[0].mxu0 %v3228
    %v3429 = vpop.f32.mrb[0].mxu0
    %v3430 = vadd.f32 %v3266, %v3429
    %v3431 = vpop.f32.mrb[0].mxu0
    %v3432 = vadd.f32 %v3268, %v3431
    %v3433 = vpop.f32.mrb[0].mxu0
    %v3434 = vpop.f32.mrb[0].mxu0
    %3435 = vdwg.mxu0
    %3436 = vmatprep.subr.bf16.mxu0 %v1325
    %3437 = vmatpush1.bf16.msra.mxu0 %v1324
    %3438 = vmatprep.subr.bf16.mxu0 %v1333
    %3439 = vmatpush1.bf16.msra.mxu0 %v1332
    %3440 = vmatprep.subr.bf16.mxu0 %v1341
    %3441 = vmatpush1.bf16.msra.mxu0 %v1340
    %3442 = vmatprep.subr.bf16.mxu0 %v1349
    %3443 = vmatpush1.bf16.msra.mxu0 %v1348
    %3444 = vmatprep.subr.bf16.mxu0 %v1357
    %3445 = vmatpush1.bf16.msra.mxu0 %v1356
    %3446 = vmatprep.subr.bf16.mxu0 %v1365
    %3447 = vmatpush1.bf16.msra.mxu0 %v1364
    %3448 = vmatprep.subr.bf16.mxu0 %v1373
    %3449 = vmatpush1.bf16.msra.mxu0 %v1372
    %3450 = vmatprep.subr.bf16.mxu0 %v1381
    %3451 = vmatpush1.bf16.msra.mxu0 %v1380
    %3452 = vmatprep.subr.bf16.mxu0 0
    %3453 = vmatpush1.bf16.msra.mxu0 0
    %3454 = vmatprep.subr.bf16.mxu0 0
    %3455 = vmatpush1.bf16.msra.mxu0 0
    %3456 = vmatprep.subr.bf16.mxu0 0
    %3457 = vmatpush1.bf16.msra.mxu0 0
    %3458 = vmatprep.subr.bf16.mxu0 0
    %3459 = vmatpush1.bf16.msra.mxu0 0
    %3460 = vmatprep.subr.bf16.mxu0 0
    %3461 = vmatpush1.bf16.msra.mxu0 0
    %3462 = vmatprep.subr.bf16.mxu0 0
    %3463 = vmatpush1.bf16.msra.mxu0 0
    %3464 = vmatprep.subr.bf16.mxu0 0
    %3465 = vmatpush1.bf16.msra.mxu0 0
    %3466 = vmatprep.subr.bf16.mxu0 0
    %3467 = vmatpush1.bf16.msra.mxu0 0
    %3468 = vmatprep.mubr.bf16.mxu0 0
    %3469 = vmatmul.mubr.bf16.gmra.mrb[0].mxu0 %v3228
    %v3470 = vpop.f32.mrb[0].mxu0
    %v3471 = vadd.f32 %v3307, %v3470
    %v3472 = vpop.f32.mrb[0].mxu0
    %v3473 = vadd.f32 %v3309, %v3472
    %v3474 = vpop.f32.mrb[0].mxu0
    %v3475 = vpop.f32.mrb[0].mxu0
    %3476 = vdwg.mxu0
    %3477 = vmatprep.subr.bf16.mxu0 %v1327
    %3478 = vmatpush1.bf16.msra.mxu0 %v1326
    %3479 = vmatprep.subr.bf16.mxu0 %v1335
    %3480 = vmatpush1.bf16.msra.mxu0 %v1334
    %3481 = vmatprep.subr.bf16.mxu0 %v1343
    %3482 = vmatpush1.bf16.msra.mxu0 %v1342
    %3483 = vmatprep.subr.bf16.mxu0 %v1351
    %3484 = vmatpush1.bf16.msra.mxu0 %v1350
    %3485 = vmatprep.subr.bf16.mxu0 %v1359
    %3486 = vmatpush1.bf16.msra.mxu0 %v1358
    %3487 = vmatprep.subr.bf16.mxu0 %v1367
    %3488 = vmatpush1.bf16.msra.mxu0 %v1366
    %3489 = vmatprep.subr.bf16.mxu0 %v1375
    %3490 = vmatpush1.bf16.msra.mxu0 %v1374
    %3491 = vmatprep.subr.bf16.mxu0 %v1383
    %3492 = vmatpush1.bf16.msra.mxu0 %v1382
    %3493 = vmatprep.subr.bf16.mxu0 0
    %3494 = vmatpush1.bf16.msra.mxu0 0
    %3495 = vmatprep.subr.bf16.mxu0 0
    %3496 = vmatpush1.bf16.msra.mxu0 0
    %3497 = vmatprep.subr.bf16.mxu0 0
    %3498 = vmatpush1.bf16.msra.mxu0 0
    %3499 = vmatprep.subr.bf16.mxu0 0
    %3500 = vmatpush1.bf16.msra.mxu0 0
    %3501 = vmatprep.subr.bf16.mxu0 0
    %3502 = vmatpush1.bf16.msra.mxu0 0
    %3503 = vmatprep.subr.bf16.mxu0 0
    %3504 = vmatpush1.bf16.msra.mxu0 0
    %3505 = vmatprep.subr.bf16.mxu0 0
    %3506 = vmatpush1.bf16.msra.mxu0 0
    %3507 = vmatprep.subr.bf16.mxu0 0
    %3508 = vmatpush1.bf16.msra.mxu0 0
    %3509 = vmatprep.mubr.bf16.mxu0 0
    %3510 = vmatmul.mubr.bf16.gmra.mrb[0].mxu0 %v3228
    %v3511 = vpop.f32.mrb[0].mxu0
    %v3512 = vadd.f32 %v3348, %v3511
    %v3513 = vpop.f32.mrb[0].mxu0
    %v3514 = vadd.f32 %v3350, %v3513
    %v3515 = vpop.f32.mrb[0].mxu0
    %v3516 = vpop.f32.mrb[0].mxu0
    %3517 = vdwg.mxu0
    %3518 = vmatprep.subr.bf16.mxu0 %v1329
    %3519 = vmatpush1.bf16.msra.mxu0 %v1328
    %3520 = vmatprep.subr.bf16.mxu0 %v1337
    %3521 = vmatpush1.bf16.msra.mxu0 %v1336
    %3522 = vmatprep.subr.bf16.mxu0 %v1345
    %3523 = vmatpush1.bf16.msra.mxu0 %v1344
    %3524 = vmatprep.subr.bf16.mxu0 %v1353
    %3525 = vmatpush1.bf16.msra.mxu0 %v1352
    %3526 = vmatprep.subr.bf16.mxu0 %v1361
    %3527 = vmatpush1.bf16.msra.mxu0 %v1360
    %3528 = vmatprep.subr.bf16.mxu0 %v1369
    %3529 = vmatpush1.bf16.msra.mxu0 %v1368
    %3530 = vmatprep.subr.bf16.mxu0 %v1377
    %3531 = vmatpush1.bf16.msra.mxu0 %v1376
    %3532 = vmatprep.subr.bf16.mxu0 %v1385
    %3533 = vmatpush1.bf16.msra.mxu0 %v1384
    %3534 = vmatprep.subr.bf16.mxu0 0
    %3535 = vmatpush1.bf16.msra.mxu0 0
    %3536 = vmatprep.subr.bf16.mxu0 0
    %3537 = vmatpush1.bf16.msra.mxu0 0
    %3538 = vmatprep.subr.bf16.mxu0 0
    %3539 = vmatpush1.bf16.msra.mxu0 0
    %3540 = vmatprep.subr.bf16.mxu0 0
    %3541 = vmatpush1.bf16.msra.mxu0 0
    %3542 = vmatprep.subr.bf16.mxu0 0
    %3543 = vmatpush1.bf16.msra.mxu0 0
    %3544 = vmatprep.subr.bf16.mxu0 0
    %3545 = vmatpush1.bf16.msra.mxu0 0
    %3546 = vmatprep.subr.bf16.mxu0 0
    %3547 = vmatpush1.bf16.msra.mxu0 0
    %3548 = vmatprep.subr.bf16.mxu0 0
    %3549 = vmatpush1.bf16.msra.mxu0 0
    %3550 = vmatprep.mubr.bf16.mxu0 0
    %3551 = vmatmul.mubr.bf16.gmra.mrb[0].mxu0 %v3228
    %v3552 = vpop.f32.mrb[0].mxu0
    %v3553 = vadd.f32 %v3389, %v3552
    %v3554 = vpop.f32.mrb[0].mxu0
    %v3555 = vadd.f32 %v3391, %v3554
    %v3556 = vpop.f32.mrb[0].mxu0
    %v3557 = vpop.f32.mrb[0].mxu0
    %3558 = vdwg.mxu0
    %v3559 = vadd.f32 %v3430, %v279
    %v3560 = vadd.f32 %v3432, %v283
    %v3561 = vadd.f32 %v3471, %v287
    %v3562 = vadd.f32 %v3473, %v291
    %v3563 = vadd.f32 %v3512, %v295
    %v3564 = vadd.f32 %v3514, %v299
    %v3565 = vadd.f32 %v3553, %v303
    %v3566 = vadd.f32 %v3555, %v307
    %v3567 = vxor.u32 %v3559, 2147483648
    %v3568 = vmul.f32 %v3567, 1.442695
    %v3569 = vpow.pop %v3568
    %v3570 = vadd.f32 %v3569, 1.0
    %v3571 = vrcp.pop %v3570
    %v3572 = vmul.f32 1.0, %v3571
    %v3573 = vxor.u32 %v3560, 2147483648
    %v3574 = vmul.f32 %v3573, 1.442695
    %v3575 = vpow.pop %v3574
    %v3576 = vadd.f32 %v3575, 1.0
    %v3577 = vrcp.pop %v3576
    %v3578 = vmul.f32 1.0, %v3577
    %v3579 = vxor.u32 %v3561, 2147483648
    %v3580 = vmul.f32 %v3579, 1.442695
    %v3581 = vpow.pop %v3580
    %v3582 = vadd.f32 %v3581, 1.0
    %v3583 = vrcp.pop %v3582
    %v3584 = vmul.f32 1.0, %v3583
    %v3585 = vtanh.pop %v3562
    %v3586 = vxor.u32 %v3563, 2147483648
    %v3587 = vmul.f32 %v3586, 1.442695
    %v3588 = vpow.pop %v3587
    %v3589 = vadd.f32 %v3588, 1.0
    %v3590 = vrcp.pop %v3589
    %v3591 = vmul.f32 1.0, %v3590
    %v3592 = vxor.u32 %v3564, 2147483648
    %v3593 = vmul.f32 %v3592, 1.442695
    %v3594 = vpow.pop %v3593
    %v3595 = vadd.f32 %v3594, 1.0
    %v3596 = vrcp.pop %v3595
    %v3597 = vmul.f32 1.0, %v3596
    %v3598 = vxor.u32 %v3565, 2147483648
    %v3599 = vmul.f32 %v3598, 1.442695
    %v3600 = vpow.pop %v3599
    %v3601 = vadd.f32 %v3600, 1.0
    %v3602 = vrcp.pop %v3601
    %v3603 = vmul.f32 1.0, %v3602
    %v3604 = vtanh.pop %v3566
    %v3605 = vmul.f32 %v3219, %v321
    %v3606 = vmul.f32 %v3572, %v3605
    %v3607 = vmul.f32 %v3578, %v3585
    %v3608 = vadd.f32 %v3606, %v3607
    %v3609 = vtanh.pop %v3608
    %v3610 = vmul.f32 %v3584, %v3609
    %v3611 = vmul.f32 %v3591, %v3224
    %v3612 = vmul.f32 %v3597, %v3604
    %v3613 = vadd.f32 %v3611, %v3612
    %v3614 = vtanh.pop %v3613
    %v3615 = vmul.f32 %v3603, %v3614
    %s3616 = scalar_lea.vmem %s0, 24
    %v3617 = vld [vmem:[%s3616] sm:$0xf]
    %v3618 = vpack.c.bf16 %v3610, %v3610
    %v3619 = vpack.c.bf16 %v3615, %v3615
    %3620 = vmatprep.subr.bf16.mxu0 %v711
    %3621 = vmatpush1.bf16.msra.mxu0 %v710
    %3622 = vmatprep.subr.bf16.mxu0 %v719
    %3623 = vmatpush1.bf16.msra.mxu0 %v718
    %3624 = vmatprep.subr.bf16.mxu0 %v727
    %3625 = vmatpush1.bf16.msra.mxu0 %v726
    %3626 = vmatprep.subr.bf16.mxu0 %v735
    %3627 = vmatpush1.bf16.msra.mxu0 %v734
    %3628 = vmatprep.subr.bf16.mxu0 %v743
    %3629 = vmatpush1.bf16.msra.mxu0 %v742
    %3630 = vmatprep.subr.bf16.mxu0 %v751
    %3631 = vmatpush1.bf16.msra.mxu0 %v750
    %3632 = vmatprep.subr.bf16.mxu0 %v759
    %3633 = vmatpush1.bf16.msra.mxu0 %v758
    %3634 = vmatprep.subr.bf16.mxu0 %v767
    %3635 = vmatpush1.bf16.msra.mxu0 %v766
    %3636 = vmatprep.subr.bf16.mxu0 %v775
    %3637 = vmatpush1.bf16.msra.mxu0 %v774
    %3638 = vmatprep.subr.bf16.mxu0 %v783
    %3639 = vmatpush1.bf16.msra.mxu0 %v782
    %3640 = vmatprep.subr.bf16.mxu0 %v791
    %3641 = vmatpush1.bf16.msra.mxu0 %v790
    %3642 = vmatprep.subr.bf16.mxu0 %v799
    %3643 = vmatpush1.bf16.msra.mxu0 %v798
    %3644 = vmatprep.subr.bf16.mxu0 %v807
    %3645 = vmatpush1.bf16.msra.mxu0 %v806
    %3646 = vmatprep.subr.bf16.mxu0 %v815
    %3647 = vmatpush1.bf16.msra.mxu0 %v814
    %3648 = vmatprep.subr.bf16.mxu0 %v823
    %3649 = vmatpush1.bf16.msra.mxu0 %v822
    %3650 = vmatprep.subr.bf16.mxu0 %v831
    %3651 = vmatpush1.bf16.msra.mxu0 %v830
    %3652 = vmatprep.mubr.bf16.mxu0 %v3619
    %3653 = vmatmul.mubr.bf16.gmra.mrb[0].mxu0 %v3618
    %v3654 = vpop.f32.mrb[0].mxu0
    %v3655 = vadd.f32 0.0, %v3654
    %v3656 = vpop.f32.mrb[0].mxu0
    %v3657 = vadd.f32 0.0, %v3656
    %v3658 = vpop.f32.mrb[0].mxu0
    %v3659 = vpop.f32.mrb[0].mxu0
    %3660 = vdwg.mxu0
    %3661 = vmatprep.subr.bf16.mxu0 %v713
    %3662 = vmatpush1.bf16.msra.mxu0 %v712
    %3663 = vmatprep.subr.bf16.mxu0 %v721
    %3664 = vmatpush1.bf16.msra.mxu0 %v720
    %3665 = vmatprep.subr.bf16.mxu0 %v729
    %3666 = vmatpush1.bf16.msra.mxu0 %v728
    %3667 = vmatprep.subr.bf16.mxu0 %v737
    %3668 = vmatpush1.bf16.msra.mxu0 %v736
    %3669 = vmatprep.subr.bf16.mxu0 %v745
    %3670 = vmatpush1.bf16.msra.mxu0 %v744
    %3671 = vmatprep.subr.bf16.mxu0 %v753
    %3672 = vmatpush1.bf16.msra.mxu0 %v752
    %3673 = vmatprep.subr.bf16.mxu0 %v761
    %3674 = vmatpush1.bf16.msra.mxu0 %v760
    %3675 = vmatprep.subr.bf16.mxu0 %v769
    %3676 = vmatpush1.bf16.msra.mxu0 %v768
    %3677 = vmatprep.subr.bf16.mxu0 %v777
    %3678 = vmatpush1.bf16.msra.mxu0 %v776
    %3679 = vmatprep.subr.bf16.mxu0 %v785
    %3680 = vmatpush1.bf16.msra.mxu0 %v784
    %3681 = vmatprep.subr.bf16.mxu0 %v793
    %3682 = vmatpush1.bf16.msra.mxu0 %v792
    %3683 = vmatprep.subr.bf16.mxu0 %v801
    %3684 = vmatpush1.bf16.msra.mxu0 %v800
    %3685 = vmatprep.subr.bf16.mxu0 %v809
    %3686 = vmatpush1.bf16.msra.mxu0 %v808
    %3687 = vmatprep.subr.bf16.mxu0 %v817
    %3688 = vmatpush1.bf16.msra.mxu0 %v816
    %3689 = vmatprep.subr.bf16.mxu0 %v825
    %3690 = vmatpush1.bf16.msra.mxu0 %v824
    %3691 = vmatprep.subr.bf16.mxu0 %v833
    %3692 = vmatpush1.bf16.msra.mxu0 %v832
    %3693 = vmatprep.mubr.bf16.mxu0 %v3619
    %3694 = vmatmul.mubr.bf16.gmra.mrb[0].mxu0 %v3618
    %v3695 = vpop.f32.mrb[0].mxu0
    %v3696 = vadd.f32 0.0, %v3695
    %v3697 = vpop.f32.mrb[0].mxu0
    %v3698 = vadd.f32 0.0, %v3697
    %v3699 = vpop.f32.mrb[0].mxu0
    %v3700 = vpop.f32.mrb[0].mxu0
    %3701 = vdwg.mxu0
    %3702 = vmatprep.subr.bf16.mxu0 %v715
    %3703 = vmatpush1.bf16.msra.mxu0 %v714
    %3704 = vmatprep.subr.bf16.mxu0 %v723
    %3705 = vmatpush1.bf16.msra.mxu0 %v722
    %3706 = vmatprep.subr.bf16.mxu0 %v731
    %3707 = vmatpush1.bf16.msra.mxu0 %v730
    %3708 = vmatprep.subr.bf16.mxu0 %v739
    %3709 = vmatpush1.bf16.msra.mxu0 %v738
    %3710 = vmatprep.subr.bf16.mxu0 %v747
    %3711 = vmatpush1.bf16.msra.mxu0 %v746
    %3712 = vmatprep.subr.bf16.mxu0 %v755
    %3713 = vmatpush1.bf16.msra.mxu0 %v754
    %3714 = vmatprep.subr.bf16.mxu0 %v763
    %3715 = vmatpush1.bf16.msra.mxu0 %v762
    %3716 = vmatprep.subr.bf16.mxu0 %v771
    %3717 = vmatpush1.bf16.msra.mxu0 %v770
    %3718 = vmatprep.subr.bf16.mxu0 %v779
    %3719 = vmatpush1.bf16.msra.mxu0 %v778
    %3720 = vmatprep.subr.bf16.mxu0 %v787
    %3721 = vmatpush1.bf16.msra.mxu0 %v786
    %3722 = vmatprep.subr.bf16.mxu0 %v795
    %3723 = vmatpush1.bf16.msra.mxu0 %v794
    %3724 = vmatprep.subr.bf16.mxu0 %v803
    %3725 = vmatpush1.bf16.msra.mxu0 %v802
    %3726 = vmatprep.subr.bf16.mxu0 %v811
    %3727 = vmatpush1.bf16.msra.mxu0 %v810
    %3728 = vmatprep.subr.bf16.mxu0 %v819
    %3729 = vmatpush1.bf16.msra.mxu0 %v818
    %3730 = vmatprep.subr.bf16.mxu0 %v827
    %3731 = vmatpush1.bf16.msra.mxu0 %v826
    %3732 = vmatprep.subr.bf16.mxu0 %v835
    %3733 = vmatpush1.bf16.msra.mxu0 %v834
    %3734 = vmatprep.mubr.bf16.mxu0 %v3619
    %3735 = vmatmul.mubr.bf16.gmra.mrb[0].mxu0 %v3618
    %v3736 = vpop.f32.mrb[0].mxu0
    %v3737 = vadd.f32 0.0, %v3736
    %v3738 = vpop.f32.mrb[0].mxu0
    %v3739 = vadd.f32 0.0, %v3738
    %v3740 = vpop.f32.mrb[0].mxu0
    %v3741 = vpop.f32.mrb[0].mxu0
    %3742 = vdwg.mxu0
    %3743 = vmatprep.subr.bf16.mxu0 %v717
    %3744 = vmatpush1.bf16.msra.mxu0 %v716
    %3745 = vmatprep.subr.bf16.mxu0 %v725
    %3746 = vmatpush1.bf16.msra.mxu0 %v724
    %3747 = vmatprep.subr.bf16.mxu0 %v733
    %3748 = vmatpush1.bf16.msra.mxu0 %v732
    %3749 = vmatprep.subr.bf16.mxu0 %v741
    %3750 = vmatpush1.bf16.msra.mxu0 %v740
    %3751 = vmatprep.subr.bf16.mxu0 %v749
    %3752 = vmatpush1.bf16.msra.mxu0 %v748
    %3753 = vmatprep.subr.bf16.mxu0 %v757
    %3754 = vmatpush1.bf16.msra.mxu0 %v756
    %3755 = vmatprep.subr.bf16.mxu0 %v765
    %3756 = vmatpush1.bf16.msra.mxu0 %v764
    %3757 = vmatprep.subr.bf16.mxu0 %v773
    %3758 = vmatpush1.bf16.msra.mxu0 %v772
    %3759 = vmatprep.subr.bf16.mxu0 %v781
    %3760 = vmatpush1.bf16.msra.mxu0 %v780
    %3761 = vmatprep.subr.bf16.mxu0 %v789
    %3762 = vmatpush1.bf16.msra.mxu0 %v788
    %3763 = vmatprep.subr.bf16.mxu0 %v797
    %3764 = vmatpush1.bf16.msra.mxu0 %v796
    %3765 = vmatprep.subr.bf16.mxu0 %v805
    %3766 = vmatpush1.bf16.msra.mxu0 %v804
    %3767 = vmatprep.subr.bf16.mxu0 %v813
    %3768 = vmatpush1.bf16.msra.mxu0 %v812
    %3769 = vmatprep.subr.bf16.mxu0 %v821
    %3770 = vmatpush1.bf16.msra.mxu0 %v820
    %3771 = vmatprep.subr.bf16.mxu0 %v829
    %3772 = vmatpush1.bf16.msra.mxu0 %v828
    %3773 = vmatprep.subr.bf16.mxu0 %v837
    %3774 = vmatpush1.bf16.msra.mxu0 %v836
    %3775 = vmatprep.mubr.bf16.mxu0 %v3619
    %3776 = vmatmul.mubr.bf16.gmra.mrb[0].mxu0 %v3618
    %v3777 = vpop.f32.mrb[0].mxu0
    %v3778 = vadd.f32 0.0, %v3777
    %v3779 = vpop.f32.mrb[0].mxu0
    %v3780 = vadd.f32 0.0, %v3779
    %v3781 = vpop.f32.mrb[0].mxu0
    %v3782 = vpop.f32.mrb[0].mxu0
    %3783 = vdwg.mxu0
    %3784 = vmatprep.subr.bf16.mxu0 %v1323
    %3785 = vmatpush1.bf16.msra.mxu0 %v1322
    %3786 = vmatprep.subr.bf16.mxu0 %v1331
    %3787 = vmatpush1.bf16.msra.mxu0 %v1330
    %3788 = vmatprep.subr.bf16.mxu0 %v1339
    %3789 = vmatpush1.bf16.msra.mxu0 %v1338
    %3790 = vmatprep.subr.bf16.mxu0 %v1347
    %3791 = vmatpush1.bf16.msra.mxu0 %v1346
    %3792 = vmatprep.subr.bf16.mxu0 %v1355
    %3793 = vmatpush1.bf16.msra.mxu0 %v1354
    %3794 = vmatprep.subr.bf16.mxu0 %v1363
    %3795 = vmatpush1.bf16.msra.mxu0 %v1362
    %3796 = vmatprep.subr.bf16.mxu0 %v1371
    %3797 = vmatpush1.bf16.msra.mxu0 %v1370
    %3798 = vmatprep.subr.bf16.mxu0 %v1379
    %3799 = vmatpush1.bf16.msra.mxu0 %v1378
    %3800 = vmatprep.subr.bf16.mxu0 0
    %3801 = vmatpush1.bf16.msra.mxu0 0
    %3802 = vmatprep.subr.bf16.mxu0 0
    %3803 = vmatpush1.bf16.msra.mxu0 0
    %3804 = vmatprep.subr.bf16.mxu0 0
    %3805 = vmatpush1.bf16.msra.mxu0 0
    %3806 = vmatprep.subr.bf16.mxu0 0
    %3807 = vmatpush1.bf16.msra.mxu0 0
    %3808 = vmatprep.subr.bf16.mxu0 0
    %3809 = vmatpush1.bf16.msra.mxu0 0
    %3810 = vmatprep.subr.bf16.mxu0 0
    %3811 = vmatpush1.bf16.msra.mxu0 0
    %3812 = vmatprep.subr.bf16.mxu0 0
    %3813 = vmatpush1.bf16.msra.mxu0 0
    %3814 = vmatprep.subr.bf16.mxu0 0
    %3815 = vmatpush1.bf16.msra.mxu0 0
    %3816 = vmatprep.mubr.bf16.mxu0 0
    %3817 = vmatmul.mubr.bf16.gmra.mrb[0].mxu0 %v3617
    %v3818 = vpop.f32.mrb[0].mxu0
    %v3819 = vadd.f32 %v3655, %v3818
    %v3820 = vpop.f32.mrb[0].mxu0
    %v3821 = vadd.f32 %v3657, %v3820
    %v3822 = vpop.f32.mrb[0].mxu0
    %v3823 = vpop.f32.mrb[0].mxu0
    %3824 = vdwg.mxu0
    %3825 = vmatprep.subr.bf16.mxu0 %v1325
    %3826 = vmatpush1.bf16.msra.mxu0 %v1324
    %3827 = vmatprep.subr.bf16.mxu0 %v1333
    %3828 = vmatpush1.bf16.msra.mxu0 %v1332
    %3829 = vmatprep.subr.bf16.mxu0 %v1341
    %3830 = vmatpush1.bf16.msra.mxu0 %v1340
    %3831 = vmatprep.subr.bf16.mxu0 %v1349
    %3832 = vmatpush1.bf16.msra.mxu0 %v1348
    %3833 = vmatprep.subr.bf16.mxu0 %v1357
    %3834 = vmatpush1.bf16.msra.mxu0 %v1356
    %3835 = vmatprep.subr.bf16.mxu0 %v1365
    %3836 = vmatpush1.bf16.msra.mxu0 %v1364
    %3837 = vmatprep.subr.bf16.mxu0 %v1373
    %3838 = vmatpush1.bf16.msra.mxu0 %v1372
    %3839 = vmatprep.subr.bf16.mxu0 %v1381
    %3840 = vmatpush1.bf16.msra.mxu0 %v1380
    %3841 = vmatprep.subr.bf16.mxu0 0
    %3842 = vmatpush1.bf16.msra.mxu0 0
    %3843 = vmatprep.subr.bf16.mxu0 0
    %3844 = vmatpush1.bf16.msra.mxu0 0
    %3845 = vmatprep.subr.bf16.mxu0 0
    %3846 = vmatpush1.bf16.msra.mxu0 0
    %3847 = vmatprep.subr.bf16.mxu0 0
    %3848 = vmatpush1.bf16.msra.mxu0 0
    %3849 = vmatprep.subr.bf16.mxu0 0
    %3850 = vmatpush1.bf16.msra.mxu0 0
    %3851 = vmatprep.subr.bf16.mxu0 0
    %3852 = vmatpush1.bf16.msra.mxu0 0
    %3853 = vmatprep.subr.bf16.mxu0 0
    %3854 = vmatpush1.bf16.msra.mxu0 0
    %3855 = vmatprep.subr.bf16.mxu0 0
    %3856 = vmatpush1.bf16.msra.mxu0 0
    %3857 = vmatprep.mubr.bf16.mxu0 0
    %3858 = vmatmul.mubr.bf16.gmra.mrb[0].mxu0 %v3617
    %v3859 = vpop.f32.mrb[0].mxu0
    %v3860 = vadd.f32 %v3696, %v3859
    %v3861 = vpop.f32.mrb[0].mxu0
    %v3862 = vadd.f32 %v3698, %v3861
    %v3863 = vpop.f32.mrb[0].mxu0
    %v3864 = vpop.f32.mrb[0].mxu0
    %3865 = vdwg.mxu0
    %3866 = vmatprep.subr.bf16.mxu0 %v1327
    %3867 = vmatpush1.bf16.msra.mxu0 %v1326
    %3868 = vmatprep.subr.bf16.mxu0 %v1335
    %3869 = vmatpush1.bf16.msra.mxu0 %v1334
    %3870 = vmatprep.subr.bf16.mxu0 %v1343
    %3871 = vmatpush1.bf16.msra.mxu0 %v1342
    %3872 = vmatprep.subr.bf16.mxu0 %v1351
    %3873 = vmatpush1.bf16.msra.mxu0 %v1350
    %3874 = vmatprep.subr.bf16.mxu0 %v1359
    %3875 = vmatpush1.bf16.msra.mxu0 %v1358
    %3876 = vmatprep.subr.bf16.mxu0 %v1367
    %3877 = vmatpush1.bf16.msra.mxu0 %v1366
    %3878 = vmatprep.subr.bf16.mxu0 %v1375
    %3879 = vmatpush1.bf16.msra.mxu0 %v1374
    %3880 = vmatprep.subr.bf16.mxu0 %v1383
    %3881 = vmatpush1.bf16.msra.mxu0 %v1382
    %3882 = vmatprep.subr.bf16.mxu0 0
    %3883 = vmatpush1.bf16.msra.mxu0 0
    %3884 = vmatprep.subr.bf16.mxu0 0
    %3885 = vmatpush1.bf16.msra.mxu0 0
    %3886 = vmatprep.subr.bf16.mxu0 0
    %3887 = vmatpush1.bf16.msra.mxu0 0
    %3888 = vmatprep.subr.bf16.mxu0 0
    %3889 = vmatpush1.bf16.msra.mxu0 0
    %3890 = vmatprep.subr.bf16.mxu0 0
    %3891 = vmatpush1.bf16.msra.mxu0 0
    %3892 = vmatprep.subr.bf16.mxu0 0
    %3893 = vmatpush1.bf16.msra.mxu0 0
    %3894 = vmatprep.subr.bf16.mxu0 0
    %3895 = vmatpush1.bf16.msra.mxu0 0
    %3896 = vmatprep.subr.bf16.mxu0 0
    %3897 = vmatpush1.bf16.msra.mxu0 0
    %3898 = vmatprep.mubr.bf16.mxu0 0
    %3899 = vmatmul.mubr.bf16.gmra.mrb[0].mxu0 %v3617
    %v3900 = vpop.f32.mrb[0].mxu0
    %v3901 = vadd.f32 %v3737, %v3900
    %v3902 = vpop.f32.mrb[0].mxu0
    %v3903 = vadd.f32 %v3739, %v3902
    %v3904 = vpop.f32.mrb[0].mxu0
    %v3905 = vpop.f32.mrb[0].mxu0
    %3906 = vdwg.mxu0
    %3907 = vmatprep.subr.bf16.mxu0 %v1329
    %3908 = vmatpush1.bf16.msra.mxu0 %v1328
    %3909 = vmatprep.subr.bf16.mxu0 %v1337
    %3910 = vmatpush1.bf16.msra.mxu0 %v1336
    %3911 = vmatprep.subr.bf16.mxu0 %v1345
    %3912 = vmatpush1.bf16.msra.mxu0 %v1344
    %3913 = vmatprep.subr.bf16.mxu0 %v1353
    %3914 = vmatpush1.bf16.msra.mxu0 %v1352
    %3915 = vmatprep.subr.bf16.mxu0 %v1361
    %3916 = vmatpush1.bf16.msra.mxu0 %v1360
    %3917 = vmatprep.subr.bf16.mxu0 %v1369
    %3918 = vmatpush1.bf16.msra.mxu0 %v1368
    %3919 = vmatprep.subr.bf16.mxu0 %v1377
    %3920 = vmatpush1.bf16.msra.mxu0 %v1376
    %3921 = vmatprep.subr.bf16.mxu0 %v1385
    %3922 = vmatpush1.bf16.msra.mxu0 %v1384
    %3923 = vmatprep.subr.bf16.mxu0 0
    %3924 = vmatpush1.bf16.msra.mxu0 0
    %3925 = vmatprep.subr.bf16.mxu0 0
    %3926 = vmatpush1.bf16.msra.mxu0 0
    %3927 = vmatprep.subr.bf16.mxu0 0
    %3928 = vmatpush1.bf16.msra.mxu0 0
    %3929 = vmatprep.subr.bf16.mxu0 0
    %3930 = vmatpush1.bf16.msra.mxu0 0
    %3931 = vmatprep.subr.bf16.mxu0 0
    %3932 = vmatpush1.bf16.msra.mxu0 0
    %3933 = vmatprep.subr.bf16.mxu0 0
    %3934 = vmatpush1.bf16.msra.mxu0 0
    %3935 = vmatprep.subr.bf16.mxu0 0
    %3936 = vmatpush1.bf16.msra.mxu0 0
    %3937 = vmatprep.subr.bf16.mxu0 0
    %3938 = vmatpush1.bf16.msra.mxu0 0
    %3939 = vmatprep.mubr.bf16.mxu0 0
    %3940 = vmatmul.mubr.bf16.gmra.mrb[0].mxu0 %v3617
    %v3941 = vpop.f32.mrb[0].mxu0
    %v3942 = vadd.f32 %v3778, %v3941
    %v3943 = vpop.f32.mrb[0].mxu0
    %v3944 = vadd.f32 %v3780, %v3943
    %v3945 = vpop.f32.mrb[0].mxu0
    %v3946 = vpop.f32.mrb[0].mxu0
    %3947 = vdwg.mxu0
    %v3948 = vadd.f32 %v3819, %v279
    %v3949 = vadd.f32 %v3821, %v283
    %v3950 = vadd.f32 %v3860, %v287
    %v3951 = vadd.f32 %v3862, %v291
    %v3952 = vadd.f32 %v3901, %v295
    %v3953 = vadd.f32 %v3903, %v299
    %v3954 = vadd.f32 %v3942, %v303
    %v3955 = vadd.f32 %v3944, %v307
    %v3956 = vxor.u32 %v3948, 2147483648
    %v3957 = vmul.f32 %v3956, 1.442695
    %v3958 = vpow.pop %v3957
    %v3959 = vadd.f32 %v3958, 1.0
    %v3960 = vrcp.pop %v3959
    %v3961 = vmul.f32 1.0, %v3960
    %v3962 = vxor.u32 %v3949, 2147483648
    %v3963 = vmul.f32 %v3962, 1.442695
    %v3964 = vpow.pop %v3963
    %v3965 = vadd.f32 %v3964, 1.0
    %v3966 = vrcp.pop %v3965
    %v3967 = vmul.f32 1.0, %v3966
    %v3968 = vxor.u32 %v3950, 2147483648
    %v3969 = vmul.f32 %v3968, 1.442695
    %v3970 = vpow.pop %v3969
    %v3971 = vadd.f32 %v3970, 1.0
    %v3972 = vrcp.pop %v3971
    %v3973 = vmul.f32 1.0, %v3972
    %v3974 = vtanh.pop %v3951
    %v3975 = vxor.u32 %v3952, 2147483648
    %v3976 = vmul.f32 %v3975, 1.442695
    %v3977 = vpow.pop %v3976
    %v3978 = vadd.f32 %v3977, 1.0
    %v3979 = vrcp.pop %v3978
    %v3980 = vmul.f32 1.0, %v3979
    %v3981 = vxor.u32 %v3953, 2147483648
    %v3982 = vmul.f32 %v3981, 1.442695
    %v3983 = vpow.pop %v3982
    %v3984 = vadd.f32 %v3983, 1.0
    %v3985 = vrcp.pop %v3984
    %v3986 = vmul.f32 1.0, %v3985
    %v3987 = vxor.u32 %v3954, 2147483648
    %v3988 = vmul.f32 %v3987, 1.442695
    %v3989 = vpow.pop %v3988
    %v3990 = vadd.f32 %v3989, 1.0
    %v3991 = vrcp.pop %v3990
    %v3992 = vmul.f32 1.0, %v3991
    %v3993 = vtanh.pop %v3955
    %v3994 = vmul.f32 %v3608, %v321
    %v3995 = vmul.f32 %v3961, %v3994
    %v3996 = vmul.f32 %v3967, %v3974
    %v3997 = vadd.f32 %v3995, %v3996
    %v3998 = vtanh.pop %v3997
    %v3999 = vmul.f32 %v3973, %v3998
    %v4000 = vmul.f32 %v3980, %v3613
    %v4001 = vmul.f32 %v3986, %v3993
    %v4002 = vadd.f32 %v4000, %v4001
    %v4003 = vtanh.pop %v4002
    %v4004 = vmul.f32 %v3992, %v4003
    %s4005 = scalar_lea.vmem %s0, 28
    %v4006 = vld [vmem:[%s4005] sm:$0xf]
    %v4007 = vpack.c.bf16 %v3999, %v3999
    %v4008 = vpack.c.bf16 %v4004, %v4004
    %4009 = vmatprep.subr.bf16.mxu0 %v711
    %4010 = vmatpush1.bf16.msra.mxu0 %v710
    %4011 = vmatprep.subr.bf16.mxu0 %v719
    %4012 = vmatpush1.bf16.msra.mxu0 %v718
    %4013 = vmatprep.subr.bf16.mxu0 %v727
    %4014 = vmatpush1.bf16.msra.mxu0 %v726
    %4015 = vmatprep.subr.bf16.mxu0 %v735
    %4016 = vmatpush1.bf16.msra.mxu0 %v734
    %4017 = vmatprep.subr.bf16.mxu0 %v743
    %4018 = vmatpush1.bf16.msra.mxu0 %v742
    %4019 = vmatprep.subr.bf16.mxu0 %v751
    %4020 = vmatpush1.bf16.msra.mxu0 %v750
    %4021 = vmatprep.subr.bf16.mxu0 %v759
    %4022 = vmatpush1.bf16.msra.mxu0 %v758
    %4023 = vmatprep.subr.bf16.mxu0 %v767
    %4024 = vmatpush1.bf16.msra.mxu0 %v766
    %4025 = vmatprep.subr.bf16.mxu0 %v775
    %4026 = vmatpush1.bf16.msra.mxu0 %v774
    %4027 = vmatprep.subr.bf16.mxu0 %v783
    %4028 = vmatpush1.bf16.msra.mxu0 %v782
    %4029 = vmatprep.subr.bf16.mxu0 %v791
    %4030 = vmatpush1.bf16.msra.mxu0 %v790
    %4031 = vmatprep.subr.bf16.mxu0 %v799
    %4032 = vmatpush1.bf16.msra.mxu0 %v798
    %4033 = vmatprep.subr.bf16.mxu0 %v807
    %4034 = vmatpush1.bf16.msra.mxu0 %v806
    %4035 = vmatprep.subr.bf16.mxu0 %v815
    %4036 = vmatpush1.bf16.msra.mxu0 %v814
    %4037 = vmatprep.subr.bf16.mxu0 %v823
    %4038 = vmatpush1.bf16.msra.mxu0 %v822
    %4039 = vmatprep.subr.bf16.mxu0 %v831
    %4040 = vmatpush1.bf16.msra.mxu0 %v830
    %4041 = vmatprep.mubr.bf16.mxu0 %v4008
    %4042 = vmatmul.mubr.bf16.gmra.mrb[0].mxu0 %v4007
    %v4043 = vpop.f32.mrb[0].mxu0
    %v4044 = vadd.f32 0.0, %v4043
    %v4045 = vpop.f32.mrb[0].mxu0
    %v4046 = vadd.f32 0.0, %v4045
    %v4047 = vpop.f32.mrb[0].mxu0
    %v4048 = vpop.f32.mrb[0].mxu0
    %4049 = vdwg.mxu0
    %4050 = vmatprep.subr.bf16.mxu0 %v713
    %4051 = vmatpush1.bf16.msra.mxu0 %v712
    %4052 = vmatprep.subr.bf16.mxu0 %v721
    %4053 = vmatpush1.bf16.msra.mxu0 %v720
    %4054 = vmatprep.subr.bf16.mxu0 %v729
    %4055 = vmatpush1.bf16.msra.mxu0 %v728
    %4056 = vmatprep.subr.bf16.mxu0 %v737
    %4057 = vmatpush1.bf16.msra.mxu0 %v736
    %4058 = vmatprep.subr.bf16.mxu0 %v745
    %4059 = vmatpush1.bf16.msra.mxu0 %v744
    %4060 = vmatprep.subr.bf16.mxu0 %v753
    %4061 = vmatpush1.bf16.msra.mxu0 %v752
    %4062 = vmatprep.subr.bf16.mxu0 %v761
    %4063 = vmatpush1.bf16.msra.mxu0 %v760
    %4064 = vmatprep.subr.bf16.mxu0 %v769
    %4065 = vmatpush1.bf16.msra.mxu0 %v768
    %4066 = vmatprep.subr.bf16.mxu0 %v777
    %4067 = vmatpush1.bf16.msra.mxu0 %v776
    %4068 = vmatprep.subr.bf16.mxu0 %v785
    %4069 = vmatpush1.bf16.msra.mxu0 %v784
    %4070 = vmatprep.subr.bf16.mxu0 %v793
    %4071 = vmatpush1.bf16.msra.mxu0 %v792
    %4072 = vmatprep.subr.bf16.mxu0 %v801
    %4073 = vmatpush1.bf16.msra.mxu0 %v800
    %4074 = vmatprep.subr.bf16.mxu0 %v809
    %4075 = vmatpush1.bf16.msra.mxu0 %v808
    %4076 = vmatprep.subr.bf16.mxu0 %v817
    %4077 = vmatpush1.bf16.msra.mxu0 %v816
    %4078 = vmatprep.subr.bf16.mxu0 %v825
    %4079 = vmatpush1.bf16.msra.mxu0 %v824
    %4080 = vmatprep.subr.bf16.mxu0 %v833
    %4081 = vmatpush1.bf16.msra.mxu0 %v832
    %4082 = vmatprep.mubr.bf16.mxu0 %v4008
    %4083 = vmatmul.mubr.bf16.gmra.mrb[0].mxu0 %v4007
    %v4084 = vpop.f32.mrb[0].mxu0
    %v4085 = vadd.f32 0.0, %v4084
    %v4086 = vpop.f32.mrb[0].mxu0
    %v4087 = vadd.f32 0.0, %v4086
    %v4088 = vpop.f32.mrb[0].mxu0
    %v4089 = vpop.f32.mrb[0].mxu0
    %4090 = vdwg.mxu0
    %4091 = vmatprep.subr.bf16.mxu0 %v715
    %4092 = vmatpush1.bf16.msra.mxu0 %v714
    %4093 = vmatprep.subr.bf16.mxu0 %v723
    %4094 = vmatpush1.bf16.msra.mxu0 %v722
    %4095 = vmatprep.subr.bf16.mxu0 %v731
    %4096 = vmatpush1.bf16.msra.mxu0 %v730
    %4097 = vmatprep.subr.bf16.mxu0 %v739
    %4098 = vmatpush1.bf16.msra.mxu0 %v738
    %4099 = vmatprep.subr.bf16.mxu0 %v747
    %4100 = vmatpush1.bf16.msra.mxu0 %v746
    %4101 = vmatprep.subr.bf16.mxu0 %v755
    %4102 = vmatpush1.bf16.msra.mxu0 %v754
    %4103 = vmatprep.subr.bf16.mxu0 %v763
    %4104 = vmatpush1.bf16.msra.mxu0 %v762
    %4105 = vmatprep.subr.bf16.mxu0 %v771
    %4106 = vmatpush1.bf16.msra.mxu0 %v770
    %4107 = vmatprep.subr.bf16.mxu0 %v779
    %4108 = vmatpush1.bf16.msra.mxu0 %v778
    %4109 = vmatprep.subr.bf16.mxu0 %v787
    %4110 = vmatpush1.bf16.msra.mxu0 %v786
    %4111 = vmatprep.subr.bf16.mxu0 %v795
    %4112 = vmatpush1.bf16.msra.mxu0 %v794
    %4113 = vmatprep.subr.bf16.mxu0 %v803
    %4114 = vmatpush1.bf16.msra.mxu0 %v802
    %4115 = vmatprep.subr.bf16.mxu0 %v811
    %4116 = vmatpush1.bf16.msra.mxu0 %v810
    %4117 = vmatprep.subr.bf16.mxu0 %v819
    %4118 = vmatpush1.bf16.msra.mxu0 %v818
    %4119 = vmatprep.subr.bf16.mxu0 %v827
    %4120 = vmatpush1.bf16.msra.mxu0 %v826
    %4121 = vmatprep.subr.bf16.mxu0 %v835
    %4122 = vmatpush1.bf16.msra.mxu0 %v834
    %4123 = vmatprep.mubr.bf16.mxu0 %v4008
    %4124 = vmatmul.mubr.bf16.gmra.mrb[0].mxu0 %v4007
    %v4125 = vpop.f32.mrb[0].mxu0
    %v4126 = vadd.f32 0.0, %v4125
    %v4127 = vpop.f32.mrb[0].mxu0
    %v4128 = vadd.f32 0.0, %v4127
    %v4129 = vpop.f32.mrb[0].mxu0
    %v4130 = vpop.f32.mrb[0].mxu0
    %4131 = vdwg.mxu0
    %4132 = vmatprep.subr.bf16.mxu0 %v717
    %4133 = vmatpush1.bf16.msra.mxu0 %v716
    %4134 = vmatprep.subr.bf16.mxu0 %v725
    %4135 = vmatpush1.bf16.msra.mxu0 %v724
    %4136 = vmatprep.subr.bf16.mxu0 %v733
    %4137 = vmatpush1.bf16.msra.mxu0 %v732
    %4138 = vmatprep.subr.bf16.mxu0 %v741
    %4139 = vmatpush1.bf16.msra.mxu0 %v740
    %4140 = vmatprep.subr.bf16.mxu0 %v749
    %4141 = vmatpush1.bf16.msra.mxu0 %v748
    %4142 = vmatprep.subr.bf16.mxu0 %v757
    %4143 = vmatpush1.bf16.msra.mxu0 %v756
    %4144 = vmatprep.subr.bf16.mxu0 %v765
    %4145 = vmatpush1.bf16.msra.mxu0 %v764
    %4146 = vmatprep.subr.bf16.mxu0 %v773
    %4147 = vmatpush1.bf16.msra.mxu0 %v772
    %4148 = vmatprep.subr.bf16.mxu0 %v781
    %4149 = vmatpush1.bf16.msra.mxu0 %v780
    %4150 = vmatprep.subr.bf16.mxu0 %v789
    %4151 = vmatpush1.bf16.msra.mxu0 %v788
    %4152 = vmatprep.subr.bf16.mxu0 %v797
    %4153 = vmatpush1.bf16.msra.mxu0 %v796
    %4154 = vmatprep.subr.bf16.mxu0 %v805
    %4155 = vmatpush1.bf16.msra.mxu0 %v804
    %4156 = vmatprep.subr.bf16.mxu0 %v813
    %4157 = vmatpush1.bf16.msra.mxu0 %v812
    %4158 = vmatprep.subr.bf16.mxu0 %v821
    %4159 = vmatpush1.bf16.msra.mxu0 %v820
    %4160 = vmatprep.subr.bf16.mxu0 %v829
    %4161 = vmatpush1.bf16.msra.mxu0 %v828
    %4162 = vmatprep.subr.bf16.mxu0 %v837
    %4163 = vmatpush1.bf16.msra.mxu0 %v836
    %4164 = vmatprep.mubr.bf16.mxu0 %v4008
    %4165 = vmatmul.mubr.bf16.gmra.mrb[0].mxu0 %v4007
    %v4166 = vpop.f32.mrb[0].mxu0
    %v4167 = vadd.f32 0.0, %v4166
    %v4168 = vpop.f32.mrb[0].mxu0
    %v4169 = vadd.f32 0.0, %v4168
    %v4170 = vpop.f32.mrb[0].mxu0
    %v4171 = vpop.f32.mrb[0].mxu0
    %4172 = vdwg.mxu0
    %4173 = vmatprep.subr.bf16.mxu0 %v1323
    %4174 = vmatpush1.bf16.msra.mxu0 %v1322
    %4175 = vmatprep.subr.bf16.mxu0 %v1331
    %4176 = vmatpush1.bf16.msra.mxu0 %v1330
    %4177 = vmatprep.subr.bf16.mxu0 %v1339
    %4178 = vmatpush1.bf16.msra.mxu0 %v1338
    %4179 = vmatprep.subr.bf16.mxu0 %v1347
    %4180 = vmatpush1.bf16.msra.mxu0 %v1346
    %4181 = vmatprep.subr.bf16.mxu0 %v1355
    %4182 = vmatpush1.bf16.msra.mxu0 %v1354
    %4183 = vmatprep.subr.bf16.mxu0 %v1363
    %4184 = vmatpush1.bf16.msra.mxu0 %v1362
    %4185 = vmatprep.subr.bf16.mxu0 %v1371
    %4186 = vmatpush1.bf16.msra.mxu0 %v1370
    %4187 = vmatprep.subr.bf16.mxu0 %v1379
    %4188 = vmatpush1.bf16.msra.mxu0 %v1378
    %4189 = vmatprep.subr.bf16.mxu0 0
    %4190 = vmatpush1.bf16.msra.mxu0 0
    %4191 = vmatprep.subr.bf16.mxu0 0
    %4192 = vmatpush1.bf16.msra.mxu0 0
    %4193 = vmatprep.subr.bf16.mxu0 0
    %4194 = vmatpush1.bf16.msra.mxu0 0
    %4195 = vmatprep.subr.bf16.mxu0 0
    %4196 = vmatpush1.bf16.msra.mxu0 0
    %4197 = vmatprep.subr.bf16.mxu0 0
    %4198 = vmatpush1.bf16.msra.mxu0 0
    %4199 = vmatprep.subr.bf16.mxu0 0
    %4200 = vmatpush1.bf16.msra.mxu0 0
    %4201 = vmatprep.subr.bf16.mxu0 0
    %4202 = vmatpush1.bf16.msra.mxu0 0
    %4203 = vmatprep.subr.bf16.mxu0 0
    %4204 = vmatpush1.bf16.msra.mxu0 0
    %4205 = vmatprep.mubr.bf16.mxu0 0
    %4206 = vmatmul.mubr.bf16.gmra.mrb[0].mxu0 %v4006
    %v4207 = vpop.f32.mrb[0].mxu0
    %v4208 = vadd.f32 %v4044, %v4207
    %v4209 = vpop.f32.mrb[0].mxu0
    %v4210 = vadd.f32 %v4046, %v4209
    %v4211 = vpop.f32.mrb[0].mxu0
    %v4212 = vpop.f32.mrb[0].mxu0
    %4213 = vdwg.mxu0
    %4214 = vmatprep.subr.bf16.mxu0 %v1325
    %4215 = vmatpush1.bf16.msra.mxu0 %v1324
    %4216 = vmatprep.subr.bf16.mxu0 %v1333
    %4217 = vmatpush1.bf16.msra.mxu0 %v1332
    %4218 = vmatprep.subr.bf16.mxu0 %v1341
    %4219 = vmatpush1.bf16.msra.mxu0 %v1340
    %4220 = vmatprep.subr.bf16.mxu0 %v1349
    %4221 = vmatpush1.bf16.msra.mxu0 %v1348
    %4222 = vmatprep.subr.bf16.mxu0 %v1357
    %4223 = vmatpush1.bf16.msra.mxu0 %v1356
    %4224 = vmatprep.subr.bf16.mxu0 %v1365
    %4225 = vmatpush1.bf16.msra.mxu0 %v1364
    %4226 = vmatprep.subr.bf16.mxu0 %v1373
    %4227 = vmatpush1.bf16.msra.mxu0 %v1372
    %4228 = vmatprep.subr.bf16.mxu0 %v1381
    %4229 = vmatpush1.bf16.msra.mxu0 %v1380
    %4230 = vmatprep.subr.bf16.mxu0 0
    %4231 = vmatpush1.bf16.msra.mxu0 0
    %4232 = vmatprep.subr.bf16.mxu0 0
    %4233 = vmatpush1.bf16.msra.mxu0 0
    %4234 = vmatprep.subr.bf16.mxu0 0
    %4235 = vmatpush1.bf16.msra.mxu0 0
    %4236 = vmatprep.subr.bf16.mxu0 0
    %4237 = vmatpush1.bf16.msra.mxu0 0
    %4238 = vmatprep.subr.bf16.mxu0 0
    %4239 = vmatpush1.bf16.msra.mxu0 0
    %4240 = vmatprep.subr.bf16.mxu0 0
    %4241 = vmatpush1.bf16.msra.mxu0 0
    %4242 = vmatprep.subr.bf16.mxu0 0
    %4243 = vmatpush1.bf16.msra.mxu0 0
    %4244 = vmatprep.subr.bf16.mxu0 0
    %4245 = vmatpush1.bf16.msra.mxu0 0
    %4246 = vmatprep.mubr.bf16.mxu0 0
    %4247 = vmatmul.mubr.bf16.gmra.mrb[0].mxu0 %v4006
    %v4248 = vpop.f32.mrb[0].mxu0
    %v4249 = vadd.f32 %v4085, %v4248
    %v4250 = vpop.f32.mrb[0].mxu0
    %v4251 = vadd.f32 %v4087, %v4250
    %v4252 = vpop.f32.mrb[0].mxu0
    %v4253 = vpop.f32.mrb[0].mxu0
    %4254 = vdwg.mxu0
    %4255 = vmatprep.subr.bf16.mxu0 %v1327
    %4256 = vmatpush1.bf16.msra.mxu0 %v1326
    %4257 = vmatprep.subr.bf16.mxu0 %v1335
    %4258 = vmatpush1.bf16.msra.mxu0 %v1334
    %4259 = vmatprep.subr.bf16.mxu0 %v1343
    %4260 = vmatpush1.bf16.msra.mxu0 %v1342
    %4261 = vmatprep.subr.bf16.mxu0 %v1351
    %4262 = vmatpush1.bf16.msra.mxu0 %v1350
    %4263 = vmatprep.subr.bf16.mxu0 %v1359
    %4264 = vmatpush1.bf16.msra.mxu0 %v1358
    %4265 = vmatprep.subr.bf16.mxu0 %v1367
    %4266 = vmatpush1.bf16.msra.mxu0 %v1366
    %4267 = vmatprep.subr.bf16.mxu0 %v1375
    %4268 = vmatpush1.bf16.msra.mxu0 %v1374
    %4269 = vmatprep.subr.bf16.mxu0 %v1383
    %4270 = vmatpush1.bf16.msra.mxu0 %v1382
    %4271 = vmatprep.subr.bf16.mxu0 0
    %4272 = vmatpush1.bf16.msra.mxu0 0
    %4273 = vmatprep.subr.bf16.mxu0 0
    %4274 = vmatpush1.bf16.msra.mxu0 0
    %4275 = vmatprep.subr.bf16.mxu0 0
    %4276 = vmatpush1.bf16.msra.mxu0 0
    %4277 = vmatprep.subr.bf16.mxu0 0
    %4278 = vmatpush1.bf16.msra.mxu0 0
    %4279 = vmatprep.subr.bf16.mxu0 0
    %4280 = vmatpush1.bf16.msra.mxu0 0
    %4281 = vmatprep.subr.bf16.mxu0 0
    %4282 = vmatpush1.bf16.msra.mxu0 0
    %4283 = vmatprep.subr.bf16.mxu0 0
    %4284 = vmatpush1.bf16.msra.mxu0 0
    %4285 = vmatprep.subr.bf16.mxu0 0
    %4286 = vmatpush1.bf16.msra.mxu0 0
    %4287 = vmatprep.mubr.bf16.mxu0 0
    %4288 = vmatmul.mubr.bf16.gmra.mrb[0].mxu0 %v4006
    %v4289 = vpop.f32.mrb[0].mxu0
    %v4290 = vadd.f32 %v4126, %v4289
    %v4291 = vpop.f32.mrb[0].mxu0
    %v4292 = vadd.f32 %v4128, %v4291
    %v4293 = vpop.f32.mrb[0].mxu0
    %v4294 = vpop.f32.mrb[0].mxu0
    %4295 = vdwg.mxu0
    %4296 = vmatprep.subr.bf16.mxu0 %v1329
    %4297 = vmatpush1.bf16.msra.mxu0 %v1328
    %4298 = vmatprep.subr.bf16.mxu0 %v1337
    %4299 = vmatpush1.bf16.msra.mxu0 %v1336
    %4300 = vmatprep.subr.bf16.mxu0 %v1345
    %4301 = vmatpush1.bf16.msra.mxu0 %v1344
    %4302 = vmatprep.subr.bf16.mxu0 %v1353
    %4303 = vmatpush1.bf16.msra.mxu0 %v1352
    %4304 = vmatprep.subr.bf16.mxu0 %v1361
    %4305 = vmatpush1.bf16.msra.mxu0 %v1360
    %4306 = vmatprep.subr.bf16.mxu0 %v1369
    %4307 = vmatpush1.bf16.msra.mxu0 %v1368
    %4308 = vmatprep.subr.bf16.mxu0 %v1377
    %4309 = vmatpush1.bf16.msra.mxu0 %v1376
    %4310 = vmatprep.subr.bf16.mxu0 %v1385
    %4311 = vmatpush1.bf16.msra.mxu0 %v1384
    %4312 = vmatprep.subr.bf16.mxu0 0
    %4313 = vmatpush1.bf16.msra.mxu0 0
    %4314 = vmatprep.subr.bf16.mxu0 0
    %4315 = vmatpush1.bf16.msra.mxu0 0
    %4316 = vmatprep.subr.bf16.mxu0 0
    %4317 = vmatpush1.bf16.msra.mxu0 0
    %4318 = vmatprep.subr.bf16.mxu0 0
    %4319 = vmatpush1.bf16.msra.mxu0 0
    %4320 = vmatprep.subr.bf16.mxu0 0
    %4321 = vmatpush1.bf16.msra.mxu0 0
    %4322 = vmatprep.subr.bf16.mxu0 0
    %4323 = vmatpush1.bf16.msra.mxu0 0
    %4324 = vmatprep.subr.bf16.mxu0 0
    %4325 = vmatpush1.bf16.msra.mxu0 0
    %4326 = vmatprep.subr.bf16.mxu0 0
    %4327 = vmatpush1.bf16.msra.mxu0 0
    %4328 = vmatprep.mubr.bf16.mxu0 0
    %4329 = vmatmul.mubr.bf16.gmra.mrb[0].mxu0 %v4006
    %v4330 = vpop.f32.mrb[0].mxu0
    %v4331 = vadd.f32 %v4167, %v4330
    %v4332 = vpop.f32.mrb[0].mxu0
    %v4333 = vadd.f32 %v4169, %v4332
    %v4334 = vpop.f32.mrb[0].mxu0
    %v4335 = vpop.f32.mrb[0].mxu0
    %4336 = vdwg.mxu0
    %v4337 = vadd.f32 %v4208, %v279
    %v4338 = vadd.f32 %v4210, %v283
    %v4339 = vadd.f32 %v4249, %v287
    %v4340 = vadd.f32 %v4251, %v291
    %v4341 = vadd.f32 %v4290, %v295
    %v4342 = vadd.f32 %v4292, %v299
    %v4343 = vadd.f32 %v4331, %v303
    %v4344 = vadd.f32 %v4333, %v307
    %v4345 = vxor.u32 %v4337, 2147483648
    %v4346 = vmul.f32 %v4345, 1.442695
    %v4347 = vpow.pop %v4346
    %v4348 = vadd.f32 %v4347, 1.0
    %v4349 = vrcp.pop %v4348
    %v4350 = vmul.f32 1.0, %v4349
    %v4351 = vxor.u32 %v4338, 2147483648
    %v4352 = vmul.f32 %v4351, 1.442695
    %v4353 = vpow.pop %v4352
    %v4354 = vadd.f32 %v4353, 1.0
    %v4355 = vrcp.pop %v4354
    %v4356 = vmul.f32 1.0, %v4355
    %v4357 = vxor.u32 %v4339, 2147483648
    %v4358 = vmul.f32 %v4357, 1.442695
    %v4359 = vpow.pop %v4358
    %v4360 = vadd.f32 %v4359, 1.0
    %v4361 = vrcp.pop %v4360
    %v4362 = vmul.f32 1.0, %v4361
    %v4363 = vtanh.pop %v4340
    %v4364 = vxor.u32 %v4341, 2147483648
    %v4365 = vmul.f32 %v4364, 1.442695
    %v4366 = vpow.pop %v4365
    %v4367 = vadd.f32 %v4366, 1.0
    %v4368 = vrcp.pop %v4367
    %v4369 = vmul.f32 1.0, %v4368
    %v4370 = vxor.u32 %v4342, 2147483648
    %v4371 = vmul.f32 %v4370, 1.442695
    %v4372 = vpow.pop %v4371
    %v4373 = vadd.f32 %v4372, 1.0
    %v4374 = vrcp.pop %v4373
    %v4375 = vmul.f32 1.0, %v4374
    %v4376 = vxor.u32 %v4343, 2147483648
    %v4377 = vmul.f32 %v4376, 1.442695
    %v4378 = vpow.pop %v4377
    %v4379 = vadd.f32 %v4378, 1.0
    %v4380 = vrcp.pop %v4379
    %v4381 = vmul.f32 1.0, %v4380
    %v4382 = vtanh.pop %v4344
    %v4383 = vmul.f32 %v3997, %v321
    %v4384 = vmul.f32 %v4350, %v4383
    %v4385 = vmul.f32 %v4356, %v4363
    %v4386 = vadd.f32 %v4384, %v4385
    %v4387 = vtanh.pop %v4386
    %v4388 = vmul.f32 %v4362, %v4387
    %v4389 = vmul.f32 %v4369, %v4002
    %v4390 = vmul.f32 %v4375, %v4382
    %v4391 = vadd.f32 %v4389, %v4390
    %v4392 = vtanh.pop %v4391
    %v4393 = vmul.f32 %v4381, %v4392
    %v4394 = vld [vmem:[%s1] sm:$0xff]
    %v4395 = vpack.c.bf16 %v4394, %v4394
    %v4396 = vld [vmem:[#allocation3] sm:$0xff]
    %v4397 = vld [vmem:[#allocation3 + $0x8] sm:$0xf]
    %v4398 = vld [vmem:[#allocation3 + $0xc] sm:$0xff]
    %v4399 = vld [vmem:[#allocation3 + $0x14] sm:$0xf]
    %v4400 = vld [vmem:[#allocation3 + $0x18] sm:$0xff]
    %v4401 = vld [vmem:[#allocation3 + $0x20] sm:$0xf]
    %v4402 = vld [vmem:[#allocation3 + $0x24] sm:$0xff]
    %v4403 = vld [vmem:[#allocation3 + $0x2c] sm:$0xf]
    %v4404 = vld [vmem:[#allocation3 + $0x30] sm:$0xff]
    %v4405 = vld [vmem:[#allocation3 + $0x38] sm:$0xf]
    %v4406 = vld [vmem:[#allocation3 + $0x3c] sm:$0xff]
    %v4407 = vld [vmem:[#allocation3 + $0x44] sm:$0xf]
    %v4408 = vld [vmem:[#allocation3 + $0x48] sm:$0xff]
    %v4409 = vld [vmem:[#allocation3 + $0x50] sm:$0xf]
    %v4410 = vld [vmem:[#allocation3 + $0x54] sm:$0xff]
    %v4411 = vld [vmem:[#allocation3 + $0x5c] sm:$0xf]
    %v4412 = vld [vmem:[#allocation3 + $0x60] sm:$0xff]
    %v4413 = vld [vmem:[#allocation3 + $0x68] sm:$0xf]
    %v4414 = vld [vmem:[#allocation3 + $0x6c] sm:$0xff]
    %v4415 = vld [vmem:[#allocation3 + $0x74] sm:$0xf]
    %v4416 = vld [vmem:[#allocation3 + $0x78] sm:$0xff]
    %v4417 = vld [vmem:[#allocation3 + $0x80] sm:$0xf]
    %v4418 = vld [vmem:[#allocation3 + $0x84] sm:$0xff]
    %v4419 = vld [vmem:[#allocation3 + $0x8c] sm:$0xf]
    %v4420 = vld [vmem:[#allocation3 + $0x90] sm:$0xff]
    %v4421 = vld [vmem:[#allocation3 + $0x98] sm:$0xf]
    %v4422 = vld [vmem:[#allocation3 + $0x9c] sm:$0xff]
    %v4423 = vld [vmem:[#allocation3 + $0xa4] sm:$0xf]
    %v4424 = vld [vmem:[#allocation3 + $0xa8] sm:$0xff]
    %v4425 = vld [vmem:[#allocation3 + $0xb0] sm:$0xf]
    %v4426 = vld [vmem:[#allocation3 + $0xb4] sm:$0xff]
    %v4427 = vld [vmem:[#allocation3 + $0xbc] sm:$0xf]
    %v4460 = vunpack.c.l.b16 %v4396
    %v4461 = vunpack.c.h.b16 %v4396
    %v4462 = vunpack.c.l.b16 %v4397
    %v4463 = vunpack.c.l.b16 %v4398
    %v4464 = vunpack.c.h.b16 %v4398
    %v4465 = vunpack.c.l.b16 %v4399
    %v4466 = vunpack.c.l.b16 %v4400
    %v4467 = vunpack.c.h.b16 %v4400
    %v4468 = vunpack.c.l.b16 %v4401
    %v4469 = vunpack.c.l.b16 %v4402
    %v4470 = vunpack.c.h.b16 %v4402
    %v4471 = vunpack.c.l.b16 %v4403
    %v4472 = vunpack.c.l.b16 %v4404
    %v4473 = vunpack.c.h.b16 %v4404
    %v4474 = vunpack.c.l.b16 %v4405
    %v4475 = vunpack.c.l.b16 %v4406
    %v4476 = vunpack.c.h.b16 %v4406
    %v4477 = vunpack.c.l.b16 %v4407
    %v4478 = vunpack.c.l.b16 %v4408
    %v4479 = vunpack.c.h.b16 %v4408
    %v4480 = vunpack.c.l.b16 %v4409
    %v4481 = vunpack.c.l.b16 %v4410
    %v4482 = vunpack.c.h.b16 %v4410
    %v4483 = vunpack.c.l.b16 %v4411
    %v4484 = vunpack.c.l.b16 %v4412
    %v4485 = vunpack.c.h.b16 %v4412
    %v4486 = vunpack.c.l.b16 %v4413
    %v4487 = vunpack.c.l.b16 %v4414
    %v4488 = vunpack.c.h.b16 %v4414
    %v4489 = vunpack.c.l.b16 %v4415
    %v4490 = vunpack.c.l.b16 %v4416
    %v4491 = vunpack.c.h.b16 %v4416
    %v4492 = vunpack.c.l.b16 %v4417
    %v4493 = vunpack.c.l.b16 %v4418
    %v4494 = vunpack.c.h.b16 %v4418
    %v4495 = vunpack.c.l.b16 %v4419
    %v4496 = vunpack.c.l.b16 %v4420
    %v4497 = vunpack.c.h.b16 %v4420
    %v4498 = vunpack.c.l.b16 %v4421
    %v4499 = vunpack.c.l.b16 %v4422
    %v4500 = vunpack.c.h.b16 %v4422
    %v4501 = vunpack.c.l.b16 %v4423
    %v4502 = vunpack.c.l.b16 %v4424
    %v4503 = vunpack.c.h.b16 %v4424
    %v4504 = vunpack.c.l.b16 %v4425
    %v4505 = vunpack.c.l.b16 %v4426
    %v4506 = vunpack.c.h.b16 %v4426
    %v4507 = vunpack.c.l.b16 %v4427
    %v4508 = vpack.c.b16 %v4463, %v4460
    %v4509 = vpack.c.b16 %v4464, %v4461
    %v4510 = vpack.c.b16 %v4465, %v4462
    %v4511 = vpack.c.b16 %v4469, %v4466
    %v4512 = vpack.c.b16 %v4470, %v4467
    %v4513 = vpack.c.b16 %v4471, %v4468
    %v4514 = vpack.c.b16 %v4475, %v4472
    %v4515 = vpack.c.b16 %v4476, %v4473
    %v4516 = vpack.c.b16 %v4477, %v4474
    %v4517 = vpack.c.b16 %v4481, %v4478
    %v4518 = vpack.c.b16 %v4482, %v4479
    %v4519 = vpack.c.b16 %v4483, %v4480
    %v4520 = vpack.c.b16 %v4487, %v4484
    %v4521 = vpack.c.b16 %v4488, %v4485
    %v4522 = vpack.c.b16 %v4489, %v4486
    %v4523 = vpack.c.b16 %v4493, %v4490
    %v4524 = vpack.c.b16 %v4494, %v4491
    %v4525 = vpack.c.b16 %v4495, %v4492
    %v4526 = vpack.c.b16 %v4499, %v4496
    %v4527 = vpack.c.b16 %v4500, %v4497
    %v4528 = vpack.c.b16 %v4501, %v4498
    %v4529 = vpack.c.b16 %v4505, %v4502
    %v4530 = vpack.c.b16 %v4506, %v4503
    %v4531 = vpack.c.b16 %v4507, %v4504
    %4556 = vmatprep.subr.bf16.mxu0 %v4509
    %4557 = vmatpush1.bf16.msra.mxu0 %v4508
    %4558 = vmatprep.subr.bf16.mxu0 %v4512
    %4559 = vmatpush1.bf16.msra.mxu0 %v4511
    %4560 = vmatprep.subr.bf16.mxu0 %v4515
    %4561 = vmatpush1.bf16.msra.mxu0 %v4514
    %4562 = vmatprep.subr.bf16.mxu0 %v4518
    %4563 = vmatpush1.bf16.msra.mxu0 %v4517
    %4564 = vmatprep.subr.bf16.mxu0 %v4521
    %4565 = vmatpush1.bf16.msra.mxu0 %v4520
    %4566 = vmatprep.subr.bf16.mxu0 %v4524
    %4567 = vmatpush1.bf16.msra.mxu0 %v4523
    %4568 = vmatprep.subr.bf16.mxu0 %v4527
    %4569 = vmatpush1.bf16.msra.mxu0 %v4526
    %4570 = vmatprep.subr.bf16.mxu0 %v4530
    %4571 = vmatpush1.bf16.msra.mxu0 %v4529
    %4572 = vmatprep.subr.bf16.mxu0 0
    %4573 = vmatpush1.bf16.msra.mxu0 0
    %4574 = vmatprep.subr.bf16.mxu0 0
    %4575 = vmatpush1.bf16.msra.mxu0 0
    %4576 = vmatprep.subr.bf16.mxu0 0
    %4577 = vmatpush1.bf16.msra.mxu0 0
    %4578 = vmatprep.subr.bf16.mxu0 0
    %4579 = vmatpush1.bf16.msra.mxu0 0
    %4580 = vmatprep.subr.bf16.mxu0 0
    %4581 = vmatpush1.bf16.msra.mxu0 0
    %4582 = vmatprep.subr.bf16.mxu0 0
    %4583 = vmatpush1.bf16.msra.mxu0 0
    %4584 = vmatprep.subr.bf16.mxu0 0
    %4585 = vmatpush1.bf16.msra.mxu0 0
    %4586 = vmatprep.subr.bf16.mxu0 0
    %4587 = vmatpush1.bf16.msra.mxu0 0
    %4588 = vmatprep.mubr.bf16.mxu0 0
    %4589 = vmatmul.mubr.bf16.gmra.mrb[0].mxu0 %v4395
    %v4590 = vpop.f32.mrb[0].mxu0
    %v4591 = vadd.f32 0.0, %v4590
    %v4592 = vpop.f32.mrb[0].mxu0
    %v4593 = vadd.f32 0.0, %v4592
    %v4594 = vpop.f32.mrb[0].mxu0
    %v4595 = vpop.f32.mrb[0].mxu0
    %4596 = vdwg.mxu0
    %4597 = vmatprep.subr.bf16.mxu0 0
    %4598 = vmatpush1.bf16.msra.mxu0 %v4510
    %4599 = vmatprep.subr.bf16.mxu0 0
    %4600 = vmatpush1.bf16.msra.mxu0 %v4513
    %4601 = vmatprep.subr.bf16.mxu0 0
    %4602 = vmatpush1.bf16.msra.mxu0 %v4516
    %4603 = vmatprep.subr.bf16.mxu0 0
    %4604 = vmatpush1.bf16.msra.mxu0 %v4519
    %4605 = vmatprep.subr.bf16.mxu0 0
    %4606 = vmatpush1.bf16.msra.mxu0 %v4522
    %4607 = vmatprep.subr.bf16.mxu0 0
    %4608 = vmatpush1.bf16.msra.mxu0 %v4525
    %4609 = vmatprep.subr.bf16.mxu0 0
    %4610 = vmatpush1.bf16.msra.mxu0 %v4528
    %4611 = vmatprep.subr.bf16.mxu0 0
    %4612 = vmatpush1.bf16.msra.mxu0 %v4531
    %4613 = vmatprep.subr.bf16.mxu0 0
    %4614 = vmatpush1.bf16.msra.mxu0 0
    %4615 = vmatprep.subr.bf16.mxu0 0
    %4616 = vmatpush1.bf16.msra.mxu0 0
    %4617 = vmatprep.subr.bf16.mxu0 0
    %4618 = vmatpush1.bf16.msra.mxu0 0
    %4619 = vmatprep.subr.bf16.mxu0 0
    %4620 = vmatpush1.bf16.msra.mxu0 0
    %4621 = vmatprep.subr.bf16.mxu0 0
    %4622 = vmatpush1.bf16.msra.mxu0 0
    %4623 = vmatprep.subr.bf16.mxu0 0
    %4624 = vmatpush1.bf16.msra.mxu0 0
    %4625 = vmatprep.subr.bf16.mxu0 0
    %4626 = vmatpush1.bf16.msra.mxu0 0
    %4627 = vmatprep.subr.bf16.mxu0 0
    %4628 = vmatpush1.bf16.msra.mxu0 0
    %4629 = vmatprep.mubr.bf16.mxu0 0
    %4630 = vmatmul.mubr.bf16.gmra.mrb[0].mxu0 %v4395
    %v4631 = vpop.f32.mrb[0].mxu0
    %v4632 = vadd.f32 0.0, %v4631
    %v4633 = vpop.f32.mrb[0].mxu0
    %v4634 = vpop.f32.mrb[0].mxu0
    %v4635 = vpop.f32.mrb[0].mxu0
    %4636 = vdwg.mxu0
    %4637 = vadd.xlane.f32.xlu0 %v4394
    %v4638 = vpop.xlane.xlu0 %4637
    %v4639 = vmul.f32 %v4394, %v4394
    %4640 = vadd.xlane.f32.xlu0 %v4639
    %v4641 = vpop.xlane.xlu0 %4640
    %v4642 = vadd.f32 %v4591, %v4593
    %v4643 = vadd.f32 %v4642, %v4632
    %4644 = vadd.xlane.f32.xlu0 %v4643
    %v4645 = vpop.xlane.xlu0 %4644
    %v4646 = vmul.f32 %v4591, %v4591
    %v4647 = vmul.f32 %v4593, %v4593
    %v4648 = vmul.f32 %v4632, %v4632
    %v4649 = vadd.f32 %v4646, %v4647
    %v4650 = vadd.f32 %v4649, %v4648
    %4651 = vadd.xlane.f32.xlu0 %v4650
    %v4652 = vpop.xlane.xlu0 %4651
    %vm4653 = vcmask 7168
    %v4654 = vsel %vm4653, %v4638, %v4641
    %vm4655 = vcmask 15360
    %v4656 = vsel %vm4655, %v4654, %v4645
    %vm4657 = vcmask 23552
    %v4658 = vsel %vm4657, %v4656, %v4652
    %v4659 = vld [vmem:[%s7] sm:$0xff]
    %vm4660 = vcmask 64512
    %v4662 = vsel %vm4660, %v4659, 0
    %4664 = vmatprep.subr.mxu0 0.0
    %4665 = vmatpush1.msra.mxu0 %v4658
    %4666 = vmatprep.subr.mxu0 0.0
    %4667 = vmatpush1.msra.mxu0 0.0
    %4668 = vmatprep.subr.mxu0 0.0
    %4669 = vmatpush1.msra.mxu0 0.0
    %4670 = vmatprep.subr.mxu0 0.0
    %4671 = vmatpush1.msra.mxu0 0.0
    %4672 = vmatprep.subr.mxu0 0.0
    %4673 = vmatpush1.msra.mxu0 0.0
    %4674 = vmatprep.subr.mxu0 0.0
    %4675 = vmatpush1.msra.mxu0 0.0
    %4676 = vmatprep.subr.mxu0 0.0
    %4677 = vmatpush1.msra.mxu0 0.0
    %4678 = vmatprep.subr.mxu0 0.0
    %4679 = vmatpush1.msra.mxu0 0.0
    %4680 = vmatprep.subr.mxu0 0.0
    %4681 = vmatpush1.msra.mxu0 0.0
    %4682 = vmatprep.subr.mxu0 0.0
    %4683 = vmatpush1.msra.mxu0 0.0
    %4684 = vmatprep.subr.mxu0 0.0
    %4685 = vmatpush1.msra.mxu0 0.0
    %4686 = vmatprep.subr.mxu0 0.0
    %4687 = vmatpush1.msra.mxu0 0.0
    %4688 = vmatprep.subr.mxu0 0.0
    %4689 = vmatpush1.msra.mxu0 0.0
    %4690 = vmatprep.subr.mxu0 0.0
    %4691 = vmatpush1.msra.mxu0 0.0
    %4692 = vmatprep.subr.mxu0 0.0
    %4693 = vmatpush1.msra.mxu0 0.0
    %4694 = vmatprep.subr.mxu0 0.0
    %4695 = vmatpush1.msra.mxu0 0.0
    %4696 = vmatprep.subr.mxu0 0.0
    %4697 = vmatpush1.msra.mxu0 0.0
    %4698 = vmatprep.subr.mxu0 0.0
    %4699 = vmatpush1.msra.mxu0 0.0
    %4700 = vmatprep.subr.mxu0 0.0
    %4701 = vmatpush1.msra.mxu0 0.0
    %4702 = vmatprep.subr.mxu0 0.0
    %4703 = vmatpush1.msra.mxu0 0.0
    %4704 = vmatprep.subr.mxu0 0.0
    %4705 = vmatpush1.msra.mxu0 0.0
    %4706 = vmatprep.subr.mxu0 0.0
    %4707 = vmatpush1.msra.mxu0 0.0
    %4708 = vmatprep.subr.mxu0 0.0
    %4709 = vmatpush1.msra.mxu0 0.0
    %4710 = vmatprep.subr.mxu0 0.0
    %4711 = vmatpush1.msra.mxu0 0.0
    %4712 = vmatprep.subr.mxu0 0.0
    %4713 = vmatpush1.msra.mxu0 0.0
    %4714 = vmatprep.subr.mxu0 0.0
    %4715 = vmatpush1.msra.mxu0 0.0
    %4716 = vmatprep.subr.mxu0 0.0
    %4717 = vmatpush1.msra.mxu0 0.0
    %4718 = vmatprep.subr.mxu0 0.0
    %4719 = vmatpush1.msra.mxu0 0.0
    %4720 = vmatprep.subr.mxu0 0.0
    %4721 = vmatpush1.msra.mxu0 0.0
    %4722 = vmatprep.subr.mxu0 0.0
    %4723 = vmatpush1.msra.mxu0 0.0
    %4724 = vmatprep.subr.mxu0 0.0
    %4725 = vmatpush1.msra.mxu0 0.0
    %4726 = vmatprep.subr.mxu0 0.0
    %4727 = vmatpush1.msra.mxu0 0.0
    %4728 = vmatprep.mubr.f32.mxu0 0.0
    %4729 = vmatmul.mubr.f32.gmra.mrb[0].mxu0 %v4662
    %v4730 = vpop.f32.mrb[0].mxu0
    %v4731 = vadd.f32 0.0, %v4730
    %v4732 = vpop.f32.mrb[0].mxu0
    %4733 = vdwg.mxu0
    %v4734 = vrcp.pop 32.0
    %v4735 = vmul.f32 %v4731, %v4734
    %v4736 = vmul.f32 %v4735, 32.0
    %v4737 = vmul.f32 %v4736, %v4735
    %4739 = vrot.lane.b32.xlu0 %v4737, 1
    %v4740 = vpop.permute.xlu0 %4739
    %v4742 = vsub.f32 %v4731, %v4740
    %v4743 = vrcp.pop 31.0
    %v4744 = vmul.f32 %v4742, %v4743
    %v4745 = vmax.f32 %v4744, 0.0
    %v4746 = vrcp.pop 96.0
    %v4747 = vmul.f32 %v4731, %v4746
    %v4748 = vmul.f32 %v4747, 96.0
    %v4749 = vmul.f32 %v4748, %v4747
    %4751 = vrot.lane.b32.xlu0 %v4749, 1
    %v4752 = vpop.permute.xlu0 %4751
    %v4754 = vsub.f32 %v4731, %v4752
    %v4755 = vrcp.pop 95.0
    %v4756 = vmul.f32 %v4754, %v4755
    %v4757 = vmax.f32 %v4756, 0.0
    %4759 = vset.pattern.permute.xlu0 1
    %4760 = vperm.xlu0 %4759, %v4745
    %v4761 = vpop.permute.xlu0 %4760
    %v4763 = vmul.f32 %v4388, %v4761
    %v4764 = vstv %s323
    %v4765 = vmul.f32 %v4763, %v4764
    %4767 = vset.pattern.permute.xlu0 3
    %4768 = vperm.xlu0 %4767, %v4757
    %v4769 = vpop.permute.xlu0 %4768
    %v4771 = vmul.f32 %v4393, %v4769
    %v4772 = vadd.f32 %v4765, %v4771
    %v4773 = vmul.f32 %v4757, %v4764
    %4775 = vrot.lane.b32.xlu0 %v4773, 126
    %v4776 = vpop.permute.xlu0 %4775
    %v4778 = vadd.f32 %v4745, %v4776
    %4780 = vset.pattern.permute.xlu0 1
    %4781 = vperm.xlu0 %4780, %v4778
    %v4782 = vpop.permute.xlu0 %4781
    %v4784 = vrcp.pop %v4782
    %v4785 = vmul.f32 %v4772, %v4784
    %v4786 = vld [vmem:[%s8] sm:$0xff]
    %v4787 = vld [vmem:[%s8 + $0x8] sm:$0xff]
    %v4788 = vld [vmem:[%s9] sm:$0xff]
    %v4789 = vld [vmem:[%s9 + $0x8] sm:$0xff]
    %4791 = vset.pattern.permute.xlu0 0
    %4792 = vperm.xlu0 %4791, %v4788
    %v4793 = vpop.permute.xlu0 %4792
    %4796 = vset.pattern.permute.xlu0 0
    %4797 = vperm.xlu0 %4796, %v4789
    %v4798 = vpop.permute.xlu0 %4797
    %v4801 = vsel %vm4660, %v4786, 0
    %v4804 = vsel %vm4660, %v4787, 0
    %4806 = vmatprep.subr.mxu0 0.0
    %4807 = vmatpush1.msra.mxu0 %v4785
    %4808 = vmatprep.subr.mxu0 0.0
    %4809 = vmatpush1.msra.mxu0 0.0
    %4810 = vmatprep.subr.mxu0 0.0
    %4811 = vmatpush1.msra.mxu0 0.0
    %4812 = vmatprep.subr.mxu0 0.0
    %4813 = vmatpush1.msra.mxu0 0.0
    %4814 = vmatprep.subr.mxu0 0.0
    %4815 = vmatpush1.msra.mxu0 0.0
    %4816 = vmatprep.subr.mxu0 0.0
    %4817 = vmatpush1.msra.mxu0 0.0
    %4818 = vmatprep.subr.mxu0 0.0
    %4819 = vmatpush1.msra.mxu0 0.0
    %4820 = vmatprep.subr.mxu0 0.0
    %4821 = vmatpush1.msra.mxu0 0.0
    %4822 = vmatprep.subr.mxu0 0.0
    %4823 = vmatpush1.msra.mxu0 0.0
    %4824 = vmatprep.subr.mxu0 0.0
    %4825 = vmatpush1.msra.mxu0 0.0
    %4826 = vmatprep.subr.mxu0 0.0
    %4827 = vmatpush1.msra.mxu0 0.0
    %4828 = vmatprep.subr.mxu0 0.0
    %4829 = vmatpush1.msra.mxu0 0.0
    %4830 = vmatprep.subr.mxu0 0.0
    %4831 = vmatpush1.msra.mxu0 0.0
    %4832 = vmatprep.subr.mxu0 0.0
    %4833 = vmatpush1.msra.mxu0 0.0
    %4834 = vmatprep.subr.mxu0 0.0
    %4835 = vmatpush1.msra.mxu0 0.0
    %4836 = vmatprep.subr.mxu0 0.0
    %4837 = vmatpush1.msra.mxu0 0.0
    %4838 = vmatprep.subr.mxu0 0.0
    %4839 = vmatpush1.msra.mxu0 0.0
    %4840 = vmatprep.subr.mxu0 0.0
    %4841 = vmatpush1.msra.mxu0 0.0
    %4842 = vmatprep.subr.mxu0 0.0
    %4843 = vmatpush1.msra.mxu0 0.0
    %4844 = vmatprep.subr.mxu0 0.0
    %4845 = vmatpush1.msra.mxu0 0.0
    %4846 = vmatprep.subr.mxu0 0.0
    %4847 = vmatpush1.msra.mxu0 0.0
    %4848 = vmatprep.subr.mxu0 0.0
    %4849 = vmatpush1.msra.mxu0 0.0
    %4850 = vmatprep.subr.mxu0 0.0
    %4851 = vmatpush1.msra.mxu0 0.0
    %4852 = vmatprep.subr.mxu0 0.0
    %4853 = vmatpush1.msra.mxu0 0.0
    %4854 = vmatprep.subr.mxu0 0.0
    %4855 = vmatpush1.msra.mxu0 0.0
    %4856 = vmatprep.subr.mxu0 0.0
    %4857 = vmatpush1.msra.mxu0 0.0
    %4858 = vmatprep.subr.mxu0 0.0
    %4859 = vmatpush1.msra.mxu0 0.0
    %4860 = vmatprep.subr.mxu0 0.0
    %4861 = vmatpush1.msra.mxu0 0.0
    %4862 = vmatprep.subr.mxu0 0.0
    %4863 = vmatpush1.msra.mxu0 0.0
    %4864 = vmatprep.subr.mxu0 0.0
    %4865 = vmatpush1.msra.mxu0 0.0
    %4866 = vmatprep.subr.mxu0 0.0
    %4867 = vmatpush1.msra.mxu0 0.0
    %4868 = vmatprep.subr.mxu0 0.0
    %4869 = vmatpush1.msra.mxu0 0.0
    %4870 = vmatprep.mubr.f32.mxu0 0.0
    %4871 = vmatmul.mubr.f32.gmra.mrb[0].mxu0 %v4801
    %v4872 = vpop.f32.mrb[0].mxu0
    %v4873 = vadd.f32 %v4793, %v4872
    %v4874 = vpop.f32.mrb[0].mxu0
    %4875 = vmatprep.mubr.f32.mxu0 0.0
    %4876 = vmatmul.mubr.f32.gmra.mrb[0].mxu0 %v4804
    %v4877 = vpop.f32.mrb[0].mxu0
    %v4878 = vadd.f32 %v4798, %v4877
    %v4879 = vpop.f32.mrb[0].mxu0
    %4880 = vdwg.mxu0
    %4881 = vst [vmem:[#allocation9] sm:$0xff] %v4873
    %4882 = vst [vmem:[#allocation9 + $0x8] sm:$0xff] %v4878
    // Predicated region
    $region58: #{tpu_custom_call.1} parent=1 // pred_check
      _
    $region59: #{tpu_custom_call.1} parent=1 // pred_check_branch
      %4884 = sbr.rel (0) target = $region61
    $region60: #{tpu_custom_call.1} parent=1 // pred_region
      %s4886 = ssub.s32 256, 256
      %4887 = vsyncadd [#allocation5], %s4886
      %s4888 = sshll.u32 [#allocation9], 4
      %s4889 = int_to_ptr.vmem [resolvable:$true] %s4888
      %4894 = dma.vmem_to_hbm [thread:$0]  %s4889, 256, %s11, [#allocation5], 128, 128, 8
    $region61: #{tpu_custom_call.1} parent=1 // pred_fallthru
      _
    // Predicated region
    $region62: #{tpu_custom_call.1} parent=1 // pred_check
      _
    $region63: #{tpu_custom_call.1} parent=1 // pred_check_branch
      %4896 = sbr.rel (0) target = $region65
    $region64: #{tpu_custom_call.1} parent=1 // pred_region
      %4897 = dma.done [#allocation5], 256
    $region65: #{tpu_custom_call.1} parent=1 // pred_fallthru
      _
    %4898 = vsyncpa [#allocation4], 1
    %4899 = vsyncpa [#allocation7], 1
    %4900 = vsyncpa [#allocation5], 1

</llo_original>
